<compile_context>
chip_gen: v7x
topology: tpu7x:2x2x1
jax: 0.10.0
libtpu: 0.0.40
codegen_flags: <defaults>
</compile_context>

<pallas_src>
import functools
import math

import jax
import jax.numpy as jnp
from jax.experimental import pallas as pl
from jax.experimental.pallas import tpu as pltpu


def _layer_norm(x, gamma, beta, eps=1e-5):
    # x: (M, E) f32; gamma/beta: (1, E) f32
    mean = jnp.mean(x, axis=-1, keepdims=True)
    var = jnp.mean((x - mean) ** 2, axis=-1, keepdims=True)
    inv = jax.lax.rsqrt(var + eps)
    return (x - mean) * inv * gamma + beta


def _swap01(x, use_einshape):
    """(A, B, D) -> (B, A, D).

    pltpu.einshape is the lane-layout-aware relayout path on TPU; the fallback
    builds the swap from leading/sublane slices + concat over the smaller axis
    (always lowers, just more relayout work)."""
    if use_einshape and hasattr(pltpu, "einshape"):
        return pltpu.einshape("abd->bad", x)
    a, b, _ = x.shape
    if b <= a:
        return jnp.stack([x[:, i, :] for i in range(b)], axis=0)
    return jnp.concatenate([x[i][:, None, :] for i in range(a)], axis=1)


def _encoder_kernel(
    x_ref,                      # (Bt, T, E) f32
    wqkv_ref,                   # (E, 3E)    bf16  fused [Q*scale | K | V], no bias
    wo_ref, bo_ref,             # (E, E) bf16, (1, E) f32
    ln1_g_ref, ln1_b_ref,       # (1, E) f32
    w1_ref, b1_ref,             # (E, H) bf16, (1, H) f32
    w2_ref, b2_ref,             # (H, E) bf16, (1, E) f32
    ln2_g_ref, ln2_b_ref,       # (1, E) f32
    o_ref,                      # (Bt, T, E)
    *, n_heads: int, use_einshape: bool,
):
    Bt, T, E = x_ref.shape
    Dh = E // n_heads
    M = Bt * T
    nhb = n_heads * Bt

    x = x_ref[...].astype(jnp.float32)           # residual / LN path stays f32
    xm = x.reshape(M, E)

    # ---- fused QKV projection: one wide matmul, bf16 operands, f32 accum ----
    # (1/sqrt(Dh) is pre-folded into the Q weight columns in the wrapper.)
    qkv = jnp.dot(xm.astype(jnp.bfloat16), wqkv_ref[...],
                  preferred_element_type=jnp.float32)             # (M, 3E) f32

    # ---- one relayout to head-major: (M, 3*nh, Dh) -> (3*nh, M, Dh) ----
    qkv_hm = _swap01(qkv.reshape(M, 3 * n_heads, Dh), use_einshape)

    def _split(idx):                                              # -> (nh*Bt, T, Dh) bf16
        hm = qkv_hm[idx * n_heads:(idx + 1) * n_heads]            # (nh, M, Dh), leading slice
        return hm.reshape(nhb, T, Dh).astype(jnp.bfloat16)

    q, k, v = _split(0), _split(1), _split(2)

    # ---- multi-head self-attention, batched over (head, batch); no mask ----
    s = jnp.einsum('bqd,bkd->bqk', q, k,
                   preferred_element_type=jnp.float32)            # (nhb, T, T) f32
    s = s - jnp.max(s, axis=-1, keepdims=True)
    probs = jnp.exp(s)
    denom = jnp.sum(probs, axis=-1, keepdims=True)                # >= 1
    attn_hm = jnp.einsum('bqk,bkd->bqd', probs.astype(jnp.bfloat16), v,
                         preferred_element_type=jnp.float32)      # (nhb, T, Dh) f32
    # deferred softmax normalization on the small (T,Dh) output (EUP reciprocal)
    attn_hm = attn_hm * pl.reciprocal(denom, approx=True)

    # ---- back to token-major and one wide output projection (proj_bias=True) ----
    attn = _swap01(attn_hm.reshape(n_heads, M, Dh), use_einshape)  # (M, nh, Dh)
    attn = attn.reshape(M, E)
    z = jnp.dot(attn.astype(jnp.bfloat16), wo_ref[...],
                preferred_element_type=jnp.float32) + bo_ref[...]
    # attention dropout is identity in eval mode

    # residual + LayerNorm 1 (f32)
    x1 = _layer_norm(xm + z, ln1_g_ref[...], ln1_b_ref[...])

    # ---- FFN ----
    h1 = jnp.dot(x1.astype(jnp.bfloat16), w1_ref[...],
                 preferred_element_type=jnp.float32) + b1_ref[...]
    h1 = jnp.maximum(h1, 0.0)                                     # ReLU (f32)
    f = jnp.dot(h1.astype(jnp.bfloat16), w2_ref[...],
                preferred_element_type=jnp.float32) + b2_ref[...]
    # FFN dropout is identity in eval mode

    # residual + LayerNorm 2 (f32)
    x2 = _layer_norm(x1 + f, ln2_g_ref[...], ln2_b_ref[...])
    o_ref[...] = x2.reshape(Bt, T, E).astype(o_ref.dtype)


def _vmem_capacity_bytes() -> int:
    try:
        return int(pltpu.get_tpu_info().vmem_capacity_bytes)
    except Exception:
        return 64 * 1024 * 1024          # conservative (v7x-sized) default


def _vmem_estimate_bytes(bt, T, E, H, n_heads):
    """Rough per-step VMEM footprint (weights single-buffered)."""
    m = bt * T
    weights = (4 * E * E + 2 * E * H) * 2            # bf16 weight blocks
    io = 2 * 2 * m * E * 4                           # x / out blocks, 2 buffers, f32
    qkv = m * 3 * E * (4 + 4 + 2)                    # qkv f32 + head-major f32 + bf16
    scores = 2 * n_heads * bt * T * T * 4            # scores + probs (f32)
    ffn = m * H * (4 + 2)                            # hidden f32 + bf16
    temps = 6 * m * E * 4                            # residuals / LN temps
    return weights + io + qkv + scores + ffn + temps


def _pick_batch_tile(B, T, E, H, n_heads, vmem_budget):
    """Fold batch rows into the matmul M dim. Target M = bt*T up to 512 (fills
    the 256-wide MXU on v6e/v7x and amortizes per-step overhead) subject to the
    VMEM budget; only split further when both v7x TCs can still see M >= 256."""
    divisors = [d for d in range(1, B + 1) if B % d == 0]
    bt = 1
    for d in divisors:
        if d * T <= 512 and _vmem_estimate_bytes(d, T, E, H, n_heads) <= vmem_budget:
            bt = d
    if bt == B and B >= 2:
        for d in reversed(divisors):
            if d < B and d * T >= 256:
                bt = d
                break
    # TODO(synk): for very long T (score slab ~ nh*bt*T^2*4 bytes) add a KV-block
    # online-softmax inner loop instead of shrinking bt.
    return bt


def transformer_encoder_forward(x, params, *, n_heads: int):
    """x: (B, T, E) float32. Returns (B, T, E)."""
    B, T, E = x.shape
    H = params["w1"].shape[1]
    assert E % n_heads == 0
    Dh = E // n_heads
    scale = 1.0 / math.sqrt(Dh)

    capacity = _vmem_capacity_bytes()
    budget = (capacity * 3) // 4                 # ~96 MiB on v5e/v6e, ~48 MiB on v7x
    bt = _pick_batch_tile(B, T, E, H, n_heads, budget)
    grid_b = B // bt

    # Fused QKV weights (scale folded into Q); all matmul weights cast to bf16
    # once here (halves weight VMEM, ~2x MXU throughput; accumulation stays f32).
    w_qkv = jnp.concatenate(
        [params["wq"] * scale, params["wk"], params["wv"]], axis=1
    ).astype(jnp.bfloat16)
    wo = params["wo"].astype(jnp.bfloat16)
    w1 = params["w1"].astype(jnp.bfloat16)
    w2 = params["w2"].astype(jnp.bfloat16)

    # Advisory cost estimate so XLA schedules the custom call sensibly.
    flops = 2 * B * T * E * (4 * E + 2 * H) + 4 * B * T * T * E
    transcendentals = B * n_heads * T * T
    bytes_accessed = (2 * B * T * E * 4                 # x in + out (f32)
                      + (4 * E * E + 2 * E * H) * 2     # bf16 weights
                      + (6 * E + H) * 4)                # biases + LN params
    cost = pl.CostEstimate(flops=flops, transcendentals=transcendentals,
                           bytes_accessed=bytes_accessed)

    est = _vmem_estimate_bytes(bt, T, E, H, n_heads)
    vmem_limit = int(min(budget, max(32 * 1024 * 1024, 2 * est)))

    args = (x, w_qkv, wo, params["bo"], params["ln1_g"], params["ln1_b"],
            w1, params["b1"], w2, params["b2"], params["ln2_g"], params["ln2_b"])

    def run(fast: bool):
        single_buffer = fast and hasattr(pl, "Buffered")

        def rep(shape):
            nd = len(shape)
            idx = lambda b, _nd=nd: (0,) * _nd
            if single_buffer:
                # Constant across grid steps -> double-buffering is pure VMEM waste.
                return pl.BlockSpec(shape, idx, pipeline_mode=pl.Buffered(1))
            return pl.BlockSpec(shape, idx)

        in_specs = [
            pl.BlockSpec((bt, T, E), lambda b: (b, 0, 0)),  # x (pipelined over batch)
            rep((E, 3 * E)),                                # fused wqkv (bf16)
            rep((E, E)), rep((1, E)),                       # wo (bf16), bo
            rep((1, E)), rep((1, E)),                       # ln1 gamma/beta
            rep((E, H)), rep((1, H)),                       # w1 (bf16), b1
            rep((H, E)), rep((1, E)),                       # w2 (bf16), b2
            rep((1, E)), rep((1, E)),                       # ln2 gamma/beta
        ]
        kernel = functools.partial(_encoder_kernel, n_heads=n_heads,
                                   use_einshape=fast)
        return pl.pallas_call(
            kernel,
            out_shape=jax.ShapeDtypeStruct((B, T, E), x.dtype),
            grid_spec=pltpu.PrefetchScalarGridSpec(
                num_scalar_prefetch=0,
                grid=(grid_b,),
                in_specs=in_specs,
                out_specs=pl.BlockSpec((bt, T, E), lambda b: (b, 0, 0)),
            ),
            compiler_params=pltpu.CompilerParams(
                dimension_semantics=("parallel",),
                vmem_limit_bytes=vmem_limit,
            ),
            cost_estimate=cost,
        )(*args)

    try:
        return run(True)
    except Exception:
        # Buffered(1)/einshape unavailable or rejected on this jax version:
        # retry with the conservative (mathematically identical) formulation.
        return run(False)


def init_params(key, embedding_size: int, hidden_size: int):
    E, H = embedding_size, hidden_size
    ks = jax.random.split(key, 8)
    s_e = 1.0 / math.sqrt(E)
    s_h = 1.0 / math.sqrt(H)
    return {
        # QKV projections, no bias (head_bias=False); columns are head-major
        "wq": jax.random.normal(ks[0], (E, E), jnp.float32) * s_e,
        "wk": jax.random.normal(ks[1], (E, E), jnp.float32) * s_e,
        "wv": jax.random.normal(ks[2], (E, E), jnp.float32) * s_e,
        # output projection (proj_bias=True)
        "wo": jax.random.normal(ks[3], (E, E), jnp.float32) * s_e,
        "bo": jax.random.normal(ks[4], (1, E), jnp.float32) * 0.01,
        # LayerNorm 1
        "ln1_g": jnp.ones((1, E), jnp.float32),
        "ln1_b": jnp.zeros((1, E), jnp.float32),
        # FFN (ffn_bias=True), hidden = 4*E by default
        "w1": jax.random.normal(ks[5], (E, H), jnp.float32) * s_e,
        "b1": jax.random.normal(ks[6], (1, H), jnp.float32) * 0.01,
        "w2": jax.random.normal(ks[7], (H, E), jnp.float32) * s_h,
        "b2": jnp.zeros((1, E), jnp.float32),
        # LayerNorm 2
        "ln2_g": jnp.ones((1, E), jnp.float32),
        "ln2_b": jnp.zeros((1, E), jnp.float32),
    }


if __name__ == "__main__":
    # small shapes: batch=2, seq=8, embedding=32, heads=4, ffn hidden=4*32=128
    B, T, E, n_heads = 2, 8, 32, 4
    H = 4 * E

    key = jax.random.PRNGKey(0)
    kx, kp = jax.random.split(key)
    x = jax.random.normal(kx, (B, T, E), jnp.float32)
    params = init_params(kp, E, H)

    # TODO(synk): `return_kv=True` path (also returning K/V) not exposed; default path only.
    # TODO(synk): no src_key_padding_mask / attention-mask path (fixed-length eval only).
    out = transformer_encoder_forward(x, params, n_heads=n_heads)
    out = jax.block_until_ready(out)
    assert out.shape == (B, T, E)
    assert bool(jnp.all(jnp.isfinite(out)))
    print("KERNEL_OK")
</pallas_src>

<mosaic_0001>
module attributes {stable_mosaic.version = 11 : i64} {
  func.func @_encoder_kernel(%arg0: i32, %arg1: memref<2x8x32xf32, #tpu.memory_space<vmem>>, %arg2: memref<32x96xbf16, #tpu.memory_space<vmem>>, %arg3: memref<32x32xbf16, #tpu.memory_space<vmem>>, %arg4: memref<1x32xf32, #tpu.memory_space<vmem>>, %arg5: memref<1x32xf32, #tpu.memory_space<vmem>>, %arg6: memref<1x32xf32, #tpu.memory_space<vmem>>, %arg7: memref<32x128xbf16, #tpu.memory_space<vmem>>, %arg8: memref<1x128xf32, #tpu.memory_space<vmem>>, %arg9: memref<128x32xbf16, #tpu.memory_space<vmem>>, %arg10: memref<1x32xf32, #tpu.memory_space<vmem>>, %arg11: memref<1x32xf32, #tpu.memory_space<vmem>>, %arg12: memref<1x32xf32, #tpu.memory_space<vmem>>, %arg13: memref<2x8x32xf32, #tpu.memory_space<vmem>>) attributes {dimension_semantics = [#tpu.dimension_semantics<parallel>], iteration_bounds = array<i64: 1>, scalar_prefetch = 0 : i64, scratch_operands = 0 : i64, tpu.core_type = #tpu.core_type<tc>, window_params = [{transform_indices = @transform_0, window_bounds = array<i64: 2, 8, 32>}, {pipeline_mode = #tpu.pipeline_mode<synchronous>, transform_indices = @transform_1, window_bounds = array<i64: 32, 96>}, {pipeline_mode = #tpu.pipeline_mode<synchronous>, transform_indices = @transform_2, window_bounds = array<i64: 32, 32>}, {pipeline_mode = #tpu.pipeline_mode<synchronous>, transform_indices = @transform_3, window_bounds = array<i64: 1, 32>}, {pipeline_mode = #tpu.pipeline_mode<synchronous>, transform_indices = @transform_4, window_bounds = array<i64: 1, 32>}, {pipeline_mode = #tpu.pipeline_mode<synchronous>, transform_indices = @transform_5, window_bounds = array<i64: 1, 32>}, {pipeline_mode = #tpu.pipeline_mode<synchronous>, transform_indices = @transform_6, window_bounds = array<i64: 32, 128>}, {pipeline_mode = #tpu.pipeline_mode<synchronous>, transform_indices = @transform_7, window_bounds = array<i64: 1, 128>}, {pipeline_mode = #tpu.pipeline_mode<synchronous>, transform_indices = @transform_8, window_bounds = array<i64: 128, 32>}, {pipeline_mode = #tpu.pipeline_mode<synchronous>, transform_indices = @transform_9, window_bounds = array<i64: 1, 32>}, {pipeline_mode = #tpu.pipeline_mode<synchronous>, transform_indices = @transform_10, window_bounds = array<i64: 1, 32>}, {pipeline_mode = #tpu.pipeline_mode<synchronous>, transform_indices = @transform_11, window_bounds = array<i64: 1, 32>}, {transform_indices = @transform_12, window_bounds = array<i64: 2, 8, 32>}]} {
    %c0 = arith.constant 0 : index
    %c0_0 = arith.constant 0 : index
    %c0_1 = arith.constant 0 : index
    %0 = vector.load %arg1[%c0, %c0_0, %c0_1] : memref<2x8x32xf32, #tpu.memory_space<vmem>>, vector<2x8x32xf32>
    %1 = vector.shape_cast %0 : vector<2x8x32xf32> to vector<16x32xf32>
    %2 = arith.truncf %1 : vector<16x32xf32> to vector<16x32xbf16>
    %c0_2 = arith.constant 0 : index
    %c0_3 = arith.constant 0 : index
    %3 = vector.load %arg2[%c0_2, %c0_3] : memref<32x96xbf16, #tpu.memory_space<vmem>>, vector<32x96xbf16>
    %cst = arith.constant dense<0.000000e+00> : vector<16x96xf32>
    %4 = tpu.matmul %2, %3, %cst {dimension_numbers = #tpu.dot_dimension_numbers<[1], [0], [0], [1], [0, 0, 1, 1], [], []>} : vector<16x32xbf16>, vector<32x96xbf16>, vector<16x96xf32> -> vector<16x96xf32>
    %5 = vector.shape_cast %4 : vector<16x96xf32> to vector<16x12x8xf32>
    %6 = tpu.transpose %5, [1, 0, 2] : vector<16x12x8xf32> -> vector<12x16x8xf32>
    %7 = vector.extract_strided_slice %6 {offsets = [0, 0, 0], sizes = [4, 16, 8], strides = [1, 1, 1]} : vector<12x16x8xf32> to vector<4x16x8xf32>
    %8 = vector.shape_cast %7 : vector<4x16x8xf32> to vector<8x8x8xf32>
    %9 = arith.truncf %8 : vector<8x8x8xf32> to vector<8x8x8xbf16>
    %10 = vector.extract_strided_slice %6 {offsets = [4, 0, 0], sizes = [4, 16, 8], strides = [1, 1, 1]} : vector<12x16x8xf32> to vector<4x16x8xf32>
    %11 = vector.shape_cast %10 : vector<4x16x8xf32> to vector<8x8x8xf32>
    %12 = arith.truncf %11 : vector<8x8x8xf32> to vector<8x8x8xbf16>
    %13 = vector.extract_strided_slice %6 {offsets = [8, 0, 0], sizes = [4, 16, 8], strides = [1, 1, 1]} : vector<12x16x8xf32> to vector<4x16x8xf32>
    %14 = vector.shape_cast %13 : vector<4x16x8xf32> to vector<8x8x8xf32>
    %15 = arith.truncf %14 : vector<8x8x8xf32> to vector<8x8x8xbf16>
    "tpu.trace_start"() <{level = 10 : i32, message = "bqd,bkd->bqk"}> : () -> ()
    %cst_4 = arith.constant dense<0.000000e+00> : vector<8x8x8xf32>
    %16 = tpu.matmul %9, %12, %cst_4 {dimension_numbers = #tpu.dot_dimension_numbers<[2], [2], [1], [1], [0, 0, 0, 1, 1, 1], [0], [0]>} : vector<8x8x8xbf16>, vector<8x8x8xbf16>, vector<8x8x8xf32> -> vector<8x8x8xf32>
    "tpu.trace_stop"() : () -> ()
    %cst_5 = arith.constant dense<0xFF800000> : vector<8x8xf32>
    %17 = vector.multi_reduction <maximumf>, %16, %cst_5 [2] : vector<8x8x8xf32> to vector<8x8xf32>
    %18 = vector.shape_cast %17 : vector<8x8xf32> to vector<8x8x1xf32>
    %19 = vector.broadcast %18 : vector<8x8x1xf32> to vector<8x8x8xf32>
    %20 = arith.subf %16, %19 : vector<8x8x8xf32>
    %21 = math.exp %20 : vector<8x8x8xf32>
    %cst_6 = arith.constant dense<0.000000e+00> : vector<8x8xf32>
    %22 = vector.multi_reduction <add>, %21, %cst_6 [2] : vector<8x8x8xf32> to vector<8x8xf32>
    %23 = vector.shape_cast %22 : vector<8x8xf32> to vector<8x8x1xf32>
    %24 = arith.truncf %21 : vector<8x8x8xf32> to vector<8x8x8xbf16>
    "tpu.trace_start"() <{level = 10 : i32, message = "bqk,bkd->bqd"}> : () -> ()
    %cst_7 = arith.constant dense<0.000000e+00> : vector<8x8x8xf32>
    %25 = tpu.matmul %24, %15, %cst_7 {dimension_numbers = #tpu.dot_dimension_numbers<[2], [1], [1], [2], [0, 0, 0, 1, 1, 2], [0], [0]>} : vector<8x8x8xbf16>, vector<8x8x8xbf16>, vector<8x8x8xf32> -> vector<8x8x8xf32>
    "tpu.trace_stop"() : () -> ()
    %26 = tpu.reciprocal %23 {approx = true} : vector<8x8x1xf32> -> vector<8x8x1xf32>
    %27 = vector.broadcast %26 : vector<8x8x1xf32> to vector<8x8x8xf32>
    %28 = arith.mulf %25, %27 : vector<8x8x8xf32>
    %29 = vector.shape_cast %28 : vector<8x8x8xf32> to vector<4x16x8xf32>
    %30 = tpu.transpose %29, [1, 0, 2] : vector<4x16x8xf32> -> vector<16x4x8xf32>
    %31 = vector.shape_cast %30 : vector<16x4x8xf32> to vector<16x32xf32>
    %32 = arith.truncf %31 : vector<16x32xf32> to vector<16x32xbf16>
    %c0_8 = arith.constant 0 : index
    %c0_9 = arith.constant 0 : index
    %33 = vector.load %arg3[%c0_8, %c0_9] : memref<32x32xbf16, #tpu.memory_space<vmem>>, vector<32x32xbf16>
    %cst_10 = arith.constant dense<0.000000e+00> : vector<16x32xf32>
    %34 = tpu.matmul %32, %33, %cst_10 {dimension_numbers = #tpu.dot_dimension_numbers<[1], [0], [0], [1], [0, 0, 1, 1], [], []>} : vector<16x32xbf16>, vector<32x32xbf16>, vector<16x32xf32> -> vector<16x32xf32>
    %c0_11 = arith.constant 0 : index
    %c0_12 = arith.constant 0 : index
    %35 = vector.load %arg4[%c0_11, %c0_12] : memref<1x32xf32, #tpu.memory_space<vmem>>, vector<1x32xf32>
    %36 = vector.broadcast %35 : vector<1x32xf32> to vector<16x32xf32>
    %37 = arith.addf %34, %36 : vector<16x32xf32>
    %38 = arith.addf %1, %37 : vector<16x32xf32>
    %c0_13 = arith.constant 0 : index
    %c0_14 = arith.constant 0 : index
    %39 = vector.load %arg5[%c0_13, %c0_14] : memref<1x32xf32, #tpu.memory_space<vmem>>, vector<1x32xf32>
    %c0_15 = arith.constant 0 : index
    %c0_16 = arith.constant 0 : index
    %40 = vector.load %arg6[%c0_15, %c0_16] : memref<1x32xf32, #tpu.memory_space<vmem>>, vector<1x32xf32>
    %cst_17 = arith.constant dense<0.000000e+00> : vector<16xf32>
    %41 = vector.multi_reduction <add>, %38, %cst_17 [1] : vector<16x32xf32> to vector<16xf32>
    %42 = vector.shape_cast %41 : vector<16xf32> to vector<16x1xf32>
    %cst_18 = arith.constant 3.200000e+01 : f32
    %43 = vector.broadcast %cst_18 : f32 to vector<16x1xf32>
    %44 = arith.divf %42, %43 : vector<16x1xf32>
    %45 = vector.broadcast %44 : vector<16x1xf32> to vector<16x32xf32>
    %46 = arith.subf %38, %45 : vector<16x32xf32>
    %47 = arith.mulf %46, %46 : vector<16x32xf32>
    %cst_19 = arith.constant dense<0.000000e+00> : vector<16xf32>
    %48 = vector.multi_reduction <add>, %47, %cst_19 [1] : vector<16x32xf32> to vector<16xf32>
    %49 = vector.shape_cast %48 : vector<16xf32> to vector<16x1xf32>
    %cst_20 = arith.constant 3.200000e+01 : f32
    %50 = vector.broadcast %cst_20 : f32 to vector<16x1xf32>
    %51 = arith.divf %49, %50 : vector<16x1xf32>
    %cst_21 = arith.constant 9.99999974E-6 : f32
    %52 = vector.broadcast %cst_21 : f32 to vector<16x1xf32>
    %53 = arith.addf %51, %52 : vector<16x1xf32>
    %54 = math.rsqrt %53 : vector<16x1xf32>
    %55 = vector.broadcast %44 : vector<16x1xf32> to vector<16x32xf32>
    %56 = arith.subf %38, %55 : vector<16x32xf32>
    %57 = vector.broadcast %54 : vector<16x1xf32> to vector<16x32xf32>
    %58 = arith.mulf %56, %57 : vector<16x32xf32>
    %59 = vector.broadcast %39 : vector<1x32xf32> to vector<16x32xf32>
    %60 = arith.mulf %58, %59 : vector<16x32xf32>
    %61 = vector.broadcast %40 : vector<1x32xf32> to vector<16x32xf32>
    %62 = arith.addf %60, %61 : vector<16x32xf32>
    %63 = arith.truncf %62 : vector<16x32xf32> to vector<16x32xbf16>
    %c0_22 = arith.constant 0 : index
    %c0_23 = arith.constant 0 : index
    %64 = vector.load %arg7[%c0_22, %c0_23] : memref<32x128xbf16, #tpu.memory_space<vmem>>, vector<32x128xbf16>
    %cst_24 = arith.constant dense<0.000000e+00> : vector<16x128xf32>
    %65 = tpu.matmul %63, %64, %cst_24 {dimension_numbers = #tpu.dot_dimension_numbers<[1], [0], [0], [1], [0, 0, 1, 1], [], []>} : vector<16x32xbf16>, vector<32x128xbf16>, vector<16x128xf32> -> vector<16x128xf32>
    %c0_25 = arith.constant 0 : index
    %c0_26 = arith.constant 0 : index
    %66 = vector.load %arg8[%c0_25, %c0_26] : memref<1x128xf32, #tpu.memory_space<vmem>>, vector<1x128xf32>
    %67 = vector.broadcast %66 : vector<1x128xf32> to vector<16x128xf32>
    %68 = arith.addf %65, %67 : vector<16x128xf32>
    %cst_27 = arith.constant 0.000000e+00 : f32
    %69 = vector.broadcast %cst_27 : f32 to vector<16x128xf32>
    %70 = arith.maximumf %68, %69 : vector<16x128xf32>
    %71 = arith.truncf %70 : vector<16x128xf32> to vector<16x128xbf16>
    %c0_28 = arith.constant 0 : index
    %c0_29 = arith.constant 0 : index
    %72 = vector.load %arg9[%c0_28, %c0_29] : memref<128x32xbf16, #tpu.memory_space<vmem>>, vector<128x32xbf16>
    %cst_30 = arith.constant dense<0.000000e+00> : vector<16x32xf32>
    %73 = tpu.matmul %71, %72, %cst_30 {dimension_numbers = #tpu.dot_dimension_numbers<[1], [0], [0], [1], [0, 0, 1, 1], [], []>} : vector<16x128xbf16>, vector<128x32xbf16>, vector<16x32xf32> -> vector<16x32xf32>
    %c0_31 = arith.constant 0 : index
    %c0_32 = arith.constant 0 : index
    %74 = vector.load %arg10[%c0_31, %c0_32] : memref<1x32xf32, #tpu.memory_space<vmem>>, vector<1x32xf32>
    %75 = vector.broadcast %74 : vector<1x32xf32> to vector<16x32xf32>
    %76 = arith.addf %73, %75 : vector<16x32xf32>
    %77 = arith.addf %62, %76 : vector<16x32xf32>
    %c0_33 = arith.constant 0 : index
    %c0_34 = arith.constant 0 : index
    %78 = vector.load %arg11[%c0_33, %c0_34] : memref<1x32xf32, #tpu.memory_space<vmem>>, vector<1x32xf32>
    %c0_35 = arith.constant 0 : index
    %c0_36 = arith.constant 0 : index
    %79 = vector.load %arg12[%c0_35, %c0_36] : memref<1x32xf32, #tpu.memory_space<vmem>>, vector<1x32xf32>
    %cst_37 = arith.constant dense<0.000000e+00> : vector<16xf32>
    %80 = vector.multi_reduction <add>, %77, %cst_37 [1] : vector<16x32xf32> to vector<16xf32>
    %81 = vector.shape_cast %80 : vector<16xf32> to vector<16x1xf32>
    %cst_38 = arith.constant 3.200000e+01 : f32
    %82 = vector.broadcast %cst_38 : f32 to vector<16x1xf32>
    %83 = arith.divf %81, %82 : vector<16x1xf32>
    %84 = vector.broadcast %83 : vector<16x1xf32> to vector<16x32xf32>
    %85 = arith.subf %77, %84 : vector<16x32xf32>
    %86 = arith.mulf %85, %85 : vector<16x32xf32>
    %cst_39 = arith.constant dense<0.000000e+00> : vector<16xf32>
    %87 = vector.multi_reduction <add>, %86, %cst_39 [1] : vector<16x32xf32> to vector<16xf32>
    %88 = vector.shape_cast %87 : vector<16xf32> to vector<16x1xf32>
    %cst_40 = arith.constant 3.200000e+01 : f32
    %89 = vector.broadcast %cst_40 : f32 to vector<16x1xf32>
    %90 = arith.divf %88, %89 : vector<16x1xf32>
    %cst_41 = arith.constant 9.99999974E-6 : f32
    %91 = vector.broadcast %cst_41 : f32 to vector<16x1xf32>
    %92 = arith.addf %90, %91 : vector<16x1xf32>
    %93 = math.rsqrt %92 : vector<16x1xf32>
    %94 = vector.broadcast %83 : vector<16x1xf32> to vector<16x32xf32>
    %95 = arith.subf %77, %94 : vector<16x32xf32>
    %96 = vector.broadcast %93 : vector<16x1xf32> to vector<16x32xf32>
    %97 = arith.mulf %95, %96 : vector<16x32xf32>
    %98 = vector.broadcast %78 : vector<1x32xf32> to vector<16x32xf32>
    %99 = arith.mulf %97, %98 : vector<16x32xf32>
    %100 = vector.broadcast %79 : vector<1x32xf32> to vector<16x32xf32>
    %101 = arith.addf %99, %100 : vector<16x32xf32>
    %102 = vector.shape_cast %101 : vector<16x32xf32> to vector<2x8x32xf32>
    %c0_42 = arith.constant 0 : index
    %c0_43 = arith.constant 0 : index
    %c0_44 = arith.constant 0 : index
    %103 = vector.load %arg13[%c0_42, %c0_43, %c0_44] : memref<2x8x32xf32, #tpu.memory_space<vmem>>, vector<2x8x32xf32>
    tpu.vector_store %arg13[%c0_42, %c0_43, %c0_44], %102 {strides = array<i32>} : memref<2x8x32xf32, #tpu.memory_space<vmem>>, vector<2x8x32xf32>,
    return
  }
  func.func @transform_0(%arg0: i32) -> (i32, i32, i32) {
    %c0_i32 = arith.constant 0 : i32
    %c0_i32_0 = arith.constant 0 : i32
    %c0_i32_1 = arith.constant 0 : i32
    return %arg0, %c0_i32, %c0_i32_0 : i32, i32, i32
  }
  func.func @transform_1(%arg0: i32) -> (i32, i32) {
    %c0_i32 = arith.constant 0 : i32
    %c0_i32_0 = arith.constant 0 : i32
    %c0_i32_1 = arith.constant 0 : i32
    return %c0_i32, %c0_i32_0 : i32, i32
  }
  func.func @transform_2(%arg0: i32) -> (i32, i32) {
    %c0_i32 = arith.constant 0 : i32
    %c0_i32_0 = arith.constant 0 : i32
    %c0_i32_1 = arith.constant 0 : i32
    return %c0_i32, %c0_i32_0 : i32, i32
  }
  func.func @transform_3(%arg0: i32) -> (i32, i32) {
    %c0_i32 = arith.constant 0 : i32
    %c0_i32_0 = arith.constant 0 : i32
    %c0_i32_1 = arith.constant 0 : i32
    return %c0_i32, %c0_i32_0 : i32, i32
  }
  func.func @transform_4(%arg0: i32) -> (i32, i32) {
    %c0_i32 = arith.constant 0 : i32
    %c0_i32_0 = arith.constant 0 : i32
    %c0_i32_1 = arith.constant 0 : i32
    return %c0_i32, %c0_i32_0 : i32, i32
  }
  func.func @transform_5(%arg0: i32) -> (i32, i32) {
    %c0_i32 = arith.constant 0 : i32
    %c0_i32_0 = arith.constant 0 : i32
    %c0_i32_1 = arith.constant 0 : i32
    return %c0_i32, %c0_i32_0 : i32, i32
  }
  func.func @transform_6(%arg0: i32) -> (i32, i32) {
    %c0_i32 = arith.constant 0 : i32
    %c0_i32_0 = arith.constant 0 : i32
    %c0_i32_1 = arith.constant 0 : i32
    return %c0_i32, %c0_i32_0 : i32, i32
  }
  func.func @transform_7(%arg0: i32) -> (i32, i32) {
    %c0_i32 = arith.constant 0 : i32
    %c0_i32_0 = arith.constant 0 : i32
    %c0_i32_1 = arith.constant 0 : i32
    return %c0_i32, %c0_i32_0 : i32, i32
  }
  func.func @transform_8(%arg0: i32) -> (i32, i32) {
    %c0_i32 = arith.constant 0 : i32
    %c0_i32_0 = arith.constant 0 : i32
    %c0_i32_1 = arith.constant 0 : i32
    return %c0_i32, %c0_i32_0 : i32, i32
  }
  func.func @transform_9(%arg0: i32) -> (i32, i32) {
    %c0_i32 = arith.constant 0 : i32
    %c0_i32_0 = arith.constant 0 : i32
    %c0_i32_1 = arith.constant 0 : i32
    return %c0_i32, %c0_i32_0 : i32, i32
  }
  func.func @transform_10(%arg0: i32) -> (i32, i32) {
    %c0_i32 = arith.constant 0 : i32
    %c0_i32_0 = arith.constant 0 : i32
    %c0_i32_1 = arith.constant 0 : i32
    return %c0_i32, %c0_i32_0 : i32, i32
  }
  func.func @transform_11(%arg0: i32) -> (i32, i32) {
    %c0_i32 = arith.constant 0 : i32
    %c0_i32_0 = arith.constant 0 : i32
    %c0_i32_1 = arith.constant 0 : i32
    return %c0_i32, %c0_i32_0 : i32, i32
  }
  func.func @transform_12(%arg0: i32) -> (i32, i32, i32) {
    %c0_i32 = arith.constant 0 : i32
    %c0_i32_0 = arith.constant 0 : i32
    %c0_i32_1 = arith.constant 0 : i32
    return %arg0, %c0_i32, %c0_i32_0 : i32, i32, i32
  }
}

module attributes {stable_mosaic.version = 11 : i64} {
  func.func @_encoder_kernel(%arg0: i32, %arg1: memref<2x8x32xf32, #tpu.memory_space<vmem>>, %arg2: memref<32x96xbf16, #tpu.memory_space<vmem>>, %arg3: memref<32x32xbf16, #tpu.memory_space<vmem>>, %arg4: memref<1x32xf32, #tpu.memory_space<vmem>>, %arg5: memref<1x32xf32, #tpu.memory_space<vmem>>, %arg6: memref<1x32xf32, #tpu.memory_space<vmem>>, %arg7: memref<32x128xbf16, #tpu.memory_space<vmem>>, %arg8: memref<1x128xf32, #tpu.memory_space<vmem>>, %arg9: memref<128x32xbf16, #tpu.memory_space<vmem>>, %arg10: memref<1x32xf32, #tpu.memory_space<vmem>>, %arg11: memref<1x32xf32, #tpu.memory_space<vmem>>, %arg12: memref<1x32xf32, #tpu.memory_space<vmem>>, %arg13: memref<2x8x32xf32, #tpu.memory_space<vmem>>) attributes {dimension_semantics = [#tpu.dimension_semantics<parallel>], iteration_bounds = array<i64: 1>, scalar_prefetch = 0 : i64, scratch_operands = 0 : i64, tpu.core_type = #tpu.core_type<tc>, window_params = [{transform_indices = @transform_0, window_bounds = array<i64: 2, 8, 32>}, {pipeline_mode = #tpu.pipeline_mode<synchronous>, transform_indices = @transform_1, window_bounds = array<i64: 32, 96>}, {pipeline_mode = #tpu.pipeline_mode<synchronous>, transform_indices = @transform_2, window_bounds = array<i64: 32, 32>}, {pipeline_mode = #tpu.pipeline_mode<synchronous>, transform_indices = @transform_3, window_bounds = array<i64: 1, 32>}, {pipeline_mode = #tpu.pipeline_mode<synchronous>, transform_indices = @transform_4, window_bounds = array<i64: 1, 32>}, {pipeline_mode = #tpu.pipeline_mode<synchronous>, transform_indices = @transform_5, window_bounds = array<i64: 1, 32>}, {pipeline_mode = #tpu.pipeline_mode<synchronous>, transform_indices = @transform_6, window_bounds = array<i64: 32, 128>}, {pipeline_mode = #tpu.pipeline_mode<synchronous>, transform_indices = @transform_7, window_bounds = array<i64: 1, 128>}, {pipeline_mode = #tpu.pipeline_mode<synchronous>, transform_indices = @transform_8, window_bounds = array<i64: 128, 32>}, {pipeline_mode = #tpu.pipeline_mode<synchronous>, transform_indices = @transform_9, window_bounds = array<i64: 1, 32>}, {pipeline_mode = #tpu.pipeline_mode<synchronous>, transform_indices = @transform_10, window_bounds = array<i64: 1, 32>}, {pipeline_mode = #tpu.pipeline_mode<synchronous>, transform_indices = @transform_11, window_bounds = array<i64: 1, 32>}, {transform_indices = @transform_12, window_bounds = array<i64: 2, 8, 32>}]} {
    %c0 = arith.constant 0 : index
    %c0_0 = arith.constant 0 : index
    %c0_1 = arith.constant 0 : index
    %0 = vector.load %arg1[%c0, %c0_0, %c0_1] : memref<2x8x32xf32, #tpu.memory_space<vmem>>, vector<2x8x32xf32>
    %1 = vector.shape_cast %0 : vector<2x8x32xf32> to vector<16x32xf32>
    %2 = arith.truncf %1 : vector<16x32xf32> to vector<16x32xbf16>
    %c0_2 = arith.constant 0 : index
    %c0_3 = arith.constant 0 : index
    %3 = vector.load %arg2[%c0_2, %c0_3] : memref<32x96xbf16, #tpu.memory_space<vmem>>, vector<32x96xbf16>
    %cst = arith.constant dense<0.000000e+00> : vector<16x96xf32>
    %4 = tpu.matmul %2, %3, %cst {dimension_numbers = #tpu.dot_dimension_numbers<[1], [0], [0], [1], [0, 0, 1, 1], [], []>} : vector<16x32xbf16>, vector<32x96xbf16>, vector<16x96xf32> -> vector<16x96xf32>
    %5 = vector.shape_cast %4 : vector<16x96xf32> to vector<16x12x8xf32>
    %6 = vector.extract_strided_slice %5 {offsets = [0, 0, 0], sizes = [16, 1, 8], strides = [1, 1, 1]} : vector<16x12x8xf32> to vector<16x1x8xf32>
    %7 = vector.shape_cast %6 : vector<16x1x8xf32> to vector<16x8xf32>
    %8 = vector.extract_strided_slice %5 {offsets = [0, 1, 0], sizes = [16, 1, 8], strides = [1, 1, 1]} : vector<16x12x8xf32> to vector<16x1x8xf32>
    %9 = vector.shape_cast %8 : vector<16x1x8xf32> to vector<16x8xf32>
    %10 = vector.extract_strided_slice %5 {offsets = [0, 2, 0], sizes = [16, 1, 8], strides = [1, 1, 1]} : vector<16x12x8xf32> to vector<16x1x8xf32>
    %11 = vector.shape_cast %10 : vector<16x1x8xf32> to vector<16x8xf32>
    %12 = vector.extract_strided_slice %5 {offsets = [0, 3, 0], sizes = [16, 1, 8], strides = [1, 1, 1]} : vector<16x12x8xf32> to vector<16x1x8xf32>
    %13 = vector.shape_cast %12 : vector<16x1x8xf32> to vector<16x8xf32>
    %14 = vector.extract_strided_slice %5 {offsets = [0, 4, 0], sizes = [16, 1, 8], strides = [1, 1, 1]} : vector<16x12x8xf32> to vector<16x1x8xf32>
    %15 = vector.shape_cast %14 : vector<16x1x8xf32> to vector<16x8xf32>
    %16 = vector.extract_strided_slice %5 {offsets = [0, 5, 0], sizes = [16, 1, 8], strides = [1, 1, 1]} : vector<16x12x8xf32> to vector<16x1x8xf32>
    %17 = vector.shape_cast %16 : vector<16x1x8xf32> to vector<16x8xf32>
    %18 = vector.extract_strided_slice %5 {offsets = [0, 6, 0], sizes = [16, 1, 8], strides = [1, 1, 1]} : vector<16x12x8xf32> to vector<16x1x8xf32>
    %19 = vector.shape_cast %18 : vector<16x1x8xf32> to vector<16x8xf32>
    %20 = vector.extract_strided_slice %5 {offsets = [0, 7, 0], sizes = [16, 1, 8], strides = [1, 1, 1]} : vector<16x12x8xf32> to vector<16x1x8xf32>
    %21 = vector.shape_cast %20 : vector<16x1x8xf32> to vector<16x8xf32>
    %22 = vector.extract_strided_slice %5 {offsets = [0, 8, 0], sizes = [16, 1, 8], strides = [1, 1, 1]} : vector<16x12x8xf32> to vector<16x1x8xf32>
    %23 = vector.shape_cast %22 : vector<16x1x8xf32> to vector<16x8xf32>
    %24 = vector.extract_strided_slice %5 {offsets = [0, 9, 0], sizes = [16, 1, 8], strides = [1, 1, 1]} : vector<16x12x8xf32> to vector<16x1x8xf32>
    %25 = vector.shape_cast %24 : vector<16x1x8xf32> to vector<16x8xf32>
    %26 = vector.extract_strided_slice %5 {offsets = [0, 10, 0], sizes = [16, 1, 8], strides = [1, 1, 1]} : vector<16x12x8xf32> to vector<16x1x8xf32>
    %27 = vector.shape_cast %26 : vector<16x1x8xf32> to vector<16x8xf32>
    %28 = vector.extract_strided_slice %5 {offsets = [0, 11, 0], sizes = [16, 1, 8], strides = [1, 1, 1]} : vector<16x12x8xf32> to vector<16x1x8xf32>
    %29 = vector.shape_cast %28 : vector<16x1x8xf32> to vector<16x8xf32>
    %30 = vector.shape_cast %7 : vector<16x8xf32> to vector<1x16x8xf32>
    %31 = vector.shape_cast %9 : vector<16x8xf32> to vector<1x16x8xf32>
    %32 = vector.shape_cast %11 : vector<16x8xf32> to vector<1x16x8xf32>
    %33 = vector.shape_cast %13 : vector<16x8xf32> to vector<1x16x8xf32>
    %34 = vector.shape_cast %15 : vector<16x8xf32> to vector<1x16x8xf32>
    %35 = vector.shape_cast %17 : vector<16x8xf32> to vector<1x16x8xf32>
    %36 = vector.shape_cast %19 : vector<16x8xf32> to vector<1x16x8xf32>
    %37 = vector.shape_cast %21 : vector<16x8xf32> to vector<1x16x8xf32>
    %38 = vector.shape_cast %23 : vector<16x8xf32> to vector<1x16x8xf32>
    %39 = vector.shape_cast %25 : vector<16x8xf32> to vector<1x16x8xf32>
    %40 = vector.shape_cast %27 : vector<16x8xf32> to vector<1x16x8xf32>
    %41 = vector.shape_cast %29 : vector<16x8xf32> to vector<1x16x8xf32>
    %42 = tpu.concatenate %30, %31, %32, %33, %34, %35, %36, %37, %38, %39, %40, %41 in 0 : vector<1x16x8xf32>, vector<1x16x8xf32>, vector<1x16x8xf32>, vector<1x16x8xf32>, vector<1x16x8xf32>, vector<1x16x8xf32>, vector<1x16x8xf32>, vector<1x16x8xf32>, vector<1x16x8xf32>, vector<1x16x8xf32>, vector<1x16x8xf32>, vector<1x16x8xf32> -> vector<12x16x8xf32>
    %43 = vector.extract_strided_slice %42 {offsets = [0, 0, 0], sizes = [4, 16, 8], strides = [1, 1, 1]} : vector<12x16x8xf32> to vector<4x16x8xf32>
    %44 = vector.shape_cast %43 : vector<4x16x8xf32> to vector<8x8x8xf32>
    %45 = arith.truncf %44 : vector<8x8x8xf32> to vector<8x8x8xbf16>
    %46 = vector.extract_strided_slice %42 {offsets = [4, 0, 0], sizes = [4, 16, 8], strides = [1, 1, 1]} : vector<12x16x8xf32> to vector<4x16x8xf32>
    %47 = vector.shape_cast %46 : vector<4x16x8xf32> to vector<8x8x8xf32>
    %48 = arith.truncf %47 : vector<8x8x8xf32> to vector<8x8x8xbf16>
    %49 = vector.extract_strided_slice %42 {offsets = [8, 0, 0], sizes = [4, 16, 8], strides = [1, 1, 1]} : vector<12x16x8xf32> to vector<4x16x8xf32>
    %50 = vector.shape_cast %49 : vector<4x16x8xf32> to vector<8x8x8xf32>
    %51 = arith.truncf %50 : vector<8x8x8xf32> to vector<8x8x8xbf16>
    "tpu.trace_start"() <{level = 10 : i32, message = "bqd,bkd->bqk"}> : () -> ()
    %cst_4 = arith.constant dense<0.000000e+00> : vector<8x8x8xf32>
    %52 = tpu.matmul %45, %48, %cst_4 {dimension_numbers = #tpu.dot_dimension_numbers<[2], [2], [1], [1], [0, 0, 0, 1, 1, 1], [0], [0]>} : vector<8x8x8xbf16>, vector<8x8x8xbf16>, vector<8x8x8xf32> -> vector<8x8x8xf32>
    "tpu.trace_stop"() : () -> ()
    %cst_5 = arith.constant dense<0xFF800000> : vector<8x8xf32>
    %53 = vector.multi_reduction <maximumf>, %52, %cst_5 [2] : vector<8x8x8xf32> to vector<8x8xf32>
    %54 = vector.shape_cast %53 : vector<8x8xf32> to vector<8x8x1xf32>
    %55 = vector.broadcast %54 : vector<8x8x1xf32> to vector<8x8x8xf32>
    %56 = arith.subf %52, %55 : vector<8x8x8xf32>
    %57 = math.exp %56 : vector<8x8x8xf32>
    %cst_6 = arith.constant dense<0.000000e+00> : vector<8x8xf32>
    %58 = vector.multi_reduction <add>, %57, %cst_6 [2] : vector<8x8x8xf32> to vector<8x8xf32>
    %59 = vector.shape_cast %58 : vector<8x8xf32> to vector<8x8x1xf32>
    %60 = arith.truncf %57 : vector<8x8x8xf32> to vector<8x8x8xbf16>
    "tpu.trace_start"() <{level = 10 : i32, message = "bqk,bkd->bqd"}> : () -> ()
    %cst_7 = arith.constant dense<0.000000e+00> : vector<8x8x8xf32>
    %61 = tpu.matmul %60, %51, %cst_7 {dimension_numbers = #tpu.dot_dimension_numbers<[2], [1], [1], [2], [0, 0, 0, 1, 1, 2], [0], [0]>} : vector<8x8x8xbf16>, vector<8x8x8xbf16>, vector<8x8x8xf32> -> vector<8x8x8xf32>
    "tpu.trace_stop"() : () -> ()
    %62 = tpu.reciprocal %59 {approx = true} : vector<8x8x1xf32> -> vector<8x8x1xf32>
    %63 = vector.broadcast %62 : vector<8x8x1xf32> to vector<8x8x8xf32>
    %64 = arith.mulf %61, %63 : vector<8x8x8xf32>
    %65 = vector.shape_cast %64 : vector<8x8x8xf32> to vector<4x16x8xf32>
    %66 = vector.extract_strided_slice %65 {offsets = [0, 0, 0], sizes = [1, 16, 8], strides = [1, 1, 1]} : vector<4x16x8xf32> to vector<1x16x8xf32>
    %67 = vector.shape_cast %66 : vector<1x16x8xf32> to vector<16x8xf32>
    %68 = vector.shape_cast %67 : vector<16x8xf32> to vector<16x1x8xf32>
    %69 = vector.extract_strided_slice %65 {offsets = [1, 0, 0], sizes = [1, 16, 8], strides = [1, 1, 1]} : vector<4x16x8xf32> to vector<1x16x8xf32>
    %70 = vector.shape_cast %69 : vector<1x16x8xf32> to vector<16x8xf32>
    %71 = vector.shape_cast %70 : vector<16x8xf32> to vector<16x1x8xf32>
    %72 = vector.extract_strided_slice %65 {offsets = [2, 0, 0], sizes = [1, 16, 8], strides = [1, 1, 1]} : vector<4x16x8xf32> to vector<1x16x8xf32>
    %73 = vector.shape_cast %72 : vector<1x16x8xf32> to vector<16x8xf32>
    %74 = vector.shape_cast %73 : vector<16x8xf32> to vector<16x1x8xf32>
    %75 = vector.extract_strided_slice %65 {offsets = [3, 0, 0], sizes = [1, 16, 8], strides = [1, 1, 1]} : vector<4x16x8xf32> to vector<1x16x8xf32>
    %76 = vector.shape_cast %75 : vector<1x16x8xf32> to vector<16x8xf32>
    %77 = vector.shape_cast %76 : vector<16x8xf32> to vector<16x1x8xf32>
    %78 = tpu.concatenate %68, %71, %74, %77 in 1 : vector<16x1x8xf32>, vector<16x1x8xf32>, vector<16x1x8xf32>, vector<16x1x8xf32> -> vector<16x4x8xf32>
    %79 = vector.shape_cast %78 : vector<16x4x8xf32> to vector<16x32xf32>
    %80 = arith.truncf %79 : vector<16x32xf32> to vector<16x32xbf16>
    %c0_8 = arith.constant 0 : index
    %c0_9 = arith.constant 0 : index
    %81 = vector.load %arg3[%c0_8, %c0_9] : memref<32x32xbf16, #tpu.memory_space<vmem>>, vector<32x32xbf16>
    %cst_10 = arith.constant dense<0.000000e+00> : vector<16x32xf32>
    %82 = tpu.matmul %80, %81, %cst_10 {dimension_numbers = #tpu.dot_dimension_numbers<[1], [0], [0], [1], [0, 0, 1, 1], [], []>} : vector<16x32xbf16>, vector<32x32xbf16>, vector<16x32xf32> -> vector<16x32xf32>
    %c0_11 = arith.constant 0 : index
    %c0_12 = arith.constant 0 : index
    %83 = vector.load %arg4[%c0_11, %c0_12] : memref<1x32xf32, #tpu.memory_space<vmem>>, vector<1x32xf32>
    %84 = vector.broadcast %83 : vector<1x32xf32> to vector<16x32xf32>
    %85 = arith.addf %82, %84 : vector<16x32xf32>
    %86 = arith.addf %1, %85 : vector<16x32xf32>
    %c0_13 = arith.constant 0 : index
    %c0_14 = arith.constant 0 : index
    %87 = vector.load %arg5[%c0_13, %c0_14] : memref<1x32xf32, #tpu.memory_space<vmem>>, vector<1x32xf32>
    %c0_15 = arith.constant 0 : index
    %c0_16 = arith.constant 0 : index
    %88 = vector.load %arg6[%c0_15, %c0_16] : memref<1x32xf32, #tpu.memory_space<vmem>>, vector<1x32xf32>
    %cst_17 = arith.constant dense<0.000000e+00> : vector<16xf32>
    %89 = vector.multi_reduction <add>, %86, %cst_17 [1] : vector<16x32xf32> to vector<16xf32>
    %90 = vector.shape_cast %89 : vector<16xf32> to vector<16x1xf32>
    %cst_18 = arith.constant 3.200000e+01 : f32
    %91 = vector.broadcast %cst_18 : f32 to vector<16x1xf32>
    %92 = arith.divf %90, %91 : vector<16x1xf32>
    %93 = vector.broadcast %92 : vector<16x1xf32> to vector<16x32xf32>
    %94 = arith.subf %86, %93 : vector<16x32xf32>
    %95 = arith.mulf %94, %94 : vector<16x32xf32>
    %cst_19 = arith.constant dense<0.000000e+00> : vector<16xf32>
    %96 = vector.multi_reduction <add>, %95, %cst_19 [1] : vector<16x32xf32> to vector<16xf32>
    %97 = vector.shape_cast %96 : vector<16xf32> to vector<16x1xf32>
    %cst_20 = arith.constant 3.200000e+01 : f32
    %98 = vector.broadcast %cst_20 : f32 to vector<16x1xf32>
    %99 = arith.divf %97, %98 : vector<16x1xf32>
    %cst_21 = arith.constant 9.99999974E-6 : f32
    %100 = vector.broadcast %cst_21 : f32 to vector<16x1xf32>
    %101 = arith.addf %99, %100 : vector<16x1xf32>
    %102 = math.rsqrt %101 : vector<16x1xf32>
    %103 = vector.broadcast %92 : vector<16x1xf32> to vector<16x32xf32>
    %104 = arith.subf %86, %103 : vector<16x32xf32>
    %105 = vector.broadcast %102 : vector<16x1xf32> to vector<16x32xf32>
    %106 = arith.mulf %104, %105 : vector<16x32xf32>
    %107 = vector.broadcast %87 : vector<1x32xf32> to vector<16x32xf32>
    %108 = arith.mulf %106, %107 : vector<16x32xf32>
    %109 = vector.broadcast %88 : vector<1x32xf32> to vector<16x32xf32>
    %110 = arith.addf %108, %109 : vector<16x32xf32>
    %111 = arith.truncf %110 : vector<16x32xf32> to vector<16x32xbf16>
    %c0_22 = arith.constant 0 : index
    %c0_23 = arith.constant 0 : index
    %112 = vector.load %arg7[%c0_22, %c0_23] : memref<32x128xbf16, #tpu.memory_space<vmem>>, vector<32x128xbf16>
    %cst_24 = arith.constant dense<0.000000e+00> : vector<16x128xf32>
    %113 = tpu.matmul %111, %112, %cst_24 {dimension_numbers = #tpu.dot_dimension_numbers<[1], [0], [0], [1], [0, 0, 1, 1], [], []>} : vector<16x32xbf16>, vector<32x128xbf16>, vector<16x128xf32> -> vector<16x128xf32>
    %c0_25 = arith.constant 0 : index
    %c0_26 = arith.constant 0 : index
    %114 = vector.load %arg8[%c0_25, %c0_26] : memref<1x128xf32, #tpu.memory_space<vmem>>, vector<1x128xf32>
    %115 = vector.broadcast %114 : vector<1x128xf32> to vector<16x128xf32>
    %116 = arith.addf %113, %115 : vector<16x128xf32>
    %cst_27 = arith.constant 0.000000e+00 : f32
    %117 = vector.broadcast %cst_27 : f32 to vector<16x128xf32>
    %118 = arith.maximumf %116, %117 : vector<16x128xf32>
    %119 = arith.truncf %118 : vector<16x128xf32> to vector<16x128xbf16>
    %c0_28 = arith.constant 0 : index
    %c0_29 = arith.constant 0 : index
    %120 = vector.load %arg9[%c0_28, %c0_29] : memref<128x32xbf16, #tpu.memory_space<vmem>>, vector<128x32xbf16>
    %cst_30 = arith.constant dense<0.000000e+00> : vector<16x32xf32>
    %121 = tpu.matmul %119, %120, %cst_30 {dimension_numbers = #tpu.dot_dimension_numbers<[1], [0], [0], [1], [0, 0, 1, 1], [], []>} : vector<16x128xbf16>, vector<128x32xbf16>, vector<16x32xf32> -> vector<16x32xf32>
    %c0_31 = arith.constant 0 : index
    %c0_32 = arith.constant 0 : index
    %122 = vector.load %arg10[%c0_31, %c0_32] : memref<1x32xf32, #tpu.memory_space<vmem>>, vector<1x32xf32>
    %123 = vector.broadcast %122 : vector<1x32xf32> to vector<16x32xf32>
    %124 = arith.addf %121, %123 : vector<16x32xf32>
    %125 = arith.addf %110, %124 : vector<16x32xf32>
    %c0_33 = arith.constant 0 : index
    %c0_34 = arith.constant 0 : index
    %126 = vector.load %arg11[%c0_33, %c0_34] : memref<1x32xf32, #tpu.memory_space<vmem>>, vector<1x32xf32>
    %c0_35 = arith.constant 0 : index
    %c0_36 = arith.constant 0 : index
    %127 = vector.load %arg12[%c0_35, %c0_36] : memref<1x32xf32, #tpu.memory_space<vmem>>, vector<1x32xf32>
    %cst_37 = arith.constant dense<0.000000e+00> : vector<16xf32>
    %128 = vector.multi_reduction <add>, %125, %cst_37 [1] : vector<16x32xf32> to vector<16xf32>
    %129 = vector.shape_cast %128 : vector<16xf32> to vector<16x1xf32>
    %cst_38 = arith.constant 3.200000e+01 : f32
    %130 = vector.broadcast %cst_38 : f32 to vector<16x1xf32>
    %131 = arith.divf %129, %130 : vector<16x1xf32>
    %132 = vector.broadcast %131 : vector<16x1xf32> to vector<16x32xf32>
    %133 = arith.subf %125, %132 : vector<16x32xf32>
    %134 = arith.mulf %133, %133 : vector<16x32xf32>
    %cst_39 = arith.constant dense<0.000000e+00> : vector<16xf32>
    %135 = vector.multi_reduction <add>, %134, %cst_39 [1] : vector<16x32xf32> to vector<16xf32>
    %136 = vector.shape_cast %135 : vector<16xf32> to vector<16x1xf32>
    %cst_40 = arith.constant 3.200000e+01 : f32
    %137 = vector.broadcast %cst_40 : f32 to vector<16x1xf32>
    %138 = arith.divf %136, %137 : vector<16x1xf32>
    %cst_41 = arith.constant 9.99999974E-6 : f32
    %139 = vector.broadcast %cst_41 : f32 to vector<16x1xf32>
    %140 = arith.addf %138, %139 : vector<16x1xf32>
    %141 = math.rsqrt %140 : vector<16x1xf32>
    %142 = vector.broadcast %131 : vector<16x1xf32> to vector<16x32xf32>
    %143 = arith.subf %125, %142 : vector<16x32xf32>
    %144 = vector.broadcast %141 : vector<16x1xf32> to vector<16x32xf32>
    %145 = arith.mulf %143, %144 : vector<16x32xf32>
    %146 = vector.broadcast %126 : vector<1x32xf32> to vector<16x32xf32>
    %147 = arith.mulf %145, %146 : vector<16x32xf32>
    %148 = vector.broadcast %127 : vector<1x32xf32> to vector<16x32xf32>
    %149 = arith.addf %147, %148 : vector<16x32xf32>
    %150 = vector.shape_cast %149 : vector<16x32xf32> to vector<2x8x32xf32>
    %c0_42 = arith.constant 0 : index
    %c0_43 = arith.constant 0 : index
    %c0_44 = arith.constant 0 : index
    %151 = vector.load %arg13[%c0_42, %c0_43, %c0_44] : memref<2x8x32xf32, #tpu.memory_space<vmem>>, vector<2x8x32xf32>
    tpu.vector_store %arg13[%c0_42, %c0_43, %c0_44], %150 {strides = array<i32>} : memref<2x8x32xf32, #tpu.memory_space<vmem>>, vector<2x8x32xf32>,
    return
  }
  func.func @transform_0(%arg0: i32) -> (i32, i32, i32) {
    %c0_i32 = arith.constant 0 : i32
    %c0_i32_0 = arith.constant 0 : i32
    %c0_i32_1 = arith.constant 0 : i32
    return %arg0, %c0_i32, %c0_i32_0 : i32, i32, i32
  }
  func.func @transform_1(%arg0: i32) -> (i32, i32) {
    %c0_i32 = arith.constant 0 : i32
    %c0_i32_0 = arith.constant 0 : i32
    %c0_i32_1 = arith.constant 0 : i32
    return %c0_i32, %c0_i32_0 : i32, i32
  }
  func.func @transform_2(%arg0: i32) -> (i32, i32) {
    %c0_i32 = arith.constant 0 : i32
    %c0_i32_0 = arith.constant 0 : i32
    %c0_i32_1 = arith.constant 0 : i32
    return %c0_i32, %c0_i32_0 : i32, i32
  }
  func.func @transform_3(%arg0: i32) -> (i32, i32) {
    %c0_i32 = arith.constant 0 : i32
    %c0_i32_0 = arith.constant 0 : i32
    %c0_i32_1 = arith.constant 0 : i32
    return %c0_i32, %c0_i32_0 : i32, i32
  }
  func.func @transform_4(%arg0: i32) -> (i32, i32) {
    %c0_i32 = arith.constant 0 : i32
    %c0_i32_0 = arith.constant 0 : i32
    %c0_i32_1 = arith.constant 0 : i32
    return %c0_i32, %c0_i32_0 : i32, i32
  }
  func.func @transform_5(%arg0: i32) -> (i32, i32) {
    %c0_i32 = arith.constant 0 : i32
    %c0_i32_0 = arith.constant 0 : i32
    %c0_i32_1 = arith.constant 0 : i32
    return %c0_i32, %c0_i32_0 : i32, i32
  }
  func.func @transform_6(%arg0: i32) -> (i32, i32) {
    %c0_i32 = arith.constant 0 : i32
    %c0_i32_0 = arith.constant 0 : i32
    %c0_i32_1 = arith.constant 0 : i32
    return %c0_i32, %c0_i32_0 : i32, i32
  }
  func.func @transform_7(%arg0: i32) -> (i32, i32) {
    %c0_i32 = arith.constant 0 : i32
    %c0_i32_0 = arith.constant 0 : i32
    %c0_i32_1 = arith.constant 0 : i32
    return %c0_i32, %c0_i32_0 : i32, i32
  }
  func.func @transform_8(%arg0: i32) -> (i32, i32) {
    %c0_i32 = arith.constant 0 : i32
    %c0_i32_0 = arith.constant 0 : i32
    %c0_i32_1 = arith.constant 0 : i32
    return %c0_i32, %c0_i32_0 : i32, i32
  }
  func.func @transform_9(%arg0: i32) -> (i32, i32) {
    %c0_i32 = arith.constant 0 : i32
    %c0_i32_0 = arith.constant 0 : i32
    %c0_i32_1 = arith.constant 0 : i32
    return %c0_i32, %c0_i32_0 : i32, i32
  }
  func.func @transform_10(%arg0: i32) -> (i32, i32) {
    %c0_i32 = arith.constant 0 : i32
    %c0_i32_0 = arith.constant 0 : i32
    %c0_i32_1 = arith.constant 0 : i32
    return %c0_i32, %c0_i32_0 : i32, i32
  }
  func.func @transform_11(%arg0: i32) -> (i32, i32) {
    %c0_i32 = arith.constant 0 : i32
    %c0_i32_0 = arith.constant 0 : i32
    %c0_i32_1 = arith.constant 0 : i32
    return %c0_i32, %c0_i32_0 : i32, i32
  }
  func.func @transform_12(%arg0: i32) -> (i32, i32, i32) {
    %c0_i32 = arith.constant 0 : i32
    %c0_i32_0 = arith.constant 0 : i32
    %c0_i32_1 = arith.constant 0 : i32
    return %arg0, %c0_i32, %c0_i32_0 : i32, i32, i32
  }
}

</mosaic_0001>

<llo_original>
// kernel: tpu_custom_call.1
$region0: #{tpu_custom_call.1}
  #allocation0 [shape = 'u32[]', space=smem, size = 0x4, offset = 0x4, fixed_abs, tag = 'smem constant byte address 0x4 - core index']
  #allocation1 [shape = 'u32[144,128]{1,0:T(1,128)}', space=vmem, size = 0x12000, scoped, tag = 'internal scratch']
  %s0 = inlined_call_operand.vmem [shape: f32[2,8,32], index: 0, kind: input, shape index: {}]
  %s1 = inlined_call_operand.vmem [shape: bf16[32,96], index: 1, kind: input, shape index: {}]
  %s2 = inlined_call_operand.vmem [shape: bf16[32,32], index: 2, kind: input, shape index: {}]
  %s3 = inlined_call_operand.vmem [shape: f32[1,32], index: 3, kind: input, shape index: {}]
  %s4 = inlined_call_operand.vmem [shape: f32[1,32], index: 4, kind: input, shape index: {}]
  %s5 = inlined_call_operand.vmem [shape: f32[1,32], index: 5, kind: input, shape index: {}]
  %s6 = inlined_call_operand.vmem [shape: bf16[32,128], index: 6, kind: input, shape index: {}]
  %s7 = inlined_call_operand.vmem [shape: f32[1,128], index: 7, kind: input, shape index: {}]
  %s8 = inlined_call_operand.vmem [shape: bf16[128,32], index: 8, kind: input, shape index: {}]
  %s9 = inlined_call_operand.vmem [shape: f32[1,32], index: 9, kind: input, shape index: {}]
  %s10 = inlined_call_operand.vmem [shape: f32[1,32], index: 10, kind: input, shape index: {}]
  %s11 = inlined_call_operand.vmem [shape: f32[1,32], index: 11, kind: input, shape index: {}]
  %s12 = inlined_call_operand.hbm [shape: f32[2,8,32], index: 12, kind: output, shape index: {}]
  %s13 = sld [smem:[#allocation0]]
  $region58: #{tpu_custom_call.1} parent=0
    _
  %s15 = ssub.s32 1, %s13
  %s16 = scalar_select 0, %s15, %s13
  $region1: #{tpu_custom_call.1} parent=0
    #allocation2 [shape = 'u8[8192]{0}', space=vmem, size = 0x2000, scoped, tag = 'output window, operand 0, single buffered']
    #allocation3 [shape = 's32[1]{0}', space=sflag, size = 0x4, scoped, tag = 'scoped memory for tpu_custom_call.1']
    %17 = vsyncpa [#allocation3], 0
    // Predicated region
    $region2: #{tpu_custom_call.1} parent=1 // pred_check
      _
    $region3: #{tpu_custom_call.1} parent=1 // pred_check_branch
      %19 = sbr.rel (0) target = $region5
    $region4: #{tpu_custom_call.1} parent=1 // pred_region
      _
    $region5: #{tpu_custom_call.1} parent=1 // pred_fallthru
      _
    // Predicated region
    $region6: #{tpu_custom_call.1} parent=1 // pred_check
      _
    $region7: #{tpu_custom_call.1} parent=1 // pred_check_branch
      %21 = sbr.rel (0) target = $region9
    $region8: #{tpu_custom_call.1} parent=1 // pred_region
      _
    $region9: #{tpu_custom_call.1} parent=1 // pred_fallthru
      _
    // Predicated region
    $region10: #{tpu_custom_call.1} parent=1 // pred_check
      _
    $region11: #{tpu_custom_call.1} parent=1 // pred_check_branch
      %23 = sbr.rel (0) target = $region13
    $region12: #{tpu_custom_call.1} parent=1 // pred_region
      _
    $region13: #{tpu_custom_call.1} parent=1 // pred_fallthru
      _
    // Predicated region
    $region14: #{tpu_custom_call.1} parent=1 // pred_check
      _
    $region15: #{tpu_custom_call.1} parent=1 // pred_check_branch
      %25 = sbr.rel (0) target = $region17
    $region16: #{tpu_custom_call.1} parent=1 // pred_region
      _
    $region17: #{tpu_custom_call.1} parent=1 // pred_fallthru
      _
    // Predicated region
    $region18: #{tpu_custom_call.1} parent=1 // pred_check
      _
    $region19: #{tpu_custom_call.1} parent=1 // pred_check_branch
      %27 = sbr.rel (0) target = $region21
    $region20: #{tpu_custom_call.1} parent=1 // pred_region
      _
    $region21: #{tpu_custom_call.1} parent=1 // pred_fallthru
      _
    // Predicated region
    $region22: #{tpu_custom_call.1} parent=1 // pred_check
      _
    $region23: #{tpu_custom_call.1} parent=1 // pred_check_branch
      %29 = sbr.rel (0) target = $region25
    $region24: #{tpu_custom_call.1} parent=1 // pred_region
      _
    $region25: #{tpu_custom_call.1} parent=1 // pred_fallthru
      _
    // Predicated region
    $region26: #{tpu_custom_call.1} parent=1 // pred_check
      _
    $region27: #{tpu_custom_call.1} parent=1 // pred_check_branch
      %31 = sbr.rel (0) target = $region29
    $region28: #{tpu_custom_call.1} parent=1 // pred_region
      _
    $region29: #{tpu_custom_call.1} parent=1 // pred_fallthru
      _
    // Predicated region
    $region30: #{tpu_custom_call.1} parent=1 // pred_check
      _
    $region31: #{tpu_custom_call.1} parent=1 // pred_check_branch
      %33 = sbr.rel (0) target = $region33
    $region32: #{tpu_custom_call.1} parent=1 // pred_region
      _
    $region33: #{tpu_custom_call.1} parent=1 // pred_fallthru
      _
    // Predicated region
    $region34: #{tpu_custom_call.1} parent=1 // pred_check
      _
    $region35: #{tpu_custom_call.1} parent=1 // pred_check_branch
      %35 = sbr.rel (0) target = $region37
    $region36: #{tpu_custom_call.1} parent=1 // pred_region
      _
    $region37: #{tpu_custom_call.1} parent=1 // pred_fallthru
      _
    // Predicated region
    $region38: #{tpu_custom_call.1} parent=1 // pred_check
      _
    $region39: #{tpu_custom_call.1} parent=1 // pred_check_branch
      %37 = sbr.rel (0) target = $region41
    $region40: #{tpu_custom_call.1} parent=1 // pred_region
      _
    $region41: #{tpu_custom_call.1} parent=1 // pred_fallthru
      _
    // Predicated region
    $region42: #{tpu_custom_call.1} parent=1 // pred_check
      _
    $region43: #{tpu_custom_call.1} parent=1 // pred_check_branch
      %39 = sbr.rel (0) target = $region45
    $region44: #{tpu_custom_call.1} parent=1 // pred_region
      _
    $region45: #{tpu_custom_call.1} parent=1 // pred_fallthru
      _
    // Predicated region
    $region46: #{tpu_custom_call.1} parent=1 // pred_check
      _
    $region47: #{tpu_custom_call.1} parent=1 // pred_check_branch
      %41 = sbr.rel (0) target = $region49
    $region48: #{tpu_custom_call.1} parent=1 // pred_region
      _
    $region49: #{tpu_custom_call.1} parent=1 // pred_fallthru
      _
    %v43 = vld [vmem:[%s0] sm:$0xff]
    %v44 = vld [vmem:[%s0 + $0x8] sm:$0xff]
    %v45 = vpack.c.bf16 %v44, %v43
    %v46 = vld [vmem:[%s1] sm:$0xf]
    %v47 = vld [vmem:[%s1 + $0x4] sm:$0xf]
    %v48 = vld [vmem:[%s1 + $0x8] sm:$0xf]
    %v49 = vld [vmem:[%s1 + $0xc] sm:$0xf]
    %v54 = vunpack.c.l.b16 %v46
    %v55 = vunpack.c.l.b16 %v47
    %v56 = vunpack.c.l.b16 %v48
    %v57 = vunpack.c.l.b16 %v49
    %v58 = vpack.c.b16 %v55, %v54
    %v59 = vpack.c.b16 %v57, %v56
    %vm62 = vcmask 261120
    %v64 = vsel %vm62, %v45, 0
    %66 = vmatprep.subr.bf16.mxu0 0
    %67 = vmatpush1.bf16.msra.mxu0 %v58
    %68 = vmatprep.subr.bf16.mxu0 0
    %69 = vmatpush1.bf16.msra.mxu0 %v59
    %70 = vmatprep.subr.bf16.mxu0 0
    %71 = vmatpush1.bf16.msra.mxu0 0
    %72 = vmatprep.subr.bf16.mxu0 0
    %73 = vmatpush1.bf16.msra.mxu0 0
    %74 = vmatprep.subr.bf16.mxu0 0
    %75 = vmatpush1.bf16.msra.mxu0 0
    %76 = vmatprep.subr.bf16.mxu0 0
    %77 = vmatpush1.bf16.msra.mxu0 0
    %78 = vmatprep.subr.bf16.mxu0 0
    %79 = vmatpush1.bf16.msra.mxu0 0
    %80 = vmatprep.subr.bf16.mxu0 0
    %81 = vmatpush1.bf16.msra.mxu0 0
    %82 = vmatprep.subr.bf16.mxu0 0
    %83 = vmatpush1.bf16.msra.mxu0 0
    %84 = vmatprep.subr.bf16.mxu0 0
    %85 = vmatpush1.bf16.msra.mxu0 0
    %86 = vmatprep.subr.bf16.mxu0 0
    %87 = vmatpush1.bf16.msra.mxu0 0
    %88 = vmatprep.subr.bf16.mxu0 0
    %89 = vmatpush1.bf16.msra.mxu0 0
    %90 = vmatprep.subr.bf16.mxu0 0
    %91 = vmatpush1.bf16.msra.mxu0 0
    %92 = vmatprep.subr.bf16.mxu0 0
    %93 = vmatpush1.bf16.msra.mxu0 0
    %94 = vmatprep.subr.bf16.mxu0 0
    %95 = vmatpush1.bf16.msra.mxu0 0
    %96 = vmatprep.subr.bf16.mxu0 0
    %97 = vmatpush1.bf16.msra.mxu0 0
    %98 = vmatprep.mubr.bf16.mxu0 0
    %99 = vmatmul.mubr.bf16.gmra.mrb[0].mxu0 %v64
    %v100 = vpop.f32.mrb[0].mxu0
    %v101 = vadd.f32 0.0, %v100
    %v102 = vpop.f32.mrb[0].mxu0
    %v103 = vpop.f32.mrb[0].mxu0
    %v104 = vadd.f32 0.0, %v103
    %v105 = vpop.f32.mrb[0].mxu0
    %106 = vdwg.mxu0
    %109 = vrot.lane.b32.xlu0 %v101, 120
    %v110 = vpop.permute.xlu0 %109
    %111 = vrot.lane.b32.xlu0 %v104, 120
    %v112 = vpop.permute.xlu0 %111
    %115 = vrot.lane.b32.xlu0 %v101, 112
    %v116 = vpop.permute.xlu0 %115
    %117 = vrot.lane.b32.xlu0 %v104, 112
    %v118 = vpop.permute.xlu0 %117
    %121 = vrot.lane.b32.xlu0 %v101, 104
    %v122 = vpop.permute.xlu0 %121
    %123 = vrot.lane.b32.xlu0 %v104, 104
    %v124 = vpop.permute.xlu0 %123
    %127 = vrot.lane.b32.xlu0 %v101, 96
    %v128 = vpop.permute.xlu0 %127
    %129 = vrot.lane.b32.xlu0 %v104, 96
    %v130 = vpop.permute.xlu0 %129
    %133 = vrot.lane.b32.xlu0 %v101, 88
    %v134 = vpop.permute.xlu0 %133
    %135 = vrot.lane.b32.xlu0 %v104, 88
    %v136 = vpop.permute.xlu0 %135
    %139 = vrot.lane.b32.xlu0 %v101, 80
    %v140 = vpop.permute.xlu0 %139
    %141 = vrot.lane.b32.xlu0 %v104, 80
    %v142 = vpop.permute.xlu0 %141
    %145 = vrot.lane.b32.xlu0 %v101, 72
    %v146 = vpop.permute.xlu0 %145
    %147 = vrot.lane.b32.xlu0 %v104, 72
    %v148 = vpop.permute.xlu0 %147
    %151 = vrot.lane.b32.xlu0 %v101, 64
    %v152 = vpop.permute.xlu0 %151
    %153 = vrot.lane.b32.xlu0 %v104, 64
    %v154 = vpop.permute.xlu0 %153
    %157 = vrot.lane.b32.xlu0 %v101, 56
    %v158 = vpop.permute.xlu0 %157
    %159 = vrot.lane.b32.xlu0 %v104, 56
    %v160 = vpop.permute.xlu0 %159
    %163 = vrot.lane.b32.xlu0 %v101, 48
    %v164 = vpop.permute.xlu0 %163
    %165 = vrot.lane.b32.xlu0 %v104, 48
    %v166 = vpop.permute.xlu0 %165
    %169 = vrot.lane.b32.xlu0 %v101, 40
    %v170 = vpop.permute.xlu0 %169
    %171 = vrot.lane.b32.xlu0 %v104, 40
    %v172 = vpop.permute.xlu0 %171
    %v175 = vcombine.low %v101, %v116
    %v176 = vcombine.high %v101, %v116
    %v178 = vunpack.c.l.s4 1983009808
    %v179 = vunpack.c.0.s8 %v178
    %v180 = vlaneseq
    %v181 = vshrl.u32 %v180, 7
    %v182 = vsub.s32 %v179, %v181
    %v183 = vrot.slane %v175, %v182
    %v185 = vunpack.c.l.s4 1983009808
    %v186 = vunpack.c.0.s8 %v185
    %v187 = vlaneseq
    %v188 = vshrl.u32 %v187, 7
    %v189 = vsub.s32 %v186, %v188
    %v190 = vrot.slane %v176, %v189
    %v191 = vcombine.low %v110, %v122
    %v192 = vcombine.high %v110, %v122
    %v194 = vunpack.c.l.s4 1983009808
    %v195 = vunpack.c.0.s8 %v194
    %v196 = vlaneseq
    %v197 = vshrl.u32 %v196, 7
    %v198 = vsub.s32 %v195, %v197
    %v199 = vrot.slane %v191, %v198
    %v201 = vunpack.c.l.s4 1983009808
    %v202 = vunpack.c.0.s8 %v201
    %v203 = vlaneseq
    %v204 = vshrl.u32 %v203, 7
    %v205 = vsub.s32 %v202, %v204
    %v206 = vrot.slane %v192, %v205
    %v207 = vcombine.low %v128, %v140
    %v208 = vcombine.high %v128, %v140
    %v210 = vunpack.c.l.s4 1983009808
    %v211 = vunpack.c.0.s8 %v210
    %v212 = vlaneseq
    %v213 = vshrl.u32 %v212, 7
    %v214 = vsub.s32 %v211, %v213
    %v215 = vrot.slane %v207, %v214
    %v217 = vunpack.c.l.s4 1983009808
    %v218 = vunpack.c.0.s8 %v217
    %v219 = vlaneseq
    %v220 = vshrl.u32 %v219, 7
    %v221 = vsub.s32 %v218, %v220
    %v222 = vrot.slane %v208, %v221
    %v223 = vcombine.low %v134, %v146
    %v224 = vcombine.high %v134, %v146
    %v226 = vunpack.c.l.s4 1983009808
    %v227 = vunpack.c.0.s8 %v226
    %v228 = vlaneseq
    %v229 = vshrl.u32 %v228, 7
    %v230 = vsub.s32 %v227, %v229
    %v231 = vrot.slane %v223, %v230
    %v233 = vunpack.c.l.s4 1983009808
    %v234 = vunpack.c.0.s8 %v233
    %v235 = vlaneseq
    %v236 = vshrl.u32 %v235, 7
    %v237 = vsub.s32 %v234, %v236
    %v238 = vrot.slane %v224, %v237
    %v239 = vcombine.low %v183, %v199
    %v240 = vcombine.high %v183, %v199
    %v242 = vunpack.c.l.s4 1934713408
    %v243 = vunpack.c.0.s8 %v242
    %v244 = vlaneseq
    %v245 = vshrl.u32 %v244, 7
    %v246 = vsub.s32 %v243, %v245
    %v247 = vrot.slane %v239, %v246
    %v249 = vunpack.c.l.s4 1934713408
    %v250 = vunpack.c.0.s8 %v249
    %v251 = vlaneseq
    %v252 = vshrl.u32 %v251, 7
    %v253 = vsub.s32 %v250, %v252
    %v254 = vrot.slane %v240, %v253
    %v255 = vcombine.low %v190, %v206
    %v256 = vcombine.high %v190, %v206
    %v258 = vunpack.c.l.s4 1934713408
    %v259 = vunpack.c.0.s8 %v258
    %v260 = vlaneseq
    %v261 = vshrl.u32 %v260, 7
    %v262 = vsub.s32 %v259, %v261
    %v263 = vrot.slane %v255, %v262
    %v265 = vunpack.c.l.s4 1934713408
    %v266 = vunpack.c.0.s8 %v265
    %v267 = vlaneseq
    %v268 = vshrl.u32 %v267, 7
    %v269 = vsub.s32 %v266, %v268
    %v270 = vrot.slane %v256, %v269
    %v271 = vcombine.low %v215, %v231
    %v272 = vcombine.high %v215, %v231
    %v274 = vunpack.c.l.s4 1934713408
    %v275 = vunpack.c.0.s8 %v274
    %v276 = vlaneseq
    %v277 = vshrl.u32 %v276, 7
    %v278 = vsub.s32 %v275, %v277
    %v279 = vrot.slane %v271, %v278
    %v281 = vunpack.c.l.s4 1934713408
    %v282 = vunpack.c.0.s8 %v281
    %v283 = vlaneseq
    %v284 = vshrl.u32 %v283, 7
    %v285 = vsub.s32 %v282, %v284
    %v286 = vrot.slane %v272, %v285
    %v287 = vcombine.low %v222, %v238
    %v288 = vcombine.high %v222, %v238
    %v290 = vunpack.c.l.s4 1934713408
    %v291 = vunpack.c.0.s8 %v290
    %v292 = vlaneseq
    %v293 = vshrl.u32 %v292, 7
    %v294 = vsub.s32 %v291, %v293
    %v295 = vrot.slane %v287, %v294
    %v297 = vunpack.c.l.s4 1934713408
    %v298 = vunpack.c.0.s8 %v297
    %v299 = vlaneseq
    %v300 = vshrl.u32 %v299, 7
    %v301 = vsub.s32 %v298, %v300
    %v302 = vrot.slane %v288, %v301
    %v303 = vcombine.low %v247, %v279
    %v304 = vcombine.high %v247, %v279
    %v305 = vcombine.low %v254, %v286
    %v306 = vcombine.high %v254, %v286
    %v307 = vcombine.low %v263, %v295
    %v308 = vcombine.high %v263, %v295
    %v309 = vcombine.low %v270, %v302
    %v310 = vcombine.high %v270, %v302
    %v311 = vcombine.low %v152, %v164
    %v312 = vcombine.high %v152, %v164
    %v314 = vunpack.c.l.s4 1983009808
    %v315 = vunpack.c.0.s8 %v314
    %v316 = vlaneseq
    %v317 = vshrl.u32 %v316, 7
    %v318 = vsub.s32 %v315, %v317
    %v319 = vrot.slane %v311, %v318
    %v321 = vunpack.c.l.s4 1983009808
    %v322 = vunpack.c.0.s8 %v321
    %v323 = vlaneseq
    %v324 = vshrl.u32 %v323, 7
    %v325 = vsub.s32 %v322, %v324
    %v326 = vrot.slane %v312, %v325
    %v327 = vcombine.low %v158, %v170
    %v328 = vcombine.high %v158, %v170
    %v330 = vunpack.c.l.s4 1983009808
    %v331 = vunpack.c.0.s8 %v330
    %v332 = vlaneseq
    %v333 = vshrl.u32 %v332, 7
    %v334 = vsub.s32 %v331, %v333
    %v335 = vrot.slane %v327, %v334
    %v337 = vunpack.c.l.s4 1983009808
    %v338 = vunpack.c.0.s8 %v337
    %v339 = vlaneseq
    %v340 = vshrl.u32 %v339, 7
    %v341 = vsub.s32 %v338, %v340
    %v342 = vrot.slane %v328, %v341
    %v343 = vcombine.low %v319, %v335
    %v344 = vcombine.high %v319, %v335
    %v346 = vunpack.c.l.s4 1934713408
    %v347 = vunpack.c.0.s8 %v346
    %v348 = vlaneseq
    %v349 = vshrl.u32 %v348, 7
    %v350 = vsub.s32 %v347, %v349
    %v351 = vrot.slane %v343, %v350
    %v353 = vunpack.c.l.s4 1934713408
    %v354 = vunpack.c.0.s8 %v353
    %v355 = vlaneseq
    %v356 = vshrl.u32 %v355, 7
    %v357 = vsub.s32 %v354, %v356
    %v358 = vrot.slane %v344, %v357
    %v359 = vcombine.low %v326, %v342
    %v360 = vcombine.high %v326, %v342
    %v362 = vunpack.c.l.s4 1934713408
    %v363 = vunpack.c.0.s8 %v362
    %v364 = vlaneseq
    %v365 = vshrl.u32 %v364, 7
    %v366 = vsub.s32 %v363, %v365
    %v367 = vrot.slane %v359, %v366
    %v369 = vunpack.c.l.s4 1934713408
    %v370 = vunpack.c.0.s8 %v369
    %v371 = vlaneseq
    %v372 = vshrl.u32 %v371, 7
    %v373 = vsub.s32 %v370, %v372
    %v374 = vrot.slane %v360, %v373
    %v375 = vcombine.high %v351, 0.0
    %v376 = vcombine.high %v358, 0.0
    %v377 = vcombine.high %v367, 0.0
    %v378 = vcombine.high %v374, 0.0
    %v379 = vcombine.low %v104, %v118
    %v380 = vcombine.high %v104, %v118
    %v382 = vunpack.c.l.s4 1983009808
    %v383 = vunpack.c.0.s8 %v382
    %v384 = vlaneseq
    %v385 = vshrl.u32 %v384, 7
    %v386 = vsub.s32 %v383, %v385
    %v387 = vrot.slane %v379, %v386
    %v389 = vunpack.c.l.s4 1983009808
    %v390 = vunpack.c.0.s8 %v389
    %v391 = vlaneseq
    %v392 = vshrl.u32 %v391, 7
    %v393 = vsub.s32 %v390, %v392
    %v394 = vrot.slane %v380, %v393
    %v395 = vcombine.low %v112, %v124
    %v396 = vcombine.high %v112, %v124
    %v398 = vunpack.c.l.s4 1983009808
    %v399 = vunpack.c.0.s8 %v398
    %v400 = vlaneseq
    %v401 = vshrl.u32 %v400, 7
    %v402 = vsub.s32 %v399, %v401
    %v403 = vrot.slane %v395, %v402
    %v405 = vunpack.c.l.s4 1983009808
    %v406 = vunpack.c.0.s8 %v405
    %v407 = vlaneseq
    %v408 = vshrl.u32 %v407, 7
    %v409 = vsub.s32 %v406, %v408
    %v410 = vrot.slane %v396, %v409
    %v411 = vcombine.low %v130, %v142
    %v412 = vcombine.high %v130, %v142
    %v414 = vunpack.c.l.s4 1983009808
    %v415 = vunpack.c.0.s8 %v414
    %v416 = vlaneseq
    %v417 = vshrl.u32 %v416, 7
    %v418 = vsub.s32 %v415, %v417
    %v419 = vrot.slane %v411, %v418
    %v421 = vunpack.c.l.s4 1983009808
    %v422 = vunpack.c.0.s8 %v421
    %v423 = vlaneseq
    %v424 = vshrl.u32 %v423, 7
    %v425 = vsub.s32 %v422, %v424
    %v426 = vrot.slane %v412, %v425
    %v427 = vcombine.low %v136, %v148
    %v428 = vcombine.high %v136, %v148
    %v430 = vunpack.c.l.s4 1983009808
    %v431 = vunpack.c.0.s8 %v430
    %v432 = vlaneseq
    %v433 = vshrl.u32 %v432, 7
    %v434 = vsub.s32 %v431, %v433
    %v435 = vrot.slane %v427, %v434
    %v437 = vunpack.c.l.s4 1983009808
    %v438 = vunpack.c.0.s8 %v437
    %v439 = vlaneseq
    %v440 = vshrl.u32 %v439, 7
    %v441 = vsub.s32 %v438, %v440
    %v442 = vrot.slane %v428, %v441
    %v443 = vcombine.low %v387, %v403
    %v444 = vcombine.high %v387, %v403
    %v446 = vunpack.c.l.s4 1934713408
    %v447 = vunpack.c.0.s8 %v446
    %v448 = vlaneseq
    %v449 = vshrl.u32 %v448, 7
    %v450 = vsub.s32 %v447, %v449
    %v451 = vrot.slane %v443, %v450
    %v453 = vunpack.c.l.s4 1934713408
    %v454 = vunpack.c.0.s8 %v453
    %v455 = vlaneseq
    %v456 = vshrl.u32 %v455, 7
    %v457 = vsub.s32 %v454, %v456
    %v458 = vrot.slane %v444, %v457
    %v459 = vcombine.low %v394, %v410
    %v460 = vcombine.high %v394, %v410
    %v462 = vunpack.c.l.s4 1934713408
    %v463 = vunpack.c.0.s8 %v462
    %v464 = vlaneseq
    %v465 = vshrl.u32 %v464, 7
    %v466 = vsub.s32 %v463, %v465
    %v467 = vrot.slane %v459, %v466
    %v469 = vunpack.c.l.s4 1934713408
    %v470 = vunpack.c.0.s8 %v469
    %v471 = vlaneseq
    %v472 = vshrl.u32 %v471, 7
    %v473 = vsub.s32 %v470, %v472
    %v474 = vrot.slane %v460, %v473
    %v475 = vcombine.low %v419, %v435
    %v476 = vcombine.high %v419, %v435
    %v478 = vunpack.c.l.s4 1934713408
    %v479 = vunpack.c.0.s8 %v478
    %v480 = vlaneseq
    %v481 = vshrl.u32 %v480, 7
    %v482 = vsub.s32 %v479, %v481
    %v483 = vrot.slane %v475, %v482
    %v485 = vunpack.c.l.s4 1934713408
    %v486 = vunpack.c.0.s8 %v485
    %v487 = vlaneseq
    %v488 = vshrl.u32 %v487, 7
    %v489 = vsub.s32 %v486, %v488
    %v490 = vrot.slane %v476, %v489
    %v491 = vcombine.low %v426, %v442
    %v492 = vcombine.high %v426, %v442
    %v494 = vunpack.c.l.s4 1934713408
    %v495 = vunpack.c.0.s8 %v494
    %v496 = vlaneseq
    %v497 = vshrl.u32 %v496, 7
    %v498 = vsub.s32 %v495, %v497
    %v499 = vrot.slane %v491, %v498
    %v501 = vunpack.c.l.s4 1934713408
    %v502 = vunpack.c.0.s8 %v501
    %v503 = vlaneseq
    %v504 = vshrl.u32 %v503, 7
    %v505 = vsub.s32 %v502, %v504
    %v506 = vrot.slane %v492, %v505
    %v507 = vcombine.low %v451, %v483
    %v508 = vcombine.high %v451, %v483
    %v509 = vcombine.low %v458, %v490
    %v510 = vcombine.high %v458, %v490
    %v511 = vcombine.low %v467, %v499
    %v512 = vcombine.high %v467, %v499
    %v513 = vcombine.low %v474, %v506
    %v514 = vcombine.high %v474, %v506
    %v515 = vcombine.low %v154, %v166
    %v516 = vcombine.high %v154, %v166
    %v518 = vunpack.c.l.s4 1983009808
    %v519 = vunpack.c.0.s8 %v518
    %v520 = vlaneseq
    %v521 = vshrl.u32 %v520, 7
    %v522 = vsub.s32 %v519, %v521
    %v523 = vrot.slane %v515, %v522
    %v525 = vunpack.c.l.s4 1983009808
    %v526 = vunpack.c.0.s8 %v525
    %v527 = vlaneseq
    %v528 = vshrl.u32 %v527, 7
    %v529 = vsub.s32 %v526, %v528
    %v530 = vrot.slane %v516, %v529
    %v531 = vcombine.low %v160, %v172
    %v532 = vcombine.high %v160, %v172
    %v534 = vunpack.c.l.s4 1983009808
    %v535 = vunpack.c.0.s8 %v534
    %v536 = vlaneseq
    %v537 = vshrl.u32 %v536, 7
    %v538 = vsub.s32 %v535, %v537
    %v539 = vrot.slane %v531, %v538
    %v541 = vunpack.c.l.s4 1983009808
    %v542 = vunpack.c.0.s8 %v541
    %v543 = vlaneseq
    %v544 = vshrl.u32 %v543, 7
    %v545 = vsub.s32 %v542, %v544
    %v546 = vrot.slane %v532, %v545
    %v547 = vcombine.low %v523, %v539
    %v548 = vcombine.high %v523, %v539
    %v550 = vunpack.c.l.s4 1934713408
    %v551 = vunpack.c.0.s8 %v550
    %v552 = vlaneseq
    %v553 = vshrl.u32 %v552, 7
    %v554 = vsub.s32 %v551, %v553
    %v555 = vrot.slane %v547, %v554
    %v557 = vunpack.c.l.s4 1934713408
    %v558 = vunpack.c.0.s8 %v557
    %v559 = vlaneseq
    %v560 = vshrl.u32 %v559, 7
    %v561 = vsub.s32 %v558, %v560
    %v562 = vrot.slane %v548, %v561
    %v563 = vcombine.low %v530, %v546
    %v564 = vcombine.high %v530, %v546
    %v566 = vunpack.c.l.s4 1934713408
    %v567 = vunpack.c.0.s8 %v566
    %v568 = vlaneseq
    %v569 = vshrl.u32 %v568, 7
    %v570 = vsub.s32 %v567, %v569
    %v571 = vrot.slane %v563, %v570
    %v573 = vunpack.c.l.s4 1934713408
    %v574 = vunpack.c.0.s8 %v573
    %v575 = vlaneseq
    %v576 = vshrl.u32 %v575, 7
    %v577 = vsub.s32 %v574, %v576
    %v578 = vrot.slane %v564, %v577
    %v579 = vcombine.high %v555, 0.0
    %v580 = vcombine.high %v562, 0.0
    %v581 = vcombine.high %v571, 0.0
    %v582 = vcombine.high %v578, 0.0
    %v583 = vcombine.low %v303, %v305
    %v584 = vcombine.high %v303, %v305
    %v586 = vunpack.c.l.s4 1983009808
    %v587 = vunpack.c.0.s8 %v586
    %v588 = vlaneseq
    %v589 = vshrl.u32 %v588, 7
    %v590 = vsub.s32 %v587, %v589
    %v591 = vrot.slane %v583, %v590
    %v593 = vunpack.c.l.s4 1983009808
    %v594 = vunpack.c.0.s8 %v593
    %v595 = vlaneseq
    %v596 = vshrl.u32 %v595, 7
    %v597 = vsub.s32 %v594, %v596
    %v598 = vrot.slane %v584, %v597
    %v599 = vcombine.low %v304, %v306
    %v600 = vcombine.high %v304, %v306
    %v602 = vunpack.c.l.s4 1983009808
    %v603 = vunpack.c.0.s8 %v602
    %v604 = vlaneseq
    %v605 = vshrl.u32 %v604, 7
    %v606 = vsub.s32 %v603, %v605
    %v607 = vrot.slane %v599, %v606
    %v609 = vunpack.c.l.s4 1983009808
    %v610 = vunpack.c.0.s8 %v609
    %v611 = vlaneseq
    %v612 = vshrl.u32 %v611, 7
    %v613 = vsub.s32 %v610, %v612
    %v614 = vrot.slane %v600, %v613
    %v615 = vcombine.low %v307, %v309
    %v616 = vcombine.high %v307, %v309
    %v618 = vunpack.c.l.s4 1983009808
    %v619 = vunpack.c.0.s8 %v618
    %v620 = vlaneseq
    %v621 = vshrl.u32 %v620, 7
    %v622 = vsub.s32 %v619, %v621
    %v623 = vrot.slane %v615, %v622
    %v625 = vunpack.c.l.s4 1983009808
    %v626 = vunpack.c.0.s8 %v625
    %v627 = vlaneseq
    %v628 = vshrl.u32 %v627, 7
    %v629 = vsub.s32 %v626, %v628
    %v630 = vrot.slane %v616, %v629
    %v631 = vcombine.low %v308, %v310
    %v632 = vcombine.high %v308, %v310
    %v634 = vunpack.c.l.s4 1983009808
    %v635 = vunpack.c.0.s8 %v634
    %v636 = vlaneseq
    %v637 = vshrl.u32 %v636, 7
    %v638 = vsub.s32 %v635, %v637
    %v639 = vrot.slane %v631, %v638
    %v641 = vunpack.c.l.s4 1983009808
    %v642 = vunpack.c.0.s8 %v641
    %v643 = vlaneseq
    %v644 = vshrl.u32 %v643, 7
    %v645 = vsub.s32 %v642, %v644
    %v646 = vrot.slane %v632, %v645
    %v647 = vcombine.low %v591, %v607
    %v648 = vcombine.high %v591, %v607
    %v650 = vunpack.c.l.s4 1934713408
    %v651 = vunpack.c.0.s8 %v650
    %v652 = vlaneseq
    %v653 = vshrl.u32 %v652, 7
    %v654 = vsub.s32 %v651, %v653
    %v655 = vrot.slane %v647, %v654
    %v657 = vunpack.c.l.s4 1934713408
    %v658 = vunpack.c.0.s8 %v657
    %v659 = vlaneseq
    %v660 = vshrl.u32 %v659, 7
    %v661 = vsub.s32 %v658, %v660
    %v662 = vrot.slane %v648, %v661
    %v663 = vcombine.low %v598, %v614
    %v664 = vcombine.high %v598, %v614
    %v666 = vunpack.c.l.s4 1934713408
    %v667 = vunpack.c.0.s8 %v666
    %v668 = vlaneseq
    %v669 = vshrl.u32 %v668, 7
    %v670 = vsub.s32 %v667, %v669
    %v671 = vrot.slane %v663, %v670
    %v673 = vunpack.c.l.s4 1934713408
    %v674 = vunpack.c.0.s8 %v673
    %v675 = vlaneseq
    %v676 = vshrl.u32 %v675, 7
    %v677 = vsub.s32 %v674, %v676
    %v678 = vrot.slane %v664, %v677
    %v679 = vcombine.low %v623, %v639
    %v680 = vcombine.high %v623, %v639
    %v682 = vunpack.c.l.s4 1934713408
    %v683 = vunpack.c.0.s8 %v682
    %v684 = vlaneseq
    %v685 = vshrl.u32 %v684, 7
    %v686 = vsub.s32 %v683, %v685
    %v687 = vrot.slane %v679, %v686
    %v689 = vunpack.c.l.s4 1934713408
    %v690 = vunpack.c.0.s8 %v689
    %v691 = vlaneseq
    %v692 = vshrl.u32 %v691, 7
    %v693 = vsub.s32 %v690, %v692
    %v694 = vrot.slane %v680, %v693
    %v695 = vcombine.low %v630, %v646
    %v696 = vcombine.high %v630, %v646
    %v698 = vunpack.c.l.s4 1934713408
    %v699 = vunpack.c.0.s8 %v698
    %v700 = vlaneseq
    %v701 = vshrl.u32 %v700, 7
    %v702 = vsub.s32 %v699, %v701
    %v703 = vrot.slane %v695, %v702
    %v705 = vunpack.c.l.s4 1934713408
    %v706 = vunpack.c.0.s8 %v705
    %v707 = vlaneseq
    %v708 = vshrl.u32 %v707, 7
    %v709 = vsub.s32 %v706, %v708
    %v710 = vrot.slane %v696, %v709
    %v711 = vcombine.low %v655, %v687
    %v712 = vcombine.high %v655, %v687
    %v713 = vcombine.low %v662, %v694
    %v714 = vcombine.high %v662, %v694
    %v715 = vcombine.low %v671, %v703
    %v716 = vcombine.high %v671, %v703
    %v717 = vcombine.low %v678, %v710
    %v718 = vcombine.high %v678, %v710
    %v719 = vcombine.low %v507, %v509
    %v720 = vcombine.high %v507, %v509
    %v722 = vunpack.c.l.s4 1983009808
    %v723 = vunpack.c.0.s8 %v722
    %v724 = vlaneseq
    %v725 = vshrl.u32 %v724, 7
    %v726 = vsub.s32 %v723, %v725
    %v727 = vrot.slane %v719, %v726
    %v729 = vunpack.c.l.s4 1983009808
    %v730 = vunpack.c.0.s8 %v729
    %v731 = vlaneseq
    %v732 = vshrl.u32 %v731, 7
    %v733 = vsub.s32 %v730, %v732
    %v734 = vrot.slane %v720, %v733
    %v735 = vcombine.low %v508, %v510
    %v736 = vcombine.high %v508, %v510
    %v738 = vunpack.c.l.s4 1983009808
    %v739 = vunpack.c.0.s8 %v738
    %v740 = vlaneseq
    %v741 = vshrl.u32 %v740, 7
    %v742 = vsub.s32 %v739, %v741
    %v743 = vrot.slane %v735, %v742
    %v745 = vunpack.c.l.s4 1983009808
    %v746 = vunpack.c.0.s8 %v745
    %v747 = vlaneseq
    %v748 = vshrl.u32 %v747, 7
    %v749 = vsub.s32 %v746, %v748
    %v750 = vrot.slane %v736, %v749
    %v751 = vcombine.low %v511, %v513
    %v752 = vcombine.high %v511, %v513
    %v754 = vunpack.c.l.s4 1983009808
    %v755 = vunpack.c.0.s8 %v754
    %v756 = vlaneseq
    %v757 = vshrl.u32 %v756, 7
    %v758 = vsub.s32 %v755, %v757
    %v759 = vrot.slane %v751, %v758
    %v761 = vunpack.c.l.s4 1983009808
    %v762 = vunpack.c.0.s8 %v761
    %v763 = vlaneseq
    %v764 = vshrl.u32 %v763, 7
    %v765 = vsub.s32 %v762, %v764
    %v766 = vrot.slane %v752, %v765
    %v767 = vcombine.low %v512, %v514
    %v768 = vcombine.high %v512, %v514
    %v770 = vunpack.c.l.s4 1983009808
    %v771 = vunpack.c.0.s8 %v770
    %v772 = vlaneseq
    %v773 = vshrl.u32 %v772, 7
    %v774 = vsub.s32 %v771, %v773
    %v775 = vrot.slane %v767, %v774
    %v777 = vunpack.c.l.s4 1983009808
    %v778 = vunpack.c.0.s8 %v777
    %v779 = vlaneseq
    %v780 = vshrl.u32 %v779, 7
    %v781 = vsub.s32 %v778, %v780
    %v782 = vrot.slane %v768, %v781
    %v783 = vcombine.low %v727, %v743
    %v784 = vcombine.high %v727, %v743
    %v786 = vunpack.c.l.s4 1934713408
    %v787 = vunpack.c.0.s8 %v786
    %v788 = vlaneseq
    %v789 = vshrl.u32 %v788, 7
    %v790 = vsub.s32 %v787, %v789
    %v791 = vrot.slane %v783, %v790
    %v793 = vunpack.c.l.s4 1934713408
    %v794 = vunpack.c.0.s8 %v793
    %v795 = vlaneseq
    %v796 = vshrl.u32 %v795, 7
    %v797 = vsub.s32 %v794, %v796
    %v798 = vrot.slane %v784, %v797
    %v799 = vcombine.low %v734, %v750
    %v800 = vcombine.high %v734, %v750
    %v802 = vunpack.c.l.s4 1934713408
    %v803 = vunpack.c.0.s8 %v802
    %v804 = vlaneseq
    %v805 = vshrl.u32 %v804, 7
    %v806 = vsub.s32 %v803, %v805
    %v807 = vrot.slane %v799, %v806
    %v809 = vunpack.c.l.s4 1934713408
    %v810 = vunpack.c.0.s8 %v809
    %v811 = vlaneseq
    %v812 = vshrl.u32 %v811, 7
    %v813 = vsub.s32 %v810, %v812
    %v814 = vrot.slane %v800, %v813
    %v815 = vcombine.low %v759, %v775
    %v816 = vcombine.high %v759, %v775
    %v818 = vunpack.c.l.s4 1934713408
    %v819 = vunpack.c.0.s8 %v818
    %v820 = vlaneseq
    %v821 = vshrl.u32 %v820, 7
    %v822 = vsub.s32 %v819, %v821
    %v823 = vrot.slane %v815, %v822
    %v825 = vunpack.c.l.s4 1934713408
    %v826 = vunpack.c.0.s8 %v825
    %v827 = vlaneseq
    %v828 = vshrl.u32 %v827, 7
    %v829 = vsub.s32 %v826, %v828
    %v830 = vrot.slane %v816, %v829
    %v831 = vcombine.low %v766, %v782
    %v832 = vcombine.high %v766, %v782
    %v834 = vunpack.c.l.s4 1934713408
    %v835 = vunpack.c.0.s8 %v834
    %v836 = vlaneseq
    %v837 = vshrl.u32 %v836, 7
    %v838 = vsub.s32 %v835, %v837
    %v839 = vrot.slane %v831, %v838
    %v841 = vunpack.c.l.s4 1934713408
    %v842 = vunpack.c.0.s8 %v841
    %v843 = vlaneseq
    %v844 = vshrl.u32 %v843, 7
    %v845 = vsub.s32 %v842, %v844
    %v846 = vrot.slane %v832, %v845
    %v847 = vcombine.low %v791, %v823
    %v848 = vcombine.high %v791, %v823
    %v849 = vcombine.low %v798, %v830
    %v850 = vcombine.high %v798, %v830
    %v851 = vcombine.low %v807, %v839
    %v852 = vcombine.high %v807, %v839
    %v853 = vcombine.low %v814, %v846
    %v854 = vcombine.high %v814, %v846
    %v855 = vcombine.low %v351, %v358
    %v857 = vunpack.c.l.s4 1983009808
    %v858 = vunpack.c.0.s8 %v857
    %v859 = vlaneseq
    %v860 = vshrl.u32 %v859, 7
    %v861 = vsub.s32 %v858, %v860
    %v862 = vrot.slane %v855, %v861
    %v863 = vcombine.low %v375, %v376
    %v865 = vunpack.c.l.s4 1983009808
    %v866 = vunpack.c.0.s8 %v865
    %v867 = vlaneseq
    %v868 = vshrl.u32 %v867, 7
    %v869 = vsub.s32 %v866, %v868
    %v870 = vrot.slane %v863, %v869
    %v871 = vcombine.low %v367, %v374
    %v873 = vunpack.c.l.s4 1983009808
    %v874 = vunpack.c.0.s8 %v873
    %v875 = vlaneseq
    %v876 = vshrl.u32 %v875, 7
    %v877 = vsub.s32 %v874, %v876
    %v878 = vrot.slane %v871, %v877
    %v879 = vcombine.low %v377, %v378
    %v881 = vunpack.c.l.s4 1983009808
    %v882 = vunpack.c.0.s8 %v881
    %v883 = vlaneseq
    %v884 = vshrl.u32 %v883, 7
    %v885 = vsub.s32 %v882, %v884
    %v886 = vrot.slane %v879, %v885
    %v887 = vcombine.low %v862, %v870
    %v888 = vcombine.high %v862, %v870
    %v890 = vunpack.c.l.s4 1934713408
    %v891 = vunpack.c.0.s8 %v890
    %v892 = vlaneseq
    %v893 = vshrl.u32 %v892, 7
    %v894 = vsub.s32 %v891, %v893
    %v895 = vrot.slane %v887, %v894
    %v897 = vunpack.c.l.s4 1934713408
    %v898 = vunpack.c.0.s8 %v897
    %v899 = vlaneseq
    %v900 = vshrl.u32 %v899, 7
    %v901 = vsub.s32 %v898, %v900
    %v902 = vrot.slane %v888, %v901
    %v903 = vcombine.low %v878, %v886
    %v904 = vcombine.high %v878, %v886
    %v906 = vunpack.c.l.s4 1934713408
    %v907 = vunpack.c.0.s8 %v906
    %v908 = vlaneseq
    %v909 = vshrl.u32 %v908, 7
    %v910 = vsub.s32 %v907, %v909
    %v911 = vrot.slane %v903, %v910
    %v913 = vunpack.c.l.s4 1934713408
    %v914 = vunpack.c.0.s8 %v913
    %v915 = vlaneseq
    %v916 = vshrl.u32 %v915, 7
    %v917 = vsub.s32 %v914, %v916
    %v918 = vrot.slane %v904, %v917
    %v919 = vcombine.low %v895, %v911
    %v920 = vcombine.high %v895, %v911
    %v921 = vcombine.low %v902, %v918
    %v922 = vcombine.high %v902, %v918
    %v923 = vcombine.low %v555, %v562
    %v925 = vunpack.c.l.s4 1983009808
    %v926 = vunpack.c.0.s8 %v925
    %v927 = vlaneseq
    %v928 = vshrl.u32 %v927, 7
    %v929 = vsub.s32 %v926, %v928
    %v930 = vrot.slane %v923, %v929
    %v931 = vcombine.low %v579, %v580
    %v933 = vunpack.c.l.s4 1983009808
    %v934 = vunpack.c.0.s8 %v933
    %v935 = vlaneseq
    %v936 = vshrl.u32 %v935, 7
    %v937 = vsub.s32 %v934, %v936
    %v938 = vrot.slane %v931, %v937
    %v939 = vcombine.low %v571, %v578
    %v941 = vunpack.c.l.s4 1983009808
    %v942 = vunpack.c.0.s8 %v941
    %v943 = vlaneseq
    %v944 = vshrl.u32 %v943, 7
    %v945 = vsub.s32 %v942, %v944
    %v946 = vrot.slane %v939, %v945
    %v947 = vcombine.low %v581, %v582
    %v949 = vunpack.c.l.s4 1983009808
    %v950 = vunpack.c.0.s8 %v949
    %v951 = vlaneseq
    %v952 = vshrl.u32 %v951, 7
    %v953 = vsub.s32 %v950, %v952
    %v954 = vrot.slane %v947, %v953
    %v955 = vcombine.low %v930, %v938
    %v956 = vcombine.high %v930, %v938
    %v958 = vunpack.c.l.s4 1934713408
    %v959 = vunpack.c.0.s8 %v958
    %v960 = vlaneseq
    %v961 = vshrl.u32 %v960, 7
    %v962 = vsub.s32 %v959, %v961
    %v963 = vrot.slane %v955, %v962
    %v965 = vunpack.c.l.s4 1934713408
    %v966 = vunpack.c.0.s8 %v965
    %v967 = vlaneseq
    %v968 = vshrl.u32 %v967, 7
    %v969 = vsub.s32 %v966, %v968
    %v970 = vrot.slane %v956, %v969
    %v971 = vcombine.low %v946, %v954
    %v972 = vcombine.high %v946, %v954
    %v974 = vunpack.c.l.s4 1934713408
    %v975 = vunpack.c.0.s8 %v974
    %v976 = vlaneseq
    %v977 = vshrl.u32 %v976, 7
    %v978 = vsub.s32 %v975, %v977
    %v979 = vrot.slane %v971, %v978
    %v981 = vunpack.c.l.s4 1934713408
    %v982 = vunpack.c.0.s8 %v981
    %v983 = vlaneseq
    %v984 = vshrl.u32 %v983, 7
    %v985 = vsub.s32 %v982, %v984
    %v986 = vrot.slane %v972, %v985
    %v987 = vcombine.low %v963, %v979
    %v988 = vcombine.high %v963, %v979
    %v989 = vcombine.low %v970, %v986
    %v990 = vcombine.high %v970, %v986
    %v991 = vpack.c.bf16 %v711, %v711
    %v992 = vpack.c.bf16 %v847, %v847
    %v993 = vpack.c.bf16 %v712, %v712
    %v994 = vpack.c.bf16 %v848, %v848
    %v995 = vpack.c.bf16 %v713, %v713
    %v996 = vpack.c.bf16 %v849, %v849
    %v997 = vpack.c.bf16 %v714, %v714
    %v998 = vpack.c.bf16 %v850, %v850
    %v999 = vpack.c.bf16 %v715, %v715
    %v1000 = vpack.c.bf16 %v851, %v851
    %v1001 = vpack.c.bf16 %v716, %v716
    %v1002 = vpack.c.bf16 %v852, %v852
    %v1003 = vpack.c.bf16 %v717, %v717
    %v1004 = vpack.c.bf16 %v853, %v853
    %v1005 = vpack.c.bf16 %v718, %v718
    %v1006 = vpack.c.bf16 %v854, %v854
    %v1007 = vpack.c.bf16 %v919, %v919
    %v1008 = vpack.c.bf16 %v987, %v987
    %v1009 = vpack.c.bf16 %v920, %v920
    %v1010 = vpack.c.bf16 %v988, %v988
    %v1011 = vpack.c.bf16 %v921, %v921
    %v1012 = vpack.c.bf16 %v989, %v989
    %v1013 = vpack.c.bf16 %v922, %v922
    %v1014 = vpack.c.bf16 %v990, %v990
    %vm1015 = vcmask 64512
    %v1017 = vsel %vm1015, %v991, 0
    %v1020 = vsel %vm1015, %v999, 0
    %1022 = vmatprep.subr.bf16.mxu0 0
    %1023 = vmatpush1.bf16.xpose.msra.mxu0 %v1020
    %1024 = vmatprep.subr.bf16.mxu0 0
    %1025 = vmatpush1.bf16.xpose.msra.mxu0 0
    %1026 = vmatprep.subr.bf16.mxu0 0
    %1027 = vmatpush1.bf16.xpose.msra.mxu0 0
    %1028 = vmatprep.subr.bf16.mxu0 0
    %1029 = vmatpush1.bf16.xpose.msra.mxu0 0
    %1030 = vmatprep.subr.bf16.mxu0 0
    %1031 = vmatpush1.bf16.xpose.msra.mxu0 0
    %1032 = vmatprep.subr.bf16.mxu0 0
    %1033 = vmatpush1.bf16.xpose.msra.mxu0 0
    %1034 = vmatprep.subr.bf16.mxu0 0
    %1035 = vmatpush1.bf16.xpose.msra.mxu0 0
    %1036 = vmatprep.subr.bf16.mxu0 0
    %1037 = vmatpush1.bf16.xpose.msra.mxu0 0
    %1038 = vmatprep.subr.bf16.mxu0 0
    %1039 = vmatpush1.bf16.xpose.msra.mxu0 0
    %1040 = vmatprep.subr.bf16.mxu0 0
    %1041 = vmatpush1.bf16.xpose.msra.mxu0 0
    %1042 = vmatprep.subr.bf16.mxu0 0
    %1043 = vmatpush1.bf16.xpose.msra.mxu0 0
    %1044 = vmatprep.subr.bf16.mxu0 0
    %1045 = vmatpush1.bf16.xpose.msra.mxu0 0
    %1046 = vmatprep.subr.bf16.mxu0 0
    %1047 = vmatpush1.bf16.xpose.msra.mxu0 0
    %1048 = vmatprep.subr.bf16.mxu0 0
    %1049 = vmatpush1.bf16.xpose.msra.mxu0 0
    %1050 = vmatprep.subr.bf16.mxu0 0
    %1051 = vmatpush1.bf16.xpose.msra.mxu0 0
    %1052 = vmatprep.subr.bf16.mxu0 0
    %1053 = vmatpush1.bf16.xpose.msra.mxu0 0
    %1054 = vmatprep.mubr.bf16.mxu0 0
    %1055 = vmatmul.mubr.bf16.gmra.mrb[0].mxu0 %v1017
    %v1056 = vpop.f32.mrb[0].mxu0
    %v1057 = vadd.f32 0.0, %v1056
    %v1058 = vpop.f32.mrb[0].mxu0
    %v1059 = vpop.f32.mrb[0].mxu0
    %v1060 = vpop.f32.mrb[0].mxu0
    %1061 = vdwg.mxu0
    %v1063 = vsel %vm1015, %v992, 0
    %v1066 = vsel %vm1015, %v1000, 0
    %1068 = vmatprep.subr.bf16.mxu0 0
    %1069 = vmatpush1.bf16.xpose.msra.mxu0 %v1066
    %1070 = vmatprep.subr.bf16.mxu0 0
    %1071 = vmatpush1.bf16.xpose.msra.mxu0 0
    %1072 = vmatprep.subr.bf16.mxu0 0
    %1073 = vmatpush1.bf16.xpose.msra.mxu0 0
    %1074 = vmatprep.subr.bf16.mxu0 0
    %1075 = vmatpush1.bf16.xpose.msra.mxu0 0
    %1076 = vmatprep.subr.bf16.mxu0 0
    %1077 = vmatpush1.bf16.xpose.msra.mxu0 0
    %1078 = vmatprep.subr.bf16.mxu0 0
    %1079 = vmatpush1.bf16.xpose.msra.mxu0 0
    %1080 = vmatprep.subr.bf16.mxu0 0
    %1081 = vmatpush1.bf16.xpose.msra.mxu0 0
    %1082 = vmatprep.subr.bf16.mxu0 0
    %1083 = vmatpush1.bf16.xpose.msra.mxu0 0
    %1084 = vmatprep.subr.bf16.mxu0 0
    %1085 = vmatpush1.bf16.xpose.msra.mxu0 0
    %1086 = vmatprep.subr.bf16.mxu0 0
    %1087 = vmatpush1.bf16.xpose.msra.mxu0 0
    %1088 = vmatprep.subr.bf16.mxu0 0
    %1089 = vmatpush1.bf16.xpose.msra.mxu0 0
    %1090 = vmatprep.subr.bf16.mxu0 0
    %1091 = vmatpush1.bf16.xpose.msra.mxu0 0
    %1092 = vmatprep.subr.bf16.mxu0 0
    %1093 = vmatpush1.bf16.xpose.msra.mxu0 0
    %1094 = vmatprep.subr.bf16.mxu0 0
    %1095 = vmatpush1.bf16.xpose.msra.mxu0 0
    %1096 = vmatprep.subr.bf16.mxu0 0
    %1097 = vmatpush1.bf16.xpose.msra.mxu0 0
    %1098 = vmatprep.subr.bf16.mxu0 0
    %1099 = vmatpush1.bf16.xpose.msra.mxu0 0
    %1100 = vmatprep.mubr.bf16.mxu0 0
    %1101 = vmatmul.mubr.bf16.gmra.mrb[0].mxu0 %v1063
    %v1102 = vpop.f32.mrb[0].mxu0
    %v1103 = vadd.f32 0.0, %v1102
    %v1104 = vpop.f32.mrb[0].mxu0
    %v1105 = vpop.f32.mrb[0].mxu0
    %v1106 = vpop.f32.mrb[0].mxu0
    %1107 = vdwg.mxu0
    %v1109 = vsel %vm1015, %v993, 0
    %v1112 = vsel %vm1015, %v1001, 0
    %1114 = vmatprep.subr.bf16.mxu0 0
    %1115 = vmatpush1.bf16.xpose.msra.mxu0 %v1112
    %1116 = vmatprep.subr.bf16.mxu0 0
    %1117 = vmatpush1.bf16.xpose.msra.mxu0 0
    %1118 = vmatprep.subr.bf16.mxu0 0
    %1119 = vmatpush1.bf16.xpose.msra.mxu0 0
    %1120 = vmatprep.subr.bf16.mxu0 0
    %1121 = vmatpush1.bf16.xpose.msra.mxu0 0
    %1122 = vmatprep.subr.bf16.mxu0 0
    %1123 = vmatpush1.bf16.xpose.msra.mxu0 0
    %1124 = vmatprep.subr.bf16.mxu0 0
    %1125 = vmatpush1.bf16.xpose.msra.mxu0 0
    %1126 = vmatprep.subr.bf16.mxu0 0
    %1127 = vmatpush1.bf16.xpose.msra.mxu0 0
    %1128 = vmatprep.subr.bf16.mxu0 0
    %1129 = vmatpush1.bf16.xpose.msra.mxu0 0
    %1130 = vmatprep.subr.bf16.mxu0 0
    %1131 = vmatpush1.bf16.xpose.msra.mxu0 0
    %1132 = vmatprep.subr.bf16.mxu0 0
    %1133 = vmatpush1.bf16.xpose.msra.mxu0 0
    %1134 = vmatprep.subr.bf16.mxu0 0
    %1135 = vmatpush1.bf16.xpose.msra.mxu0 0
    %1136 = vmatprep.subr.bf16.mxu0 0
    %1137 = vmatpush1.bf16.xpose.msra.mxu0 0
    %1138 = vmatprep.subr.bf16.mxu0 0
    %1139 = vmatpush1.bf16.xpose.msra.mxu0 0
    %1140 = vmatprep.subr.bf16.mxu0 0
    %1141 = vmatpush1.bf16.xpose.msra.mxu0 0
    %1142 = vmatprep.subr.bf16.mxu0 0
    %1143 = vmatpush1.bf16.xpose.msra.mxu0 0
    %1144 = vmatprep.subr.bf16.mxu0 0
    %1145 = vmatpush1.bf16.xpose.msra.mxu0 0
    %1146 = vmatprep.mubr.bf16.mxu0 0
    %1147 = vmatmul.mubr.bf16.gmra.mrb[0].mxu0 %v1109
    %v1148 = vpop.f32.mrb[0].mxu0
    %v1149 = vadd.f32 0.0, %v1148
    %v1150 = vpop.f32.mrb[0].mxu0
    %v1151 = vpop.f32.mrb[0].mxu0
    %v1152 = vpop.f32.mrb[0].mxu0
    %1153 = vdwg.mxu0
    %v1155 = vsel %vm1015, %v994, 0
    %v1158 = vsel %vm1015, %v1002, 0
    %1160 = vmatprep.subr.bf16.mxu0 0
    %1161 = vmatpush1.bf16.xpose.msra.mxu0 %v1158
    %1162 = vmatprep.subr.bf16.mxu0 0
    %1163 = vmatpush1.bf16.xpose.msra.mxu0 0
    %1164 = vmatprep.subr.bf16.mxu0 0
    %1165 = vmatpush1.bf16.xpose.msra.mxu0 0
    %1166 = vmatprep.subr.bf16.mxu0 0
    %1167 = vmatpush1.bf16.xpose.msra.mxu0 0
    %1168 = vmatprep.subr.bf16.mxu0 0
    %1169 = vmatpush1.bf16.xpose.msra.mxu0 0
    %1170 = vmatprep.subr.bf16.mxu0 0
    %1171 = vmatpush1.bf16.xpose.msra.mxu0 0
    %1172 = vmatprep.subr.bf16.mxu0 0
    %1173 = vmatpush1.bf16.xpose.msra.mxu0 0
    %1174 = vmatprep.subr.bf16.mxu0 0
    %1175 = vmatpush1.bf16.xpose.msra.mxu0 0
    %1176 = vmatprep.subr.bf16.mxu0 0
    %1177 = vmatpush1.bf16.xpose.msra.mxu0 0
    %1178 = vmatprep.subr.bf16.mxu0 0
    %1179 = vmatpush1.bf16.xpose.msra.mxu0 0
    %1180 = vmatprep.subr.bf16.mxu0 0
    %1181 = vmatpush1.bf16.xpose.msra.mxu0 0
    %1182 = vmatprep.subr.bf16.mxu0 0
    %1183 = vmatpush1.bf16.xpose.msra.mxu0 0
    %1184 = vmatprep.subr.bf16.mxu0 0
    %1185 = vmatpush1.bf16.xpose.msra.mxu0 0
    %1186 = vmatprep.subr.bf16.mxu0 0
    %1187 = vmatpush1.bf16.xpose.msra.mxu0 0
    %1188 = vmatprep.subr.bf16.mxu0 0
    %1189 = vmatpush1.bf16.xpose.msra.mxu0 0
    %1190 = vmatprep.subr.bf16.mxu0 0
    %1191 = vmatpush1.bf16.xpose.msra.mxu0 0
    %1192 = vmatprep.mubr.bf16.mxu0 0
    %1193 = vmatmul.mubr.bf16.gmra.mrb[0].mxu0 %v1155
    %v1194 = vpop.f32.mrb[0].mxu0
    %v1195 = vadd.f32 0.0, %v1194
    %v1196 = vpop.f32.mrb[0].mxu0
    %v1197 = vpop.f32.mrb[0].mxu0
    %v1198 = vpop.f32.mrb[0].mxu0
    %1199 = vdwg.mxu0
    %v1201 = vsel %vm1015, %v995, 0
    %v1204 = vsel %vm1015, %v1003, 0
    %1206 = vmatprep.subr.bf16.mxu0 0
    %1207 = vmatpush1.bf16.xpose.msra.mxu0 %v1204
    %1208 = vmatprep.subr.bf16.mxu0 0
    %1209 = vmatpush1.bf16.xpose.msra.mxu0 0
    %1210 = vmatprep.subr.bf16.mxu0 0
    %1211 = vmatpush1.bf16.xpose.msra.mxu0 0
    %1212 = vmatprep.subr.bf16.mxu0 0
    %1213 = vmatpush1.bf16.xpose.msra.mxu0 0
    %1214 = vmatprep.subr.bf16.mxu0 0
    %1215 = vmatpush1.bf16.xpose.msra.mxu0 0
    %1216 = vmatprep.subr.bf16.mxu0 0
    %1217 = vmatpush1.bf16.xpose.msra.mxu0 0
    %1218 = vmatprep.subr.bf16.mxu0 0
    %1219 = vmatpush1.bf16.xpose.msra.mxu0 0
    %1220 = vmatprep.subr.bf16.mxu0 0
    %1221 = vmatpush1.bf16.xpose.msra.mxu0 0
    %1222 = vmatprep.subr.bf16.mxu0 0
    %1223 = vmatpush1.bf16.xpose.msra.mxu0 0
    %1224 = vmatprep.subr.bf16.mxu0 0
    %1225 = vmatpush1.bf16.xpose.msra.mxu0 0
    %1226 = vmatprep.subr.bf16.mxu0 0
    %1227 = vmatpush1.bf16.xpose.msra.mxu0 0
    %1228 = vmatprep.subr.bf16.mxu0 0
    %1229 = vmatpush1.bf16.xpose.msra.mxu0 0
    %1230 = vmatprep.subr.bf16.mxu0 0
    %1231 = vmatpush1.bf16.xpose.msra.mxu0 0
    %1232 = vmatprep.subr.bf16.mxu0 0
    %1233 = vmatpush1.bf16.xpose.msra.mxu0 0
    %1234 = vmatprep.subr.bf16.mxu0 0
    %1235 = vmatpush1.bf16.xpose.msra.mxu0 0
    %1236 = vmatprep.subr.bf16.mxu0 0
    %1237 = vmatpush1.bf16.xpose.msra.mxu0 0
    %1238 = vmatprep.mubr.bf16.mxu0 0
    %1239 = vmatmul.mubr.bf16.gmra.mrb[0].mxu0 %v1201
    %v1240 = vpop.f32.mrb[0].mxu0
    %v1241 = vadd.f32 0.0, %v1240
    %v1242 = vpop.f32.mrb[0].mxu0
    %v1243 = vpop.f32.mrb[0].mxu0
    %v1244 = vpop.f32.mrb[0].mxu0
    %1245 = vdwg.mxu0
    %v1247 = vsel %vm1015, %v996, 0
    %v1250 = vsel %vm1015, %v1004, 0
    %1252 = vmatprep.subr.bf16.mxu0 0
    %1253 = vmatpush1.bf16.xpose.msra.mxu0 %v1250
    %1254 = vmatprep.subr.bf16.mxu0 0
    %1255 = vmatpush1.bf16.xpose.msra.mxu0 0
    %1256 = vmatprep.subr.bf16.mxu0 0
    %1257 = vmatpush1.bf16.xpose.msra.mxu0 0
    %1258 = vmatprep.subr.bf16.mxu0 0
    %1259 = vmatpush1.bf16.xpose.msra.mxu0 0
    %1260 = vmatprep.subr.bf16.mxu0 0
    %1261 = vmatpush1.bf16.xpose.msra.mxu0 0
    %1262 = vmatprep.subr.bf16.mxu0 0
    %1263 = vmatpush1.bf16.xpose.msra.mxu0 0
    %1264 = vmatprep.subr.bf16.mxu0 0
    %1265 = vmatpush1.bf16.xpose.msra.mxu0 0
    %1266 = vmatprep.subr.bf16.mxu0 0
    %1267 = vmatpush1.bf16.xpose.msra.mxu0 0
    %1268 = vmatprep.subr.bf16.mxu0 0
    %1269 = vmatpush1.bf16.xpose.msra.mxu0 0
    %1270 = vmatprep.subr.bf16.mxu0 0
    %1271 = vmatpush1.bf16.xpose.msra.mxu0 0
    %1272 = vmatprep.subr.bf16.mxu0 0
    %1273 = vmatpush1.bf16.xpose.msra.mxu0 0
    %1274 = vmatprep.subr.bf16.mxu0 0
    %1275 = vmatpush1.bf16.xpose.msra.mxu0 0
    %1276 = vmatprep.subr.bf16.mxu0 0
    %1277 = vmatpush1.bf16.xpose.msra.mxu0 0
    %1278 = vmatprep.subr.bf16.mxu0 0
    %1279 = vmatpush1.bf16.xpose.msra.mxu0 0
    %1280 = vmatprep.subr.bf16.mxu0 0
    %1281 = vmatpush1.bf16.xpose.msra.mxu0 0
    %1282 = vmatprep.subr.bf16.mxu0 0
    %1283 = vmatpush1.bf16.xpose.msra.mxu0 0
    %1284 = vmatprep.mubr.bf16.mxu0 0
    %1285 = vmatmul.mubr.bf16.gmra.mrb[0].mxu0 %v1247
    %v1286 = vpop.f32.mrb[0].mxu0
    %v1287 = vadd.f32 0.0, %v1286
    %v1288 = vpop.f32.mrb[0].mxu0
    %v1289 = vpop.f32.mrb[0].mxu0
    %v1290 = vpop.f32.mrb[0].mxu0
    %1291 = vdwg.mxu0
    %v1293 = vsel %vm1015, %v997, 0
    %v1296 = vsel %vm1015, %v1005, 0
    %1298 = vmatprep.subr.bf16.mxu0 0
    %1299 = vmatpush1.bf16.xpose.msra.mxu0 %v1296
    %1300 = vmatprep.subr.bf16.mxu0 0
    %1301 = vmatpush1.bf16.xpose.msra.mxu0 0
    %1302 = vmatprep.subr.bf16.mxu0 0
    %1303 = vmatpush1.bf16.xpose.msra.mxu0 0
    %1304 = vmatprep.subr.bf16.mxu0 0
    %1305 = vmatpush1.bf16.xpose.msra.mxu0 0
    %1306 = vmatprep.subr.bf16.mxu0 0
    %1307 = vmatpush1.bf16.xpose.msra.mxu0 0
    %1308 = vmatprep.subr.bf16.mxu0 0
    %1309 = vmatpush1.bf16.xpose.msra.mxu0 0
    %1310 = vmatprep.subr.bf16.mxu0 0
    %1311 = vmatpush1.bf16.xpose.msra.mxu0 0
    %1312 = vmatprep.subr.bf16.mxu0 0
    %1313 = vmatpush1.bf16.xpose.msra.mxu0 0
    %1314 = vmatprep.subr.bf16.mxu0 0
    %1315 = vmatpush1.bf16.xpose.msra.mxu0 0
    %1316 = vmatprep.subr.bf16.mxu0 0
    %1317 = vmatpush1.bf16.xpose.msra.mxu0 0
    %1318 = vmatprep.subr.bf16.mxu0 0
    %1319 = vmatpush1.bf16.xpose.msra.mxu0 0
    %1320 = vmatprep.subr.bf16.mxu0 0
    %1321 = vmatpush1.bf16.xpose.msra.mxu0 0
    %1322 = vmatprep.subr.bf16.mxu0 0
    %1323 = vmatpush1.bf16.xpose.msra.mxu0 0
    %1324 = vmatprep.subr.bf16.mxu0 0
    %1325 = vmatpush1.bf16.xpose.msra.mxu0 0
    %1326 = vmatprep.subr.bf16.mxu0 0
    %1327 = vmatpush1.bf16.xpose.msra.mxu0 0
    %1328 = vmatprep.subr.bf16.mxu0 0
    %1329 = vmatpush1.bf16.xpose.msra.mxu0 0
    %1330 = vmatprep.mubr.bf16.mxu0 0
    %1331 = vmatmul.mubr.bf16.gmra.mrb[0].mxu0 %v1293
    %v1332 = vpop.f32.mrb[0].mxu0
    %v1333 = vadd.f32 0.0, %v1332
    %v1334 = vpop.f32.mrb[0].mxu0
    %v1335 = vpop.f32.mrb[0].mxu0
    %v1336 = vpop.f32.mrb[0].mxu0
    %1337 = vdwg.mxu0
    %v1339 = vsel %vm1015, %v998, 0
    %v1342 = vsel %vm1015, %v1006, 0
    %1344 = vmatprep.subr.bf16.mxu0 0
    %1345 = vmatpush1.bf16.xpose.msra.mxu0 %v1342
    %1346 = vmatprep.subr.bf16.mxu0 0
    %1347 = vmatpush1.bf16.xpose.msra.mxu0 0
    %1348 = vmatprep.subr.bf16.mxu0 0
    %1349 = vmatpush1.bf16.xpose.msra.mxu0 0
    %1350 = vmatprep.subr.bf16.mxu0 0
    %1351 = vmatpush1.bf16.xpose.msra.mxu0 0
    %1352 = vmatprep.subr.bf16.mxu0 0
    %1353 = vmatpush1.bf16.xpose.msra.mxu0 0
    %1354 = vmatprep.subr.bf16.mxu0 0
    %1355 = vmatpush1.bf16.xpose.msra.mxu0 0
    %1356 = vmatprep.subr.bf16.mxu0 0
    %1357 = vmatpush1.bf16.xpose.msra.mxu0 0
    %1358 = vmatprep.subr.bf16.mxu0 0
    %1359 = vmatpush1.bf16.xpose.msra.mxu0 0
    %1360 = vmatprep.subr.bf16.mxu0 0
    %1361 = vmatpush1.bf16.xpose.msra.mxu0 0
    %1362 = vmatprep.subr.bf16.mxu0 0
    %1363 = vmatpush1.bf16.xpose.msra.mxu0 0
    %1364 = vmatprep.subr.bf16.mxu0 0
    %1365 = vmatpush1.bf16.xpose.msra.mxu0 0
    %1366 = vmatprep.subr.bf16.mxu0 0
    %1367 = vmatpush1.bf16.xpose.msra.mxu0 0
    %1368 = vmatprep.subr.bf16.mxu0 0
    %1369 = vmatpush1.bf16.xpose.msra.mxu0 0
    %1370 = vmatprep.subr.bf16.mxu0 0
    %1371 = vmatpush1.bf16.xpose.msra.mxu0 0
    %1372 = vmatprep.subr.bf16.mxu0 0
    %1373 = vmatpush1.bf16.xpose.msra.mxu0 0
    %1374 = vmatprep.subr.bf16.mxu0 0
    %1375 = vmatpush1.bf16.xpose.msra.mxu0 0
    %1376 = vmatprep.mubr.bf16.mxu0 0
    %1377 = vmatmul.mubr.bf16.gmra.mrb[0].mxu0 %v1339
    %v1378 = vpop.f32.mrb[0].mxu0
    %v1379 = vadd.f32 0.0, %v1378
    %v1380 = vpop.f32.mrb[0].mxu0
    %v1381 = vpop.f32.mrb[0].mxu0
    %v1382 = vpop.f32.mrb[0].mxu0
    %1383 = vdwg.mxu0
    %v1384 = vsel %vm1015, %v1057, -inf
    %1385 = vmax.xlane.f32.xlu0 %v1384
    %v1386 = vpop.xlane.xlu0 %1385
    %v1387 = vsel %vm1015, %v1103, -inf
    %1388 = vmax.xlane.f32.xlu0 %v1387
    %v1389 = vpop.xlane.xlu0 %1388
    %v1390 = vsel %vm1015, %v1149, -inf
    %1391 = vmax.xlane.f32.xlu0 %v1390
    %v1392 = vpop.xlane.xlu0 %1391
    %v1393 = vsel %vm1015, %v1195, -inf
    %1394 = vmax.xlane.f32.xlu0 %v1393
    %v1395 = vpop.xlane.xlu0 %1394
    %v1396 = vsel %vm1015, %v1241, -inf
    %1397 = vmax.xlane.f32.xlu0 %v1396
    %v1398 = vpop.xlane.xlu0 %1397
    %v1399 = vsel %vm1015, %v1287, -inf
    %1400 = vmax.xlane.f32.xlu0 %v1399
    %v1401 = vpop.xlane.xlu0 %1400
    %v1402 = vsel %vm1015, %v1333, -inf
    %1403 = vmax.xlane.f32.xlu0 %v1402
    %v1404 = vpop.xlane.xlu0 %1403
    %v1405 = vsel %vm1015, %v1379, -inf
    %1406 = vmax.xlane.f32.xlu0 %v1405
    %v1407 = vpop.xlane.xlu0 %1406
    %v1408 = vsub.f32 %v1057, %v1386
    %v1409 = vsub.f32 %v1103, %v1389
    %v1410 = vsub.f32 %v1149, %v1392
    %v1411 = vsub.f32 %v1195, %v1395
    %v1412 = vsub.f32 %v1241, %v1398
    %v1413 = vsub.f32 %v1287, %v1401
    %v1414 = vsub.f32 %v1333, %v1404
    %v1415 = vsub.f32 %v1379, %v1407
    %v1416 = vmul.f32 %v1408, 1.442695
    %v1417 = vpow.pop %v1416
    %v1418 = vmul.f32 %v1409, 1.442695
    %v1419 = vpow.pop %v1418
    %v1420 = vmul.f32 %v1410, 1.442695
    %v1421 = vpow.pop %v1420
    %v1422 = vmul.f32 %v1411, 1.442695
    %v1423 = vpow.pop %v1422
    %v1424 = vmul.f32 %v1412, 1.442695
    %v1425 = vpow.pop %v1424
    %v1426 = vmul.f32 %v1413, 1.442695
    %v1427 = vpow.pop %v1426
    %v1428 = vmul.f32 %v1414, 1.442695
    %v1429 = vpow.pop %v1428
    %v1430 = vmul.f32 %v1415, 1.442695
    %v1431 = vpow.pop %v1430
    %v1432 = vsel %vm1015, %v1417, 0.0
    %1433 = vadd.xlane.f32.xlu0 %v1432
    %v1434 = vpop.xlane.xlu0 %1433
    %v1435 = vsel %vm1015, %v1419, 0.0
    %1436 = vadd.xlane.f32.xlu0 %v1435
    %v1437 = vpop.xlane.xlu0 %1436
    %v1438 = vsel %vm1015, %v1421, 0.0
    %1439 = vadd.xlane.f32.xlu0 %v1438
    %v1440 = vpop.xlane.xlu0 %1439
    %v1441 = vsel %vm1015, %v1423, 0.0
    %1442 = vadd.xlane.f32.xlu0 %v1441
    %v1443 = vpop.xlane.xlu0 %1442
    %v1444 = vsel %vm1015, %v1425, 0.0
    %1445 = vadd.xlane.f32.xlu0 %v1444
    %v1446 = vpop.xlane.xlu0 %1445
    %v1447 = vsel %vm1015, %v1427, 0.0
    %1448 = vadd.xlane.f32.xlu0 %v1447
    %v1449 = vpop.xlane.xlu0 %1448
    %v1450 = vsel %vm1015, %v1429, 0.0
    %1451 = vadd.xlane.f32.xlu0 %v1450
    %v1452 = vpop.xlane.xlu0 %1451
    %v1453 = vsel %vm1015, %v1431, 0.0
    %1454 = vadd.xlane.f32.xlu0 %v1453
    %v1455 = vpop.xlane.xlu0 %1454
    %v1456 = vpack.c.bf16 %v1417, %v1417
    %v1457 = vpack.c.bf16 %v1419, %v1419
    %v1458 = vpack.c.bf16 %v1421, %v1421
    %v1459 = vpack.c.bf16 %v1423, %v1423
    %v1460 = vpack.c.bf16 %v1425, %v1425
    %v1461 = vpack.c.bf16 %v1427, %v1427
    %v1462 = vpack.c.bf16 %v1429, %v1429
    %v1463 = vpack.c.bf16 %v1431, %v1431
    %v1465 = vsel %vm1015, %v1456, 0
    %vm1467 = vcmask 1043456
    %v1469 = vsel %vm1467, %v1007, 0
    %1471 = vmatprep.subr.bf16.mxu0 0
    %1472 = vmatpush1.bf16.msra.mxu0 %v1469
    %1473 = vmatprep.subr.bf16.mxu0 0
    %1474 = vmatpush1.bf16.msra.mxu0 0
    %1475 = vmatprep.subr.bf16.mxu0 0
    %1476 = vmatpush1.bf16.msra.mxu0 0
    %1477 = vmatprep.subr.bf16.mxu0 0
    %1478 = vmatpush1.bf16.msra.mxu0 0
    %1479 = vmatprep.subr.bf16.mxu0 0
    %1480 = vmatpush1.bf16.msra.mxu0 0
    %1481 = vmatprep.subr.bf16.mxu0 0
    %1482 = vmatpush1.bf16.msra.mxu0 0
    %1483 = vmatprep.subr.bf16.mxu0 0
    %1484 = vmatpush1.bf16.msra.mxu0 0
    %1485 = vmatprep.subr.bf16.mxu0 0
    %1486 = vmatpush1.bf16.msra.mxu0 0
    %1487 = vmatprep.subr.bf16.mxu0 0
    %1488 = vmatpush1.bf16.msra.mxu0 0
    %1489 = vmatprep.subr.bf16.mxu0 0
    %1490 = vmatpush1.bf16.msra.mxu0 0
    %1491 = vmatprep.subr.bf16.mxu0 0
    %1492 = vmatpush1.bf16.msra.mxu0 0
    %1493 = vmatprep.subr.bf16.mxu0 0
    %1494 = vmatpush1.bf16.msra.mxu0 0
    %1495 = vmatprep.subr.bf16.mxu0 0
    %1496 = vmatpush1.bf16.msra.mxu0 0
    %1497 = vmatprep.subr.bf16.mxu0 0
    %1498 = vmatpush1.bf16.msra.mxu0 0
    %1499 = vmatprep.subr.bf16.mxu0 0
    %1500 = vmatpush1.bf16.msra.mxu0 0
    %1501 = vmatprep.subr.bf16.mxu0 0
    %1502 = vmatpush1.bf16.msra.mxu0 0
    %1503 = vmatprep.mubr.bf16.mxu0 0
    %1504 = vmatmul.mubr.bf16.gmra.mrb[0].mxu0 %v1465
    %v1505 = vpop.f32.mrb[0].mxu0
    %v1506 = vadd.f32 0.0, %v1505
    %v1507 = vpop.f32.mrb[0].mxu0
    %v1508 = vpop.f32.mrb[0].mxu0
    %v1509 = vpop.f32.mrb[0].mxu0
    %1510 = vdwg.mxu0
    %v1512 = vsel %vm1015, %v1457, 0
    %v1515 = vsel %vm1467, %v1008, 0
    %1517 = vmatprep.subr.bf16.mxu0 0
    %1518 = vmatpush1.bf16.msra.mxu0 %v1515
    %1519 = vmatprep.subr.bf16.mxu0 0
    %1520 = vmatpush1.bf16.msra.mxu0 0
    %1521 = vmatprep.subr.bf16.mxu0 0
    %1522 = vmatpush1.bf16.msra.mxu0 0
    %1523 = vmatprep.subr.bf16.mxu0 0
    %1524 = vmatpush1.bf16.msra.mxu0 0
    %1525 = vmatprep.subr.bf16.mxu0 0
    %1526 = vmatpush1.bf16.msra.mxu0 0
    %1527 = vmatprep.subr.bf16.mxu0 0
    %1528 = vmatpush1.bf16.msra.mxu0 0
    %1529 = vmatprep.subr.bf16.mxu0 0
    %1530 = vmatpush1.bf16.msra.mxu0 0
    %1531 = vmatprep.subr.bf16.mxu0 0
    %1532 = vmatpush1.bf16.msra.mxu0 0
    %1533 = vmatprep.subr.bf16.mxu0 0
    %1534 = vmatpush1.bf16.msra.mxu0 0
    %1535 = vmatprep.subr.bf16.mxu0 0
    %1536 = vmatpush1.bf16.msra.mxu0 0
    %1537 = vmatprep.subr.bf16.mxu0 0
    %1538 = vmatpush1.bf16.msra.mxu0 0
    %1539 = vmatprep.subr.bf16.mxu0 0
    %1540 = vmatpush1.bf16.msra.mxu0 0
    %1541 = vmatprep.subr.bf16.mxu0 0
    %1542 = vmatpush1.bf16.msra.mxu0 0
    %1543 = vmatprep.subr.bf16.mxu0 0
    %1544 = vmatpush1.bf16.msra.mxu0 0
    %1545 = vmatprep.subr.bf16.mxu0 0
    %1546 = vmatpush1.bf16.msra.mxu0 0
    %1547 = vmatprep.subr.bf16.mxu0 0
    %1548 = vmatpush1.bf16.msra.mxu0 0
    %1549 = vmatprep.mubr.bf16.mxu0 0
    %1550 = vmatmul.mubr.bf16.gmra.mrb[0].mxu0 %v1512
    %v1551 = vpop.f32.mrb[0].mxu0
    %v1552 = vadd.f32 0.0, %v1551
    %v1553 = vpop.f32.mrb[0].mxu0
    %v1554 = vpop.f32.mrb[0].mxu0
    %v1555 = vpop.f32.mrb[0].mxu0
    %1556 = vdwg.mxu0
    %v1558 = vsel %vm1015, %v1458, 0
    %v1561 = vsel %vm1467, %v1009, 0
    %1563 = vmatprep.subr.bf16.mxu0 0
    %1564 = vmatpush1.bf16.msra.mxu0 %v1561
    %1565 = vmatprep.subr.bf16.mxu0 0
    %1566 = vmatpush1.bf16.msra.mxu0 0
    %1567 = vmatprep.subr.bf16.mxu0 0
    %1568 = vmatpush1.bf16.msra.mxu0 0
    %1569 = vmatprep.subr.bf16.mxu0 0
    %1570 = vmatpush1.bf16.msra.mxu0 0
    %1571 = vmatprep.subr.bf16.mxu0 0
    %1572 = vmatpush1.bf16.msra.mxu0 0
    %1573 = vmatprep.subr.bf16.mxu0 0
    %1574 = vmatpush1.bf16.msra.mxu0 0
    %1575 = vmatprep.subr.bf16.mxu0 0
    %1576 = vmatpush1.bf16.msra.mxu0 0
    %1577 = vmatprep.subr.bf16.mxu0 0
    %1578 = vmatpush1.bf16.msra.mxu0 0
    %1579 = vmatprep.subr.bf16.mxu0 0
    %1580 = vmatpush1.bf16.msra.mxu0 0
    %1581 = vmatprep.subr.bf16.mxu0 0
    %1582 = vmatpush1.bf16.msra.mxu0 0
    %1583 = vmatprep.subr.bf16.mxu0 0
    %1584 = vmatpush1.bf16.msra.mxu0 0
    %1585 = vmatprep.subr.bf16.mxu0 0
    %1586 = vmatpush1.bf16.msra.mxu0 0
    %1587 = vmatprep.subr.bf16.mxu0 0
    %1588 = vmatpush1.bf16.msra.mxu0 0
    %1589 = vmatprep.subr.bf16.mxu0 0
    %1590 = vmatpush1.bf16.msra.mxu0 0
    %1591 = vmatprep.subr.bf16.mxu0 0
    %1592 = vmatpush1.bf16.msra.mxu0 0
    %1593 = vmatprep.subr.bf16.mxu0 0
    %1594 = vmatpush1.bf16.msra.mxu0 0
    %1595 = vmatprep.mubr.bf16.mxu0 0
    %1596 = vmatmul.mubr.bf16.gmra.mrb[0].mxu0 %v1558
    %v1597 = vpop.f32.mrb[0].mxu0
    %v1598 = vadd.f32 0.0, %v1597
    %v1599 = vpop.f32.mrb[0].mxu0
    %v1600 = vpop.f32.mrb[0].mxu0
    %v1601 = vpop.f32.mrb[0].mxu0
    %1602 = vdwg.mxu0
    %v1604 = vsel %vm1015, %v1459, 0
    %v1607 = vsel %vm1467, %v1010, 0
    %1609 = vmatprep.subr.bf16.mxu0 0
    %1610 = vmatpush1.bf16.msra.mxu0 %v1607
    %1611 = vmatprep.subr.bf16.mxu0 0
    %1612 = vmatpush1.bf16.msra.mxu0 0
    %1613 = vmatprep.subr.bf16.mxu0 0
    %1614 = vmatpush1.bf16.msra.mxu0 0
    %1615 = vmatprep.subr.bf16.mxu0 0
    %1616 = vmatpush1.bf16.msra.mxu0 0
    %1617 = vmatprep.subr.bf16.mxu0 0
    %1618 = vmatpush1.bf16.msra.mxu0 0
    %1619 = vmatprep.subr.bf16.mxu0 0
    %1620 = vmatpush1.bf16.msra.mxu0 0
    %1621 = vmatprep.subr.bf16.mxu0 0
    %1622 = vmatpush1.bf16.msra.mxu0 0
    %1623 = vmatprep.subr.bf16.mxu0 0
    %1624 = vmatpush1.bf16.msra.mxu0 0
    %1625 = vmatprep.subr.bf16.mxu0 0
    %1626 = vmatpush1.bf16.msra.mxu0 0
    %1627 = vmatprep.subr.bf16.mxu0 0
    %1628 = vmatpush1.bf16.msra.mxu0 0
    %1629 = vmatprep.subr.bf16.mxu0 0
    %1630 = vmatpush1.bf16.msra.mxu0 0
    %1631 = vmatprep.subr.bf16.mxu0 0
    %1632 = vmatpush1.bf16.msra.mxu0 0
    %1633 = vmatprep.subr.bf16.mxu0 0
    %1634 = vmatpush1.bf16.msra.mxu0 0
    %1635 = vmatprep.subr.bf16.mxu0 0
    %1636 = vmatpush1.bf16.msra.mxu0 0
    %1637 = vmatprep.subr.bf16.mxu0 0
    %1638 = vmatpush1.bf16.msra.mxu0 0
    %1639 = vmatprep.subr.bf16.mxu0 0
    %1640 = vmatpush1.bf16.msra.mxu0 0
    %1641 = vmatprep.mubr.bf16.mxu0 0
    %1642 = vmatmul.mubr.bf16.gmra.mrb[0].mxu0 %v1604
    %v1643 = vpop.f32.mrb[0].mxu0
    %v1644 = vadd.f32 0.0, %v1643
    %v1645 = vpop.f32.mrb[0].mxu0
    %v1646 = vpop.f32.mrb[0].mxu0
    %v1647 = vpop.f32.mrb[0].mxu0
    %1648 = vdwg.mxu0
    %v1650 = vsel %vm1015, %v1460, 0
    %v1653 = vsel %vm1467, %v1011, 0
    %1655 = vmatprep.subr.bf16.mxu0 0
    %1656 = vmatpush1.bf16.msra.mxu0 %v1653
    %1657 = vmatprep.subr.bf16.mxu0 0
    %1658 = vmatpush1.bf16.msra.mxu0 0
    %1659 = vmatprep.subr.bf16.mxu0 0
    %1660 = vmatpush1.bf16.msra.mxu0 0
    %1661 = vmatprep.subr.bf16.mxu0 0
    %1662 = vmatpush1.bf16.msra.mxu0 0
    %1663 = vmatprep.subr.bf16.mxu0 0
    %1664 = vmatpush1.bf16.msra.mxu0 0
    %1665 = vmatprep.subr.bf16.mxu0 0
    %1666 = vmatpush1.bf16.msra.mxu0 0
    %1667 = vmatprep.subr.bf16.mxu0 0
    %1668 = vmatpush1.bf16.msra.mxu0 0
    %1669 = vmatprep.subr.bf16.mxu0 0
    %1670 = vmatpush1.bf16.msra.mxu0 0
    %1671 = vmatprep.subr.bf16.mxu0 0
    %1672 = vmatpush1.bf16.msra.mxu0 0
    %1673 = vmatprep.subr.bf16.mxu0 0
    %1674 = vmatpush1.bf16.msra.mxu0 0
    %1675 = vmatprep.subr.bf16.mxu0 0
    %1676 = vmatpush1.bf16.msra.mxu0 0
    %1677 = vmatprep.subr.bf16.mxu0 0
    %1678 = vmatpush1.bf16.msra.mxu0 0
    %1679 = vmatprep.subr.bf16.mxu0 0
    %1680 = vmatpush1.bf16.msra.mxu0 0
    %1681 = vmatprep.subr.bf16.mxu0 0
    %1682 = vmatpush1.bf16.msra.mxu0 0
    %1683 = vmatprep.subr.bf16.mxu0 0
    %1684 = vmatpush1.bf16.msra.mxu0 0
    %1685 = vmatprep.subr.bf16.mxu0 0
    %1686 = vmatpush1.bf16.msra.mxu0 0
    %1687 = vmatprep.mubr.bf16.mxu0 0
    %1688 = vmatmul.mubr.bf16.gmra.mrb[0].mxu0 %v1650
    %v1689 = vpop.f32.mrb[0].mxu0
    %v1690 = vadd.f32 0.0, %v1689
    %v1691 = vpop.f32.mrb[0].mxu0
    %v1692 = vpop.f32.mrb[0].mxu0
    %v1693 = vpop.f32.mrb[0].mxu0
    %1694 = vdwg.mxu0
    %v1696 = vsel %vm1015, %v1461, 0
    %v1699 = vsel %vm1467, %v1012, 0
    %1701 = vmatprep.subr.bf16.mxu0 0
    %1702 = vmatpush1.bf16.msra.mxu0 %v1699
    %1703 = vmatprep.subr.bf16.mxu0 0
    %1704 = vmatpush1.bf16.msra.mxu0 0
    %1705 = vmatprep.subr.bf16.mxu0 0
    %1706 = vmatpush1.bf16.msra.mxu0 0
    %1707 = vmatprep.subr.bf16.mxu0 0
    %1708 = vmatpush1.bf16.msra.mxu0 0
    %1709 = vmatprep.subr.bf16.mxu0 0
    %1710 = vmatpush1.bf16.msra.mxu0 0
    %1711 = vmatprep.subr.bf16.mxu0 0
    %1712 = vmatpush1.bf16.msra.mxu0 0
    %1713 = vmatprep.subr.bf16.mxu0 0
    %1714 = vmatpush1.bf16.msra.mxu0 0
    %1715 = vmatprep.subr.bf16.mxu0 0
    %1716 = vmatpush1.bf16.msra.mxu0 0
    %1717 = vmatprep.subr.bf16.mxu0 0
    %1718 = vmatpush1.bf16.msra.mxu0 0
    %1719 = vmatprep.subr.bf16.mxu0 0
    %1720 = vmatpush1.bf16.msra.mxu0 0
    %1721 = vmatprep.subr.bf16.mxu0 0
    %1722 = vmatpush1.bf16.msra.mxu0 0
    %1723 = vmatprep.subr.bf16.mxu0 0
    %1724 = vmatpush1.bf16.msra.mxu0 0
    %1725 = vmatprep.subr.bf16.mxu0 0
    %1726 = vmatpush1.bf16.msra.mxu0 0
    %1727 = vmatprep.subr.bf16.mxu0 0
    %1728 = vmatpush1.bf16.msra.mxu0 0
    %1729 = vmatprep.subr.bf16.mxu0 0
    %1730 = vmatpush1.bf16.msra.mxu0 0
    %1731 = vmatprep.subr.bf16.mxu0 0
    %1732 = vmatpush1.bf16.msra.mxu0 0
    %1733 = vmatprep.mubr.bf16.mxu0 0
    %1734 = vmatmul.mubr.bf16.gmra.mrb[0].mxu0 %v1696
    %v1735 = vpop.f32.mrb[0].mxu0
    %v1736 = vadd.f32 0.0, %v1735
    %v1737 = vpop.f32.mrb[0].mxu0
    %v1738 = vpop.f32.mrb[0].mxu0
    %v1739 = vpop.f32.mrb[0].mxu0
    %1740 = vdwg.mxu0
    %v1742 = vsel %vm1015, %v1462, 0
    %v1745 = vsel %vm1467, %v1013, 0
    %1747 = vmatprep.subr.bf16.mxu0 0
    %1748 = vmatpush1.bf16.msra.mxu0 %v1745
    %1749 = vmatprep.subr.bf16.mxu0 0
    %1750 = vmatpush1.bf16.msra.mxu0 0
    %1751 = vmatprep.subr.bf16.mxu0 0
    %1752 = vmatpush1.bf16.msra.mxu0 0
    %1753 = vmatprep.subr.bf16.mxu0 0
    %1754 = vmatpush1.bf16.msra.mxu0 0
    %1755 = vmatprep.subr.bf16.mxu0 0
    %1756 = vmatpush1.bf16.msra.mxu0 0
    %1757 = vmatprep.subr.bf16.mxu0 0
    %1758 = vmatpush1.bf16.msra.mxu0 0
    %1759 = vmatprep.subr.bf16.mxu0 0
    %1760 = vmatpush1.bf16.msra.mxu0 0
    %1761 = vmatprep.subr.bf16.mxu0 0
    %1762 = vmatpush1.bf16.msra.mxu0 0
    %1763 = vmatprep.subr.bf16.mxu0 0
    %1764 = vmatpush1.bf16.msra.mxu0 0
    %1765 = vmatprep.subr.bf16.mxu0 0
    %1766 = vmatpush1.bf16.msra.mxu0 0
    %1767 = vmatprep.subr.bf16.mxu0 0
    %1768 = vmatpush1.bf16.msra.mxu0 0
    %1769 = vmatprep.subr.bf16.mxu0 0
    %1770 = vmatpush1.bf16.msra.mxu0 0
    %1771 = vmatprep.subr.bf16.mxu0 0
    %1772 = vmatpush1.bf16.msra.mxu0 0
    %1773 = vmatprep.subr.bf16.mxu0 0
    %1774 = vmatpush1.bf16.msra.mxu0 0
    %1775 = vmatprep.subr.bf16.mxu0 0
    %1776 = vmatpush1.bf16.msra.mxu0 0
    %1777 = vmatprep.subr.bf16.mxu0 0
    %1778 = vmatpush1.bf16.msra.mxu0 0
    %1779 = vmatprep.mubr.bf16.mxu0 0
    %1780 = vmatmul.mubr.bf16.gmra.mrb[0].mxu0 %v1742
    %v1781 = vpop.f32.mrb[0].mxu0
    %v1782 = vadd.f32 0.0, %v1781
    %v1783 = vpop.f32.mrb[0].mxu0
    %v1784 = vpop.f32.mrb[0].mxu0
    %v1785 = vpop.f32.mrb[0].mxu0
    %1786 = vdwg.mxu0
    %v1788 = vsel %vm1015, %v1463, 0
    %v1791 = vsel %vm1467, %v1014, 0
    %1793 = vmatprep.subr.bf16.mxu0 0
    %1794 = vmatpush1.bf16.msra.mxu0 %v1791
    %1795 = vmatprep.subr.bf16.mxu0 0
    %1796 = vmatpush1.bf16.msra.mxu0 0
    %1797 = vmatprep.subr.bf16.mxu0 0
    %1798 = vmatpush1.bf16.msra.mxu0 0
    %1799 = vmatprep.subr.bf16.mxu0 0
    %1800 = vmatpush1.bf16.msra.mxu0 0
    %1801 = vmatprep.subr.bf16.mxu0 0
    %1802 = vmatpush1.bf16.msra.mxu0 0
    %1803 = vmatprep.subr.bf16.mxu0 0
    %1804 = vmatpush1.bf16.msra.mxu0 0
    %1805 = vmatprep.subr.bf16.mxu0 0
    %1806 = vmatpush1.bf16.msra.mxu0 0
    %1807 = vmatprep.subr.bf16.mxu0 0
    %1808 = vmatpush1.bf16.msra.mxu0 0
    %1809 = vmatprep.subr.bf16.mxu0 0
    %1810 = vmatpush1.bf16.msra.mxu0 0
    %1811 = vmatprep.subr.bf16.mxu0 0
    %1812 = vmatpush1.bf16.msra.mxu0 0
    %1813 = vmatprep.subr.bf16.mxu0 0
    %1814 = vmatpush1.bf16.msra.mxu0 0
    %1815 = vmatprep.subr.bf16.mxu0 0
    %1816 = vmatpush1.bf16.msra.mxu0 0
    %1817 = vmatprep.subr.bf16.mxu0 0
    %1818 = vmatpush1.bf16.msra.mxu0 0
    %1819 = vmatprep.subr.bf16.mxu0 0
    %1820 = vmatpush1.bf16.msra.mxu0 0
    %1821 = vmatprep.subr.bf16.mxu0 0
    %1822 = vmatpush1.bf16.msra.mxu0 0
    %1823 = vmatprep.subr.bf16.mxu0 0
    %1824 = vmatpush1.bf16.msra.mxu0 0
    %1825 = vmatprep.mubr.bf16.mxu0 0
    %1826 = vmatmul.mubr.bf16.gmra.mrb[0].mxu0 %v1788
    %v1827 = vpop.f32.mrb[0].mxu0
    %v1828 = vadd.f32 0.0, %v1827
    %v1829 = vpop.f32.mrb[0].mxu0
    %v1830 = vpop.f32.mrb[0].mxu0
    %v1831 = vpop.f32.mrb[0].mxu0
    %1832 = vdwg.mxu0
    %v1833 = vrcp.pop %v1434
    %v1834 = vrcp.pop %v1437
    %v1835 = vrcp.pop %v1440
    %v1836 = vrcp.pop %v1443
    %v1837 = vrcp.pop %v1446
    %v1838 = vrcp.pop %v1449
    %v1839 = vrcp.pop %v1452
    %v1840 = vrcp.pop %v1455
    %v1841 = vmul.f32 %v1506, %v1833
    %v1842 = vmul.f32 %v1552, %v1834
    %v1843 = vmul.f32 %v1598, %v1835
    %v1844 = vmul.f32 %v1644, %v1836
    %v1845 = vmul.f32 %v1690, %v1837
    %v1846 = vmul.f32 %v1736, %v1838
    %v1847 = vmul.f32 %v1782, %v1839
    %v1848 = vmul.f32 %v1828, %v1840
    %v1849 = vcombine.low %v1841, %v1845
    %v1850 = vcombine.high %v1841, %v1845
    %v1852 = vunpack.c.l.s4 1983009808
    %v1853 = vunpack.c.0.s8 %v1852
    %v1854 = vlaneseq
    %v1855 = vshrl.u32 %v1854, 7
    %v1856 = vsub.s32 %v1853, %v1855
    %v1857 = vrot.slane %v1849, %v1856
    %v1859 = vunpack.c.l.s4 1983009808
    %v1860 = vunpack.c.0.s8 %v1859
    %v1861 = vlaneseq
    %v1862 = vshrl.u32 %v1861, 7
    %v1863 = vsub.s32 %v1860, %v1862
    %v1864 = vrot.slane %v1850, %v1863
    %v1865 = vcombine.low %v1843, %v1847
    %v1866 = vcombine.high %v1843, %v1847
    %v1868 = vunpack.c.l.s4 1983009808
    %v1869 = vunpack.c.0.s8 %v1868
    %v1870 = vlaneseq
    %v1871 = vshrl.u32 %v1870, 7
    %v1872 = vsub.s32 %v1869, %v1871
    %v1873 = vrot.slane %v1865, %v1872
    %v1875 = vunpack.c.l.s4 1983009808
    %v1876 = vunpack.c.0.s8 %v1875
    %v1877 = vlaneseq
    %v1878 = vshrl.u32 %v1877, 7
    %v1879 = vsub.s32 %v1876, %v1878
    %v1880 = vrot.slane %v1866, %v1879
    %v1881 = vcombine.low %v1857, %v1873
    %v1882 = vcombine.high %v1857, %v1873
    %v1884 = vunpack.c.l.s4 1934713408
    %v1885 = vunpack.c.0.s8 %v1884
    %v1886 = vlaneseq
    %v1887 = vshrl.u32 %v1886, 7
    %v1888 = vsub.s32 %v1885, %v1887
    %v1889 = vrot.slane %v1881, %v1888
    %v1891 = vunpack.c.l.s4 1934713408
    %v1892 = vunpack.c.0.s8 %v1891
    %v1893 = vlaneseq
    %v1894 = vshrl.u32 %v1893, 7
    %v1895 = vsub.s32 %v1892, %v1894
    %v1896 = vrot.slane %v1882, %v1895
    %v1897 = vcombine.low %v1864, %v1880
    %v1898 = vcombine.high %v1864, %v1880
    %v1900 = vunpack.c.l.s4 1934713408
    %v1901 = vunpack.c.0.s8 %v1900
    %v1902 = vlaneseq
    %v1903 = vshrl.u32 %v1902, 7
    %v1904 = vsub.s32 %v1901, %v1903
    %v1905 = vrot.slane %v1897, %v1904
    %v1907 = vunpack.c.l.s4 1934713408
    %v1908 = vunpack.c.0.s8 %v1907
    %v1909 = vlaneseq
    %v1910 = vshrl.u32 %v1909, 7
    %v1911 = vsub.s32 %v1908, %v1910
    %v1912 = vrot.slane %v1898, %v1911
    %v1913 = vcombine.high %v1889, 0.0
    %v1914 = vcombine.high %v1896, 0.0
    %v1915 = vcombine.high %v1905, 0.0
    %v1916 = vcombine.high %v1912, 0.0
    %v1917 = vcombine.low %v1842, %v1846
    %v1918 = vcombine.high %v1842, %v1846
    %v1920 = vunpack.c.l.s4 1983009808
    %v1921 = vunpack.c.0.s8 %v1920
    %v1922 = vlaneseq
    %v1923 = vshrl.u32 %v1922, 7
    %v1924 = vsub.s32 %v1921, %v1923
    %v1925 = vrot.slane %v1917, %v1924
    %v1927 = vunpack.c.l.s4 1983009808
    %v1928 = vunpack.c.0.s8 %v1927
    %v1929 = vlaneseq
    %v1930 = vshrl.u32 %v1929, 7
    %v1931 = vsub.s32 %v1928, %v1930
    %v1932 = vrot.slane %v1918, %v1931
    %v1933 = vcombine.low %v1844, %v1848
    %v1934 = vcombine.high %v1844, %v1848
    %v1936 = vunpack.c.l.s4 1983009808
    %v1937 = vunpack.c.0.s8 %v1936
    %v1938 = vlaneseq
    %v1939 = vshrl.u32 %v1938, 7
    %v1940 = vsub.s32 %v1937, %v1939
    %v1941 = vrot.slane %v1933, %v1940
    %v1943 = vunpack.c.l.s4 1983009808
    %v1944 = vunpack.c.0.s8 %v1943
    %v1945 = vlaneseq
    %v1946 = vshrl.u32 %v1945, 7
    %v1947 = vsub.s32 %v1944, %v1946
    %v1948 = vrot.slane %v1934, %v1947
    %v1949 = vcombine.low %v1925, %v1941
    %v1950 = vcombine.high %v1925, %v1941
    %v1952 = vunpack.c.l.s4 1934713408
    %v1953 = vunpack.c.0.s8 %v1952
    %v1954 = vlaneseq
    %v1955 = vshrl.u32 %v1954, 7
    %v1956 = vsub.s32 %v1953, %v1955
    %v1957 = vrot.slane %v1949, %v1956
    %v1959 = vunpack.c.l.s4 1934713408
    %v1960 = vunpack.c.0.s8 %v1959
    %v1961 = vlaneseq
    %v1962 = vshrl.u32 %v1961, 7
    %v1963 = vsub.s32 %v1960, %v1962
    %v1964 = vrot.slane %v1950, %v1963
    %v1965 = vcombine.low %v1932, %v1948
    %v1966 = vcombine.high %v1932, %v1948
    %v1968 = vunpack.c.l.s4 1934713408
    %v1969 = vunpack.c.0.s8 %v1968
    %v1970 = vlaneseq
    %v1971 = vshrl.u32 %v1970, 7
    %v1972 = vsub.s32 %v1969, %v1971
    %v1973 = vrot.slane %v1965, %v1972
    %v1975 = vunpack.c.l.s4 1934713408
    %v1976 = vunpack.c.0.s8 %v1975
    %v1977 = vlaneseq
    %v1978 = vshrl.u32 %v1977, 7
    %v1979 = vsub.s32 %v1976, %v1978
    %v1980 = vrot.slane %v1966, %v1979
    %v1981 = vcombine.high %v1957, 0.0
    %v1982 = vcombine.high %v1964, 0.0
    %v1983 = vcombine.high %v1973, 0.0
    %v1984 = vcombine.high %v1980, 0.0
    %v1985 = vcombine.low %v1889, %v1896
    %v1987 = vunpack.c.l.s4 1983009808
    %v1988 = vunpack.c.0.s8 %v1987
    %v1989 = vlaneseq
    %v1990 = vshrl.u32 %v1989, 7
    %v1991 = vsub.s32 %v1988, %v1990
    %v1992 = vrot.slane %v1985, %v1991
    %v1993 = vcombine.low %v1913, %v1914
    %v1995 = vunpack.c.l.s4 1983009808
    %v1996 = vunpack.c.0.s8 %v1995
    %v1997 = vlaneseq
    %v1998 = vshrl.u32 %v1997, 7
    %v1999 = vsub.s32 %v1996, %v1998
    %v2000 = vrot.slane %v1993, %v1999
    %v2001 = vcombine.low %v1905, %v1912
    %v2003 = vunpack.c.l.s4 1983009808
    %v2004 = vunpack.c.0.s8 %v2003
    %v2005 = vlaneseq
    %v2006 = vshrl.u32 %v2005, 7
    %v2007 = vsub.s32 %v2004, %v2006
    %v2008 = vrot.slane %v2001, %v2007
    %v2009 = vcombine.low %v1915, %v1916
    %v2011 = vunpack.c.l.s4 1983009808
    %v2012 = vunpack.c.0.s8 %v2011
    %v2013 = vlaneseq
    %v2014 = vshrl.u32 %v2013, 7
    %v2015 = vsub.s32 %v2012, %v2014
    %v2016 = vrot.slane %v2009, %v2015
    %v2017 = vcombine.low %v1992, %v2000
    %v2018 = vcombine.high %v1992, %v2000
    %v2020 = vunpack.c.l.s4 1934713408
    %v2021 = vunpack.c.0.s8 %v2020
    %v2022 = vlaneseq
    %v2023 = vshrl.u32 %v2022, 7
    %v2024 = vsub.s32 %v2021, %v2023
    %v2025 = vrot.slane %v2017, %v2024
    %v2027 = vunpack.c.l.s4 1934713408
    %v2028 = vunpack.c.0.s8 %v2027
    %v2029 = vlaneseq
    %v2030 = vshrl.u32 %v2029, 7
    %v2031 = vsub.s32 %v2028, %v2030
    %v2032 = vrot.slane %v2018, %v2031
    %v2033 = vcombine.low %v2008, %v2016
    %v2034 = vcombine.high %v2008, %v2016
    %v2036 = vunpack.c.l.s4 1934713408
    %v2037 = vunpack.c.0.s8 %v2036
    %v2038 = vlaneseq
    %v2039 = vshrl.u32 %v2038, 7
    %v2040 = vsub.s32 %v2037, %v2039
    %v2041 = vrot.slane %v2033, %v2040
    %v2043 = vunpack.c.l.s4 1934713408
    %v2044 = vunpack.c.0.s8 %v2043
    %v2045 = vlaneseq
    %v2046 = vshrl.u32 %v2045, 7
    %v2047 = vsub.s32 %v2044, %v2046
    %v2048 = vrot.slane %v2034, %v2047
    %v2049 = vcombine.low %v2025, %v2041
    %v2050 = vcombine.high %v2025, %v2041
    %v2051 = vcombine.low %v2032, %v2048
    %v2052 = vcombine.high %v2032, %v2048
    %v2053 = vcombine.low %v1957, %v1964
    %v2055 = vunpack.c.l.s4 1983009808
    %v2056 = vunpack.c.0.s8 %v2055
    %v2057 = vlaneseq
    %v2058 = vshrl.u32 %v2057, 7
    %v2059 = vsub.s32 %v2056, %v2058
    %v2060 = vrot.slane %v2053, %v2059
    %v2061 = vcombine.low %v1981, %v1982
    %v2063 = vunpack.c.l.s4 1983009808
    %v2064 = vunpack.c.0.s8 %v2063
    %v2065 = vlaneseq
    %v2066 = vshrl.u32 %v2065, 7
    %v2067 = vsub.s32 %v2064, %v2066
    %v2068 = vrot.slane %v2061, %v2067
    %v2069 = vcombine.low %v1973, %v1980
    %v2071 = vunpack.c.l.s4 1983009808
    %v2072 = vunpack.c.0.s8 %v2071
    %v2073 = vlaneseq
    %v2074 = vshrl.u32 %v2073, 7
    %v2075 = vsub.s32 %v2072, %v2074
    %v2076 = vrot.slane %v2069, %v2075
    %v2077 = vcombine.low %v1983, %v1984
    %v2079 = vunpack.c.l.s4 1983009808
    %v2080 = vunpack.c.0.s8 %v2079
    %v2081 = vlaneseq
    %v2082 = vshrl.u32 %v2081, 7
    %v2083 = vsub.s32 %v2080, %v2082
    %v2084 = vrot.slane %v2077, %v2083
    %v2085 = vcombine.low %v2060, %v2068
    %v2086 = vcombine.high %v2060, %v2068
    %v2088 = vunpack.c.l.s4 1934713408
    %v2089 = vunpack.c.0.s8 %v2088
    %v2090 = vlaneseq
    %v2091 = vshrl.u32 %v2090, 7
    %v2092 = vsub.s32 %v2089, %v2091
    %v2093 = vrot.slane %v2085, %v2092
    %v2095 = vunpack.c.l.s4 1934713408
    %v2096 = vunpack.c.0.s8 %v2095
    %v2097 = vlaneseq
    %v2098 = vshrl.u32 %v2097, 7
    %v2099 = vsub.s32 %v2096, %v2098
    %v2100 = vrot.slane %v2086, %v2099
    %v2101 = vcombine.low %v2076, %v2084
    %v2102 = vcombine.high %v2076, %v2084
    %v2104 = vunpack.c.l.s4 1934713408
    %v2105 = vunpack.c.0.s8 %v2104
    %v2106 = vlaneseq
    %v2107 = vshrl.u32 %v2106, 7
    %v2108 = vsub.s32 %v2105, %v2107
    %v2109 = vrot.slane %v2101, %v2108
    %v2111 = vunpack.c.l.s4 1934713408
    %v2112 = vunpack.c.0.s8 %v2111
    %v2113 = vlaneseq
    %v2114 = vshrl.u32 %v2113, 7
    %v2115 = vsub.s32 %v2112, %v2114
    %v2116 = vrot.slane %v2102, %v2115
    %v2117 = vcombine.low %v2093, %v2109
    %v2118 = vcombine.high %v2093, %v2109
    %v2119 = vcombine.low %v2100, %v2116
    %v2120 = vcombine.high %v2100, %v2116
    %2123 = vrot.lane.b32.xlu0 %v2050, 8
    %v2124 = vpop.permute.xlu0 %2123
    %2125 = vrot.lane.b32.xlu0 %v2118, 8
    %v2126 = vpop.permute.xlu0 %2125
    %2131 = vrot.lane.b32.xlu0 %v2051, 16
    %v2132 = vpop.permute.xlu0 %2131
    %2133 = vrot.lane.b32.xlu0 %v2119, 16
    %v2134 = vpop.permute.xlu0 %2133
    %2139 = vrot.lane.b32.xlu0 %v2052, 24
    %v2140 = vpop.permute.xlu0 %2139
    %2141 = vrot.lane.b32.xlu0 %v2120, 24
    %v2142 = vpop.permute.xlu0 %2141
    %v2145 = vsel %vm1015, %v2049, %v2124
    %v2146 = vsel %vm1015, %v2117, %v2126
    %vm2147 = vcmask 130048
    %v2148 = vsel %vm2147, %v2145, %v2132
    %v2149 = vsel %vm2147, %v2146, %v2134
    %vm2150 = vcmask 195584
    %v2151 = vsel %vm2150, %v2148, %v2140
    %v2152 = vsel %vm2150, %v2149, %v2142
    %v2153 = vpack.c.bf16 %v2152, %v2151
    %v2154 = vld [vmem:[%s2] sm:$0xf]
    %v2155 = vld [vmem:[%s2 + $0x4] sm:$0xf]
    %v2156 = vld [vmem:[%s2 + $0x8] sm:$0xf]
    %v2157 = vld [vmem:[%s2 + $0xc] sm:$0xf]
    %v2158 = vld [vmem:[%s3] sm:$0x1]
    %v2160 = vlaneseq
    %v2161 = vshrl.u32 %v2160, 7
    %v2162 = vsub.s32 0, %v2161
    %v2163 = vrot.slane %v2158, %v2162
    %v2169 = vunpack.c.l.b16 %v2154
    %v2170 = vunpack.c.l.b16 %v2155
    %v2171 = vunpack.c.l.b16 %v2156
    %v2172 = vunpack.c.l.b16 %v2157
    %v2173 = vpack.c.b16 %v2170, %v2169
    %v2174 = vpack.c.b16 %v2172, %v2171
    %v2178 = vsel %vm62, %v2153, 0
    %2180 = vmatprep.subr.bf16.mxu0 0
    %2181 = vmatpush1.bf16.msra.mxu0 %v2173
    %2182 = vmatprep.subr.bf16.mxu0 0
    %2183 = vmatpush1.bf16.msra.mxu0 %v2174
    %2184 = vmatprep.subr.bf16.mxu0 0
    %2185 = vmatpush1.bf16.msra.mxu0 0
    %2186 = vmatprep.subr.bf16.mxu0 0
    %2187 = vmatpush1.bf16.msra.mxu0 0
    %2188 = vmatprep.subr.bf16.mxu0 0
    %2189 = vmatpush1.bf16.msra.mxu0 0
    %2190 = vmatprep.subr.bf16.mxu0 0
    %2191 = vmatpush1.bf16.msra.mxu0 0
    %2192 = vmatprep.subr.bf16.mxu0 0
    %2193 = vmatpush1.bf16.msra.mxu0 0
    %2194 = vmatprep.subr.bf16.mxu0 0
    %2195 = vmatpush1.bf16.msra.mxu0 0
    %2196 = vmatprep.subr.bf16.mxu0 0
    %2197 = vmatpush1.bf16.msra.mxu0 0
    %2198 = vmatprep.subr.bf16.mxu0 0
    %2199 = vmatpush1.bf16.msra.mxu0 0
    %2200 = vmatprep.subr.bf16.mxu0 0
    %2201 = vmatpush1.bf16.msra.mxu0 0
    %2202 = vmatprep.subr.bf16.mxu0 0
    %2203 = vmatpush1.bf16.msra.mxu0 0
    %2204 = vmatprep.subr.bf16.mxu0 0
    %2205 = vmatpush1.bf16.msra.mxu0 0
    %2206 = vmatprep.subr.bf16.mxu0 0
    %2207 = vmatpush1.bf16.msra.mxu0 0
    %2208 = vmatprep.subr.bf16.mxu0 0
    %2209 = vmatpush1.bf16.msra.mxu0 0
    %2210 = vmatprep.subr.bf16.mxu0 0
    %2211 = vmatpush1.bf16.msra.mxu0 0
    %2212 = vmatprep.mubr.bf16.mxu0 0
    %2213 = vmatmul.mubr.bf16.gmra.mrb[0].mxu0 %v2178
    %v2214 = vpop.f32.mrb[0].mxu0
    %v2215 = vadd.f32 %v2163, %v2214
    %v2216 = vpop.f32.mrb[0].mxu0
    %v2217 = vpop.f32.mrb[0].mxu0
    %v2218 = vadd.f32 %v2163, %v2217
    %v2219 = vpop.f32.mrb[0].mxu0
    %2220 = vdwg.mxu0
    %v2221 = vadd.f32 %v43, %v2215
    %v2222 = vadd.f32 %v44, %v2218
    %v2223 = vld [vmem:[%s4] sm:$0x1]
    %v2224 = vld [vmem:[%s5] sm:$0x1]
    %v2225 = vsel %vm62, %v2221, 0.0
    %2226 = vadd.xlane.f32.xlu0 %v2225
    %v2227 = vpop.xlane.xlu0 %2226
    %v2228 = vsel %vm62, %v2222, 0.0
    %2229 = vadd.xlane.f32.xlu0 %v2228
    %v2230 = vpop.xlane.xlu0 %2229
    %v2231 = vrcp.pop 32.0
    %v2232 = vmul.f32 %v2227, %v2231
    %v2233 = vmul.f32 %v2230, %v2231
    %v2234 = vsub.f32 %v2221, %v2232
    %v2235 = vsub.f32 %v2222, %v2233
    %v2236 = vmul.f32 %v2234, %v2234
    %v2237 = vmul.f32 %v2235, %v2235
    %v2238 = vsel %vm62, %v2236, 0.0
    %2239 = vadd.xlane.f32.xlu0 %v2238
    %v2240 = vpop.xlane.xlu0 %2239
    %v2241 = vsel %vm62, %v2237, 0.0
    %2242 = vadd.xlane.f32.xlu0 %v2241
    %v2243 = vpop.xlane.xlu0 %2242
    %v2244 = vmul.f32 %v2240, %v2231
    %v2245 = vmul.f32 %v2243, %v2231
    %v2246 = vadd.f32 %v2244, 1e-05
    %v2247 = vadd.f32 %v2245, 1e-05
    %v2248 = vrsqrt.pop %v2246
    %v2249 = vrsqrt.pop %v2247
    %v2250 = vmul.f32 %v2234, %v2248
    %v2251 = vmul.f32 %v2235, %v2249
    %v2253 = vlaneseq
    %v2254 = vshrl.u32 %v2253, 7
    %v2255 = vsub.s32 0, %v2254
    %v2256 = vrot.slane %v2223, %v2255
    %v2258 = vmul.f32 %v2250, %v2256
    %v2259 = vmul.f32 %v2251, %v2256
    %v2261 = vlaneseq
    %v2262 = vshrl.u32 %v2261, 7
    %v2263 = vsub.s32 0, %v2262
    %v2264 = vrot.slane %v2224, %v2263
    %v2266 = vadd.f32 %v2258, %v2264
    %v2267 = vadd.f32 %v2259, %v2264
    %v2268 = vpack.c.bf16 %v2267, %v2266
    %v2269 = vld [vmem:[%s6] sm:$0xf]
    %v2270 = vld [vmem:[%s6 + $0x4] sm:$0xf]
    %v2271 = vld [vmem:[%s6 + $0x8] sm:$0xf]
    %v2272 = vld [vmem:[%s6 + $0xc] sm:$0xf]
    %v2273 = vld [vmem:[%s7] sm:$0x1]
    %v2275 = vlaneseq
    %v2276 = vshrl.u32 %v2275, 7
    %v2277 = vsub.s32 0, %v2276
    %v2278 = vrot.slane %v2273, %v2277
    %v2284 = vunpack.c.l.b16 %v2269
    %v2285 = vunpack.c.l.b16 %v2270
    %v2286 = vunpack.c.l.b16 %v2271
    %v2287 = vunpack.c.l.b16 %v2272
    %v2288 = vpack.c.b16 %v2285, %v2284
    %v2289 = vpack.c.b16 %v2287, %v2286
    %v2293 = vsel %vm62, %v2268, 0
    %2295 = vmatprep.subr.bf16.mxu0 0
    %2296 = vmatpush1.bf16.msra.mxu0 %v2288
    %2297 = vmatprep.subr.bf16.mxu0 0
    %2298 = vmatpush1.bf16.msra.mxu0 %v2289
    %2299 = vmatprep.subr.bf16.mxu0 0
    %2300 = vmatpush1.bf16.msra.mxu0 0
    %2301 = vmatprep.subr.bf16.mxu0 0
    %2302 = vmatpush1.bf16.msra.mxu0 0
    %2303 = vmatprep.subr.bf16.mxu0 0
    %2304 = vmatpush1.bf16.msra.mxu0 0
    %2305 = vmatprep.subr.bf16.mxu0 0
    %2306 = vmatpush1.bf16.msra.mxu0 0
    %2307 = vmatprep.subr.bf16.mxu0 0
    %2308 = vmatpush1.bf16.msra.mxu0 0
    %2309 = vmatprep.subr.bf16.mxu0 0
    %2310 = vmatpush1.bf16.msra.mxu0 0
    %2311 = vmatprep.subr.bf16.mxu0 0
    %2312 = vmatpush1.bf16.msra.mxu0 0
    %2313 = vmatprep.subr.bf16.mxu0 0
    %2314 = vmatpush1.bf16.msra.mxu0 0
    %2315 = vmatprep.subr.bf16.mxu0 0
    %2316 = vmatpush1.bf16.msra.mxu0 0
    %2317 = vmatprep.subr.bf16.mxu0 0
    %2318 = vmatpush1.bf16.msra.mxu0 0
    %2319 = vmatprep.subr.bf16.mxu0 0
    %2320 = vmatpush1.bf16.msra.mxu0 0
    %2321 = vmatprep.subr.bf16.mxu0 0
    %2322 = vmatpush1.bf16.msra.mxu0 0
    %2323 = vmatprep.subr.bf16.mxu0 0
    %2324 = vmatpush1.bf16.msra.mxu0 0
    %2325 = vmatprep.subr.bf16.mxu0 0
    %2326 = vmatpush1.bf16.msra.mxu0 0
    %2327 = vmatprep.mubr.bf16.mxu0 0
    %2328 = vmatmul.mubr.bf16.gmra.mrb[0].mxu0 %v2293
    %v2329 = vpop.f32.mrb[0].mxu0
    %v2330 = vadd.f32 %v2278, %v2329
    %v2331 = vpop.f32.mrb[0].mxu0
    %v2332 = vpop.f32.mrb[0].mxu0
    %v2333 = vadd.f32 %v2278, %v2332
    %v2334 = vpop.f32.mrb[0].mxu0
    %2335 = vdwg.mxu0
    %v2336 = vmax.f32 %v2330, 0.0
    %v2337 = vmax.f32 %v2333, 0.0
    %v2338 = vpack.c.bf16 %v2337, %v2336
    %v2339 = vld [vmem:[%s8] sm:$0xf]
    %v2340 = vld [vmem:[%s8 + $0x4] sm:$0xf]
    %v2341 = vld [vmem:[%s8 + $0x8] sm:$0xf]
    %v2342 = vld [vmem:[%s8 + $0xc] sm:$0xf]
    %v2343 = vld [vmem:[%s8 + $0x10] sm:$0xf]
    %v2344 = vld [vmem:[%s8 + $0x14] sm:$0xf]
    %v2345 = vld [vmem:[%s8 + $0x18] sm:$0xf]
    %v2346 = vld [vmem:[%s8 + $0x1c] sm:$0xf]
    %v2347 = vld [vmem:[%s8 + $0x20] sm:$0xf]
    %v2348 = vld [vmem:[%s8 + $0x24] sm:$0xf]
    %v2349 = vld [vmem:[%s8 + $0x28] sm:$0xf]
    %v2350 = vld [vmem:[%s8 + $0x2c] sm:$0xf]
    %v2351 = vld [vmem:[%s8 + $0x30] sm:$0xf]
    %v2352 = vld [vmem:[%s8 + $0x34] sm:$0xf]
    %v2353 = vld [vmem:[%s8 + $0x38] sm:$0xf]
    %v2354 = vld [vmem:[%s8 + $0x3c] sm:$0xf]
    %v2355 = vld [vmem:[%s9] sm:$0x1]
    %v2357 = vlaneseq
    %v2358 = vshrl.u32 %v2357, 7
    %v2359 = vsub.s32 0, %v2358
    %v2360 = vrot.slane %v2355, %v2359
    %v2378 = vunpack.c.l.b16 %v2339
    %v2379 = vunpack.c.l.b16 %v2340
    %v2380 = vunpack.c.l.b16 %v2341
    %v2381 = vunpack.c.l.b16 %v2342
    %v2382 = vunpack.c.l.b16 %v2343
    %v2383 = vunpack.c.l.b16 %v2344
    %v2384 = vunpack.c.l.b16 %v2345
    %v2385 = vunpack.c.l.b16 %v2346
    %v2386 = vunpack.c.l.b16 %v2347
    %v2387 = vunpack.c.l.b16 %v2348
    %v2388 = vunpack.c.l.b16 %v2349
    %v2389 = vunpack.c.l.b16 %v2350
    %v2390 = vunpack.c.l.b16 %v2351
    %v2391 = vunpack.c.l.b16 %v2352
    %v2392 = vunpack.c.l.b16 %v2353
    %v2393 = vunpack.c.l.b16 %v2354
    %v2394 = vpack.c.b16 %v2379, %v2378
    %v2395 = vpack.c.b16 %v2381, %v2380
    %v2396 = vpack.c.b16 %v2383, %v2382
    %v2397 = vpack.c.b16 %v2385, %v2384
    %v2398 = vpack.c.b16 %v2387, %v2386
    %v2399 = vpack.c.b16 %v2389, %v2388
    %v2400 = vpack.c.b16 %v2391, %v2390
    %v2401 = vpack.c.b16 %v2393, %v2392
    %2410 = vmatprep.subr.bf16.mxu0 0
    %2411 = vmatpush1.bf16.msra.mxu0 %v2394
    %2412 = vmatprep.subr.bf16.mxu0 0
    %2413 = vmatpush1.bf16.msra.mxu0 %v2395
    %2414 = vmatprep.subr.bf16.mxu0 0
    %2415 = vmatpush1.bf16.msra.mxu0 %v2396
    %2416 = vmatprep.subr.bf16.mxu0 0
    %2417 = vmatpush1.bf16.msra.mxu0 %v2397
    %2418 = vmatprep.subr.bf16.mxu0 0
    %2419 = vmatpush1.bf16.msra.mxu0 %v2398
    %2420 = vmatprep.subr.bf16.mxu0 0
    %2421 = vmatpush1.bf16.msra.mxu0 %v2399
    %2422 = vmatprep.subr.bf16.mxu0 0
    %2423 = vmatpush1.bf16.msra.mxu0 %v2400
    %2424 = vmatprep.subr.bf16.mxu0 0
    %2425 = vmatpush1.bf16.msra.mxu0 %v2401
    %2426 = vmatprep.subr.bf16.mxu0 0
    %2427 = vmatpush1.bf16.msra.mxu0 0
    %2428 = vmatprep.subr.bf16.mxu0 0
    %2429 = vmatpush1.bf16.msra.mxu0 0
    %2430 = vmatprep.subr.bf16.mxu0 0
    %2431 = vmatpush1.bf16.msra.mxu0 0
    %2432 = vmatprep.subr.bf16.mxu0 0
    %2433 = vmatpush1.bf16.msra.mxu0 0
    %2434 = vmatprep.subr.bf16.mxu0 0
    %2435 = vmatpush1.bf16.msra.mxu0 0
    %2436 = vmatprep.subr.bf16.mxu0 0
    %2437 = vmatpush1.bf16.msra.mxu0 0
    %2438 = vmatprep.subr.bf16.mxu0 0
    %2439 = vmatpush1.bf16.msra.mxu0 0
    %2440 = vmatprep.subr.bf16.mxu0 0
    %2441 = vmatpush1.bf16.msra.mxu0 0
    %2442 = vmatprep.mubr.bf16.mxu0 0
    %2443 = vmatmul.mubr.bf16.gmra.mrb[0].mxu0 %v2338
    %v2444 = vpop.f32.mrb[0].mxu0
    %v2445 = vadd.f32 %v2360, %v2444
    %v2446 = vpop.f32.mrb[0].mxu0
    %v2447 = vpop.f32.mrb[0].mxu0
    %v2448 = vadd.f32 %v2360, %v2447
    %v2449 = vpop.f32.mrb[0].mxu0
    %2450 = vdwg.mxu0
    %v2451 = vadd.f32 %v2266, %v2445
    %v2452 = vadd.f32 %v2267, %v2448
    %v2453 = vld [vmem:[%s10] sm:$0x1]
    %v2454 = vld [vmem:[%s11] sm:$0x1]
    %v2455 = vsel %vm62, %v2451, 0.0
    %2456 = vadd.xlane.f32.xlu0 %v2455
    %v2457 = vpop.xlane.xlu0 %2456
    %v2458 = vsel %vm62, %v2452, 0.0
    %2459 = vadd.xlane.f32.xlu0 %v2458
    %v2460 = vpop.xlane.xlu0 %2459
    %v2461 = vmul.f32 %v2457, %v2231
    %v2462 = vmul.f32 %v2460, %v2231
    %v2463 = vsub.f32 %v2451, %v2461
    %v2464 = vsub.f32 %v2452, %v2462
    %v2465 = vmul.f32 %v2463, %v2463
    %v2466 = vmul.f32 %v2464, %v2464
    %v2467 = vsel %vm62, %v2465, 0.0
    %2468 = vadd.xlane.f32.xlu0 %v2467
    %v2469 = vpop.xlane.xlu0 %2468
    %v2470 = vsel %vm62, %v2466, 0.0
    %2471 = vadd.xlane.f32.xlu0 %v2470
    %v2472 = vpop.xlane.xlu0 %2471
    %v2473 = vmul.f32 %v2469, %v2231
    %v2474 = vmul.f32 %v2472, %v2231
    %v2475 = vadd.f32 %v2473, 1e-05
    %v2476 = vadd.f32 %v2474, 1e-05
    %v2477 = vrsqrt.pop %v2475
    %v2478 = vrsqrt.pop %v2476
    %v2479 = vmul.f32 %v2463, %v2477
    %v2480 = vmul.f32 %v2464, %v2478
    %v2482 = vlaneseq
    %v2483 = vshrl.u32 %v2482, 7
    %v2484 = vsub.s32 0, %v2483
    %v2485 = vrot.slane %v2453, %v2484
    %v2487 = vmul.f32 %v2479, %v2485
    %v2488 = vmul.f32 %v2480, %v2485
    %v2490 = vlaneseq
    %v2491 = vshrl.u32 %v2490, 7
    %v2492 = vsub.s32 0, %v2491
    %v2493 = vrot.slane %v2454, %v2492
    %v2495 = vadd.f32 %v2487, %v2493
    %v2496 = vadd.f32 %v2488, %v2493
    %2497 = vst.msk [vmem:[#allocation2] sm:$0xff] %vm62, %v2495
    %2498 = vst.msk [vmem:[#allocation2 + $0x8] sm:$0xff] %vm62, %v2496
    // Predicated region
    $region50: #{tpu_custom_call.1} parent=1 // pred_check
      _
    $region51: #{tpu_custom_call.1} parent=1 // pred_check_branch
      %2500 = sbr.rel (0) target = $region53
    $region52: #{tpu_custom_call.1} parent=1 // pred_region
      %s2502 = ssub.s32 256, 256
      %2503 = vsyncadd [#allocation3], %s2502
      %s2504 = sshll.u32 [#allocation2], 4
      %s2505 = int_to_ptr.vmem [resolvable:$true] %s2504
      %2510 = dma.vmem_to_hbm [thread:$0]  %s2505, 256, %s12, [#allocation3], 128, 128, 8
    $region53: #{tpu_custom_call.1} parent=1 // pred_fallthru
      _
    // Predicated region
    $region54: #{tpu_custom_call.1} parent=1 // pred_check
      _
    $region55: #{tpu_custom_call.1} parent=1 // pred_check_branch
      %2512 = sbr.rel (0) target = $region57
    $region56: #{tpu_custom_call.1} parent=1 // pred_region
      %2513 = dma.done [#allocation3], 256
    $region57: #{tpu_custom_call.1} parent=1 // pred_fallthru
      _
    %2514 = vsyncpa [#allocation3], 1

// kernel: tpu_custom_call.1
$region0: #{tpu_custom_call.1}
  #allocation0 [shape = 'u32[]', space=smem, size = 0x4, offset = 0x4, fixed_abs, tag = 'smem constant byte address 0x4 - core index']
  #allocation1 [shape = 'u32[144,128]{1,0:T(1,128)}', space=vmem, size = 0x12000, scoped, tag = 'internal scratch']
  %s0 = inlined_call_operand.vmem [shape: f32[2,8,32], index: 0, kind: input, shape index: {}]
  %s1 = inlined_call_operand.vmem [shape: bf16[32,96], index: 1, kind: input, shape index: {}]
  %s2 = inlined_call_operand.vmem [shape: bf16[32,32], index: 2, kind: input, shape index: {}]
  %s3 = inlined_call_operand.vmem [shape: f32[1,32], index: 3, kind: input, shape index: {}]
  %s4 = inlined_call_operand.vmem [shape: f32[1,32], index: 4, kind: input, shape index: {}]
  %s5 = inlined_call_operand.vmem [shape: f32[1,32], index: 5, kind: input, shape index: {}]
  %s6 = inlined_call_operand.vmem [shape: bf16[32,128], index: 6, kind: input, shape index: {}]
  %s7 = inlined_call_operand.vmem [shape: f32[1,128], index: 7, kind: input, shape index: {}]
  %s8 = inlined_call_operand.vmem [shape: bf16[128,32], index: 8, kind: input, shape index: {}]
  %s9 = inlined_call_operand.vmem [shape: f32[1,32], index: 9, kind: input, shape index: {}]
  %s10 = inlined_call_operand.vmem [shape: f32[1,32], index: 10, kind: input, shape index: {}]
  %s11 = inlined_call_operand.vmem [shape: f32[1,32], index: 11, kind: input, shape index: {}]
  %s12 = inlined_call_operand.hbm [shape: f32[2,8,32], index: 12, kind: output, shape index: {}]
  %s13 = sld [smem:[#allocation0]]
  $region58: #{tpu_custom_call.1} parent=0
    _
  %s15 = ssub.s32 1, %s13
  %s16 = scalar_select 0, %s15, %s13
  $region1: #{tpu_custom_call.1} parent=0
    #allocation2 [shape = 'u8[8192]{0}', space=vmem, size = 0x2000, scoped, tag = 'output window, operand 0, single buffered']
    #allocation3 [shape = 's32[1]{0}', space=sflag, size = 0x4, scoped, tag = 'scoped memory for tpu_custom_call.1']
    %17 = vsyncpa [#allocation3], 0
    // Predicated region
    $region2: #{tpu_custom_call.1} parent=1 // pred_check
      _
    $region3: #{tpu_custom_call.1} parent=1 // pred_check_branch
      %19 = sbr.rel (0) target = $region5
    $region4: #{tpu_custom_call.1} parent=1 // pred_region
      _
    $region5: #{tpu_custom_call.1} parent=1 // pred_fallthru
      _
    // Predicated region
    $region6: #{tpu_custom_call.1} parent=1 // pred_check
      _
    $region7: #{tpu_custom_call.1} parent=1 // pred_check_branch
      %21 = sbr.rel (0) target = $region9
    $region8: #{tpu_custom_call.1} parent=1 // pred_region
      _
    $region9: #{tpu_custom_call.1} parent=1 // pred_fallthru
      _
    // Predicated region
    $region10: #{tpu_custom_call.1} parent=1 // pred_check
      _
    $region11: #{tpu_custom_call.1} parent=1 // pred_check_branch
      %23 = sbr.rel (0) target = $region13
    $region12: #{tpu_custom_call.1} parent=1 // pred_region
      _
    $region13: #{tpu_custom_call.1} parent=1 // pred_fallthru
      _
    // Predicated region
    $region14: #{tpu_custom_call.1} parent=1 // pred_check
      _
    $region15: #{tpu_custom_call.1} parent=1 // pred_check_branch
      %25 = sbr.rel (0) target = $region17
    $region16: #{tpu_custom_call.1} parent=1 // pred_region
      _
    $region17: #{tpu_custom_call.1} parent=1 // pred_fallthru
      _
    // Predicated region
    $region18: #{tpu_custom_call.1} parent=1 // pred_check
      _
    $region19: #{tpu_custom_call.1} parent=1 // pred_check_branch
      %27 = sbr.rel (0) target = $region21
    $region20: #{tpu_custom_call.1} parent=1 // pred_region
      _
    $region21: #{tpu_custom_call.1} parent=1 // pred_fallthru
      _
    // Predicated region
    $region22: #{tpu_custom_call.1} parent=1 // pred_check
      _
    $region23: #{tpu_custom_call.1} parent=1 // pred_check_branch
      %29 = sbr.rel (0) target = $region25
    $region24: #{tpu_custom_call.1} parent=1 // pred_region
      _
    $region25: #{tpu_custom_call.1} parent=1 // pred_fallthru
      _
    // Predicated region
    $region26: #{tpu_custom_call.1} parent=1 // pred_check
      _
    $region27: #{tpu_custom_call.1} parent=1 // pred_check_branch
      %31 = sbr.rel (0) target = $region29
    $region28: #{tpu_custom_call.1} parent=1 // pred_region
      _
    $region29: #{tpu_custom_call.1} parent=1 // pred_fallthru
      _
    // Predicated region
    $region30: #{tpu_custom_call.1} parent=1 // pred_check
      _
    $region31: #{tpu_custom_call.1} parent=1 // pred_check_branch
      %33 = sbr.rel (0) target = $region33
    $region32: #{tpu_custom_call.1} parent=1 // pred_region
      _
    $region33: #{tpu_custom_call.1} parent=1 // pred_fallthru
      _
    // Predicated region
    $region34: #{tpu_custom_call.1} parent=1 // pred_check
      _
    $region35: #{tpu_custom_call.1} parent=1 // pred_check_branch
      %35 = sbr.rel (0) target = $region37
    $region36: #{tpu_custom_call.1} parent=1 // pred_region
      _
    $region37: #{tpu_custom_call.1} parent=1 // pred_fallthru
      _
    // Predicated region
    $region38: #{tpu_custom_call.1} parent=1 // pred_check
      _
    $region39: #{tpu_custom_call.1} parent=1 // pred_check_branch
      %37 = sbr.rel (0) target = $region41
    $region40: #{tpu_custom_call.1} parent=1 // pred_region
      _
    $region41: #{tpu_custom_call.1} parent=1 // pred_fallthru
      _
    // Predicated region
    $region42: #{tpu_custom_call.1} parent=1 // pred_check
      _
    $region43: #{tpu_custom_call.1} parent=1 // pred_check_branch
      %39 = sbr.rel (0) target = $region45
    $region44: #{tpu_custom_call.1} parent=1 // pred_region
      _
    $region45: #{tpu_custom_call.1} parent=1 // pred_fallthru
      _
    // Predicated region
    $region46: #{tpu_custom_call.1} parent=1 // pred_check
      _
    $region47: #{tpu_custom_call.1} parent=1 // pred_check_branch
      %41 = sbr.rel (0) target = $region49
    $region48: #{tpu_custom_call.1} parent=1 // pred_region
      _
    $region49: #{tpu_custom_call.1} parent=1 // pred_fallthru
      _
    %v43 = vld [vmem:[%s0] sm:$0xff]
    %v44 = vld [vmem:[%s0 + $0x8] sm:$0xff]
    %v45 = vpack.c.bf16 %v44, %v43
    %v46 = vld [vmem:[%s1] sm:$0xf]
    %v47 = vld [vmem:[%s1 + $0x4] sm:$0xf]
    %v48 = vld [vmem:[%s1 + $0x8] sm:$0xf]
    %v49 = vld [vmem:[%s1 + $0xc] sm:$0xf]
    %v54 = vunpack.c.l.b16 %v46
    %v55 = vunpack.c.l.b16 %v47
    %v56 = vunpack.c.l.b16 %v48
    %v57 = vunpack.c.l.b16 %v49
    %v58 = vpack.c.b16 %v55, %v54
    %v59 = vpack.c.b16 %v57, %v56
    %vm62 = vcmask 261120
    %v64 = vsel %vm62, %v45, 0
    %66 = vmatprep.subr.bf16.mxu0 0
    %67 = vmatpush1.bf16.msra.mxu0 %v58
    %68 = vmatprep.subr.bf16.mxu0 0
    %69 = vmatpush1.bf16.msra.mxu0 %v59
    %70 = vmatprep.subr.bf16.mxu0 0
    %71 = vmatpush1.bf16.msra.mxu0 0
    %72 = vmatprep.subr.bf16.mxu0 0
    %73 = vmatpush1.bf16.msra.mxu0 0
    %74 = vmatprep.subr.bf16.mxu0 0
    %75 = vmatpush1.bf16.msra.mxu0 0
    %76 = vmatprep.subr.bf16.mxu0 0
    %77 = vmatpush1.bf16.msra.mxu0 0
    %78 = vmatprep.subr.bf16.mxu0 0
    %79 = vmatpush1.bf16.msra.mxu0 0
    %80 = vmatprep.subr.bf16.mxu0 0
    %81 = vmatpush1.bf16.msra.mxu0 0
    %82 = vmatprep.subr.bf16.mxu0 0
    %83 = vmatpush1.bf16.msra.mxu0 0
    %84 = vmatprep.subr.bf16.mxu0 0
    %85 = vmatpush1.bf16.msra.mxu0 0
    %86 = vmatprep.subr.bf16.mxu0 0
    %87 = vmatpush1.bf16.msra.mxu0 0
    %88 = vmatprep.subr.bf16.mxu0 0
    %89 = vmatpush1.bf16.msra.mxu0 0
    %90 = vmatprep.subr.bf16.mxu0 0
    %91 = vmatpush1.bf16.msra.mxu0 0
    %92 = vmatprep.subr.bf16.mxu0 0
    %93 = vmatpush1.bf16.msra.mxu0 0
    %94 = vmatprep.subr.bf16.mxu0 0
    %95 = vmatpush1.bf16.msra.mxu0 0
    %96 = vmatprep.subr.bf16.mxu0 0
    %97 = vmatpush1.bf16.msra.mxu0 0
    %98 = vmatprep.mubr.bf16.mxu0 0
    %99 = vmatmul.mubr.bf16.gmra.mrb[0].mxu0 %v64
    %v100 = vpop.f32.mrb[0].mxu0
    %v101 = vadd.f32 0.0, %v100
    %v102 = vpop.f32.mrb[0].mxu0
    %v103 = vpop.f32.mrb[0].mxu0
    %v104 = vadd.f32 0.0, %v103
    %v105 = vpop.f32.mrb[0].mxu0
    %106 = vdwg.mxu0
    %109 = vrot.lane.b32.xlu0 %v101, 120
    %v110 = vpop.permute.xlu0 %109
    %111 = vrot.lane.b32.xlu0 %v104, 120
    %v112 = vpop.permute.xlu0 %111
    %115 = vrot.lane.b32.xlu0 %v101, 112
    %v116 = vpop.permute.xlu0 %115
    %117 = vrot.lane.b32.xlu0 %v104, 112
    %v118 = vpop.permute.xlu0 %117
    %121 = vrot.lane.b32.xlu0 %v101, 104
    %v122 = vpop.permute.xlu0 %121
    %123 = vrot.lane.b32.xlu0 %v104, 104
    %v124 = vpop.permute.xlu0 %123
    %127 = vrot.lane.b32.xlu0 %v101, 96
    %v128 = vpop.permute.xlu0 %127
    %129 = vrot.lane.b32.xlu0 %v104, 96
    %v130 = vpop.permute.xlu0 %129
    %133 = vrot.lane.b32.xlu0 %v101, 88
    %v134 = vpop.permute.xlu0 %133
    %135 = vrot.lane.b32.xlu0 %v104, 88
    %v136 = vpop.permute.xlu0 %135
    %139 = vrot.lane.b32.xlu0 %v101, 80
    %v140 = vpop.permute.xlu0 %139
    %141 = vrot.lane.b32.xlu0 %v104, 80
    %v142 = vpop.permute.xlu0 %141
    %145 = vrot.lane.b32.xlu0 %v101, 72
    %v146 = vpop.permute.xlu0 %145
    %147 = vrot.lane.b32.xlu0 %v104, 72
    %v148 = vpop.permute.xlu0 %147
    %151 = vrot.lane.b32.xlu0 %v101, 64
    %v152 = vpop.permute.xlu0 %151
    %153 = vrot.lane.b32.xlu0 %v104, 64
    %v154 = vpop.permute.xlu0 %153
    %157 = vrot.lane.b32.xlu0 %v101, 56
    %v158 = vpop.permute.xlu0 %157
    %159 = vrot.lane.b32.xlu0 %v104, 56
    %v160 = vpop.permute.xlu0 %159
    %163 = vrot.lane.b32.xlu0 %v101, 48
    %v164 = vpop.permute.xlu0 %163
    %165 = vrot.lane.b32.xlu0 %v104, 48
    %v166 = vpop.permute.xlu0 %165
    %169 = vrot.lane.b32.xlu0 %v101, 40
    %v170 = vpop.permute.xlu0 %169
    %171 = vrot.lane.b32.xlu0 %v104, 40
    %v172 = vpop.permute.xlu0 %171
    %v175 = vcombine.low %v101, %v116
    %v176 = vcombine.high %v101, %v116
    %v178 = vunpack.c.l.s4 1983009808
    %v179 = vunpack.c.0.s8 %v178
    %v180 = vlaneseq
    %v181 = vshrl.u32 %v180, 7
    %v182 = vsub.s32 %v179, %v181
    %v183 = vrot.slane %v175, %v182
    %v185 = vunpack.c.l.s4 1983009808
    %v186 = vunpack.c.0.s8 %v185
    %v187 = vlaneseq
    %v188 = vshrl.u32 %v187, 7
    %v189 = vsub.s32 %v186, %v188
    %v190 = vrot.slane %v176, %v189
    %v191 = vcombine.low %v110, %v122
    %v192 = vcombine.high %v110, %v122
    %v194 = vunpack.c.l.s4 1983009808
    %v195 = vunpack.c.0.s8 %v194
    %v196 = vlaneseq
    %v197 = vshrl.u32 %v196, 7
    %v198 = vsub.s32 %v195, %v197
    %v199 = vrot.slane %v191, %v198
    %v201 = vunpack.c.l.s4 1983009808
    %v202 = vunpack.c.0.s8 %v201
    %v203 = vlaneseq
    %v204 = vshrl.u32 %v203, 7
    %v205 = vsub.s32 %v202, %v204
    %v206 = vrot.slane %v192, %v205
    %v207 = vcombine.low %v128, %v140
    %v208 = vcombine.high %v128, %v140
    %v210 = vunpack.c.l.s4 1983009808
    %v211 = vunpack.c.0.s8 %v210
    %v212 = vlaneseq
    %v213 = vshrl.u32 %v212, 7
    %v214 = vsub.s32 %v211, %v213
    %v215 = vrot.slane %v207, %v214
    %v217 = vunpack.c.l.s4 1983009808
    %v218 = vunpack.c.0.s8 %v217
    %v219 = vlaneseq
    %v220 = vshrl.u32 %v219, 7
    %v221 = vsub.s32 %v218, %v220
    %v222 = vrot.slane %v208, %v221
    %v223 = vcombine.low %v134, %v146
    %v224 = vcombine.high %v134, %v146
    %v226 = vunpack.c.l.s4 1983009808
    %v227 = vunpack.c.0.s8 %v226
    %v228 = vlaneseq
    %v229 = vshrl.u32 %v228, 7
    %v230 = vsub.s32 %v227, %v229
    %v231 = vrot.slane %v223, %v230
    %v233 = vunpack.c.l.s4 1983009808
    %v234 = vunpack.c.0.s8 %v233
    %v235 = vlaneseq
    %v236 = vshrl.u32 %v235, 7
    %v237 = vsub.s32 %v234, %v236
    %v238 = vrot.slane %v224, %v237
    %v239 = vcombine.low %v183, %v199
    %v240 = vcombine.high %v183, %v199
    %v242 = vunpack.c.l.s4 1934713408
    %v243 = vunpack.c.0.s8 %v242
    %v244 = vlaneseq
    %v245 = vshrl.u32 %v244, 7
    %v246 = vsub.s32 %v243, %v245
    %v247 = vrot.slane %v239, %v246
    %v249 = vunpack.c.l.s4 1934713408
    %v250 = vunpack.c.0.s8 %v249
    %v251 = vlaneseq
    %v252 = vshrl.u32 %v251, 7
    %v253 = vsub.s32 %v250, %v252
    %v254 = vrot.slane %v240, %v253
    %v255 = vcombine.low %v190, %v206
    %v256 = vcombine.high %v190, %v206
    %v258 = vunpack.c.l.s4 1934713408
    %v259 = vunpack.c.0.s8 %v258
    %v260 = vlaneseq
    %v261 = vshrl.u32 %v260, 7
    %v262 = vsub.s32 %v259, %v261
    %v263 = vrot.slane %v255, %v262
    %v265 = vunpack.c.l.s4 1934713408
    %v266 = vunpack.c.0.s8 %v265
    %v267 = vlaneseq
    %v268 = vshrl.u32 %v267, 7
    %v269 = vsub.s32 %v266, %v268
    %v270 = vrot.slane %v256, %v269
    %v271 = vcombine.low %v215, %v231
    %v272 = vcombine.high %v215, %v231
    %v274 = vunpack.c.l.s4 1934713408
    %v275 = vunpack.c.0.s8 %v274
    %v276 = vlaneseq
    %v277 = vshrl.u32 %v276, 7
    %v278 = vsub.s32 %v275, %v277
    %v279 = vrot.slane %v271, %v278
    %v281 = vunpack.c.l.s4 1934713408
    %v282 = vunpack.c.0.s8 %v281
    %v283 = vlaneseq
    %v284 = vshrl.u32 %v283, 7
    %v285 = vsub.s32 %v282, %v284
    %v286 = vrot.slane %v272, %v285
    %v287 = vcombine.low %v222, %v238
    %v288 = vcombine.high %v222, %v238
    %v290 = vunpack.c.l.s4 1934713408
    %v291 = vunpack.c.0.s8 %v290
    %v292 = vlaneseq
    %v293 = vshrl.u32 %v292, 7
    %v294 = vsub.s32 %v291, %v293
    %v295 = vrot.slane %v287, %v294
    %v297 = vunpack.c.l.s4 1934713408
    %v298 = vunpack.c.0.s8 %v297
    %v299 = vlaneseq
    %v300 = vshrl.u32 %v299, 7
    %v301 = vsub.s32 %v298, %v300
    %v302 = vrot.slane %v288, %v301
    %v303 = vcombine.low %v247, %v279
    %v304 = vcombine.high %v247, %v279
    %v305 = vcombine.low %v254, %v286
    %v306 = vcombine.high %v254, %v286
    %v307 = vcombine.low %v263, %v295
    %v308 = vcombine.high %v263, %v295
    %v309 = vcombine.low %v270, %v302
    %v310 = vcombine.high %v270, %v302
    %v311 = vcombine.low %v152, %v164
    %v312 = vcombine.high %v152, %v164
    %v314 = vunpack.c.l.s4 1983009808
    %v315 = vunpack.c.0.s8 %v314
    %v316 = vlaneseq
    %v317 = vshrl.u32 %v316, 7
    %v318 = vsub.s32 %v315, %v317
    %v319 = vrot.slane %v311, %v318
    %v321 = vunpack.c.l.s4 1983009808
    %v322 = vunpack.c.0.s8 %v321
    %v323 = vlaneseq
    %v324 = vshrl.u32 %v323, 7
    %v325 = vsub.s32 %v322, %v324
    %v326 = vrot.slane %v312, %v325
    %v327 = vcombine.low %v158, %v170
    %v328 = vcombine.high %v158, %v170
    %v330 = vunpack.c.l.s4 1983009808
    %v331 = vunpack.c.0.s8 %v330
    %v332 = vlaneseq
    %v333 = vshrl.u32 %v332, 7
    %v334 = vsub.s32 %v331, %v333
    %v335 = vrot.slane %v327, %v334
    %v337 = vunpack.c.l.s4 1983009808
    %v338 = vunpack.c.0.s8 %v337
    %v339 = vlaneseq
    %v340 = vshrl.u32 %v339, 7
    %v341 = vsub.s32 %v338, %v340
    %v342 = vrot.slane %v328, %v341
    %v343 = vcombine.low %v319, %v335
    %v344 = vcombine.high %v319, %v335
    %v346 = vunpack.c.l.s4 1934713408
    %v347 = vunpack.c.0.s8 %v346
    %v348 = vlaneseq
    %v349 = vshrl.u32 %v348, 7
    %v350 = vsub.s32 %v347, %v349
    %v351 = vrot.slane %v343, %v350
    %v353 = vunpack.c.l.s4 1934713408
    %v354 = vunpack.c.0.s8 %v353
    %v355 = vlaneseq
    %v356 = vshrl.u32 %v355, 7
    %v357 = vsub.s32 %v354, %v356
    %v358 = vrot.slane %v344, %v357
    %v359 = vcombine.low %v326, %v342
    %v360 = vcombine.high %v326, %v342
    %v362 = vunpack.c.l.s4 1934713408
    %v363 = vunpack.c.0.s8 %v362
    %v364 = vlaneseq
    %v365 = vshrl.u32 %v364, 7
    %v366 = vsub.s32 %v363, %v365
    %v367 = vrot.slane %v359, %v366
    %v369 = vunpack.c.l.s4 1934713408
    %v370 = vunpack.c.0.s8 %v369
    %v371 = vlaneseq
    %v372 = vshrl.u32 %v371, 7
    %v373 = vsub.s32 %v370, %v372
    %v374 = vrot.slane %v360, %v373
    %v375 = vcombine.high %v351, 0.0
    %v376 = vcombine.high %v358, 0.0
    %v377 = vcombine.high %v367, 0.0
    %v378 = vcombine.high %v374, 0.0
    %v379 = vcombine.low %v104, %v118
    %v380 = vcombine.high %v104, %v118
    %v382 = vunpack.c.l.s4 1983009808
    %v383 = vunpack.c.0.s8 %v382
    %v384 = vlaneseq
    %v385 = vshrl.u32 %v384, 7
    %v386 = vsub.s32 %v383, %v385
    %v387 = vrot.slane %v379, %v386
    %v389 = vunpack.c.l.s4 1983009808
    %v390 = vunpack.c.0.s8 %v389
    %v391 = vlaneseq
    %v392 = vshrl.u32 %v391, 7
    %v393 = vsub.s32 %v390, %v392
    %v394 = vrot.slane %v380, %v393
    %v395 = vcombine.low %v112, %v124
    %v396 = vcombine.high %v112, %v124
    %v398 = vunpack.c.l.s4 1983009808
    %v399 = vunpack.c.0.s8 %v398
    %v400 = vlaneseq
    %v401 = vshrl.u32 %v400, 7
    %v402 = vsub.s32 %v399, %v401
    %v403 = vrot.slane %v395, %v402
    %v405 = vunpack.c.l.s4 1983009808
    %v406 = vunpack.c.0.s8 %v405
    %v407 = vlaneseq
    %v408 = vshrl.u32 %v407, 7
    %v409 = vsub.s32 %v406, %v408
    %v410 = vrot.slane %v396, %v409
    %v411 = vcombine.low %v130, %v142
    %v412 = vcombine.high %v130, %v142
    %v414 = vunpack.c.l.s4 1983009808
    %v415 = vunpack.c.0.s8 %v414
    %v416 = vlaneseq
    %v417 = vshrl.u32 %v416, 7
    %v418 = vsub.s32 %v415, %v417
    %v419 = vrot.slane %v411, %v418
    %v421 = vunpack.c.l.s4 1983009808
    %v422 = vunpack.c.0.s8 %v421
    %v423 = vlaneseq
    %v424 = vshrl.u32 %v423, 7
    %v425 = vsub.s32 %v422, %v424
    %v426 = vrot.slane %v412, %v425
    %v427 = vcombine.low %v136, %v148
    %v428 = vcombine.high %v136, %v148
    %v430 = vunpack.c.l.s4 1983009808
    %v431 = vunpack.c.0.s8 %v430
    %v432 = vlaneseq
    %v433 = vshrl.u32 %v432, 7
    %v434 = vsub.s32 %v431, %v433
    %v435 = vrot.slane %v427, %v434
    %v437 = vunpack.c.l.s4 1983009808
    %v438 = vunpack.c.0.s8 %v437
    %v439 = vlaneseq
    %v440 = vshrl.u32 %v439, 7
    %v441 = vsub.s32 %v438, %v440
    %v442 = vrot.slane %v428, %v441
    %v443 = vcombine.low %v387, %v403
    %v444 = vcombine.high %v387, %v403
    %v446 = vunpack.c.l.s4 1934713408
    %v447 = vunpack.c.0.s8 %v446
    %v448 = vlaneseq
    %v449 = vshrl.u32 %v448, 7
    %v450 = vsub.s32 %v447, %v449
    %v451 = vrot.slane %v443, %v450
    %v453 = vunpack.c.l.s4 1934713408
    %v454 = vunpack.c.0.s8 %v453
    %v455 = vlaneseq
    %v456 = vshrl.u32 %v455, 7
    %v457 = vsub.s32 %v454, %v456
    %v458 = vrot.slane %v444, %v457
    %v459 = vcombine.low %v394, %v410
    %v460 = vcombine.high %v394, %v410
    %v462 = vunpack.c.l.s4 1934713408
    %v463 = vunpack.c.0.s8 %v462
    %v464 = vlaneseq
    %v465 = vshrl.u32 %v464, 7
    %v466 = vsub.s32 %v463, %v465
    %v467 = vrot.slane %v459, %v466
    %v469 = vunpack.c.l.s4 1934713408
    %v470 = vunpack.c.0.s8 %v469
    %v471 = vlaneseq
    %v472 = vshrl.u32 %v471, 7
    %v473 = vsub.s32 %v470, %v472
    %v474 = vrot.slane %v460, %v473
    %v475 = vcombine.low %v419, %v435
    %v476 = vcombine.high %v419, %v435
    %v478 = vunpack.c.l.s4 1934713408
    %v479 = vunpack.c.0.s8 %v478
    %v480 = vlaneseq
    %v481 = vshrl.u32 %v480, 7
    %v482 = vsub.s32 %v479, %v481
    %v483 = vrot.slane %v475, %v482
    %v485 = vunpack.c.l.s4 1934713408
    %v486 = vunpack.c.0.s8 %v485
    %v487 = vlaneseq
    %v488 = vshrl.u32 %v487, 7
    %v489 = vsub.s32 %v486, %v488
    %v490 = vrot.slane %v476, %v489
    %v491 = vcombine.low %v426, %v442
    %v492 = vcombine.high %v426, %v442
    %v494 = vunpack.c.l.s4 1934713408
    %v495 = vunpack.c.0.s8 %v494
    %v496 = vlaneseq
    %v497 = vshrl.u32 %v496, 7
    %v498 = vsub.s32 %v495, %v497
    %v499 = vrot.slane %v491, %v498
    %v501 = vunpack.c.l.s4 1934713408
    %v502 = vunpack.c.0.s8 %v501
    %v503 = vlaneseq
    %v504 = vshrl.u32 %v503, 7
    %v505 = vsub.s32 %v502, %v504
    %v506 = vrot.slane %v492, %v505
    %v507 = vcombine.low %v451, %v483
    %v508 = vcombine.high %v451, %v483
    %v509 = vcombine.low %v458, %v490
    %v510 = vcombine.high %v458, %v490
    %v511 = vcombine.low %v467, %v499
    %v512 = vcombine.high %v467, %v499
    %v513 = vcombine.low %v474, %v506
    %v514 = vcombine.high %v474, %v506
    %v515 = vcombine.low %v154, %v166
    %v516 = vcombine.high %v154, %v166
    %v518 = vunpack.c.l.s4 1983009808
    %v519 = vunpack.c.0.s8 %v518
    %v520 = vlaneseq
    %v521 = vshrl.u32 %v520, 7
    %v522 = vsub.s32 %v519, %v521
    %v523 = vrot.slane %v515, %v522
    %v525 = vunpack.c.l.s4 1983009808
    %v526 = vunpack.c.0.s8 %v525
    %v527 = vlaneseq
    %v528 = vshrl.u32 %v527, 7
    %v529 = vsub.s32 %v526, %v528
    %v530 = vrot.slane %v516, %v529
    %v531 = vcombine.low %v160, %v172
    %v532 = vcombine.high %v160, %v172
    %v534 = vunpack.c.l.s4 1983009808
    %v535 = vunpack.c.0.s8 %v534
    %v536 = vlaneseq
    %v537 = vshrl.u32 %v536, 7
    %v538 = vsub.s32 %v535, %v537
    %v539 = vrot.slane %v531, %v538
    %v541 = vunpack.c.l.s4 1983009808
    %v542 = vunpack.c.0.s8 %v541
    %v543 = vlaneseq
    %v544 = vshrl.u32 %v543, 7
    %v545 = vsub.s32 %v542, %v544
    %v546 = vrot.slane %v532, %v545
    %v547 = vcombine.low %v523, %v539
    %v548 = vcombine.high %v523, %v539
    %v550 = vunpack.c.l.s4 1934713408
    %v551 = vunpack.c.0.s8 %v550
    %v552 = vlaneseq
    %v553 = vshrl.u32 %v552, 7
    %v554 = vsub.s32 %v551, %v553
    %v555 = vrot.slane %v547, %v554
    %v557 = vunpack.c.l.s4 1934713408
    %v558 = vunpack.c.0.s8 %v557
    %v559 = vlaneseq
    %v560 = vshrl.u32 %v559, 7
    %v561 = vsub.s32 %v558, %v560
    %v562 = vrot.slane %v548, %v561
    %v563 = vcombine.low %v530, %v546
    %v564 = vcombine.high %v530, %v546
    %v566 = vunpack.c.l.s4 1934713408
    %v567 = vunpack.c.0.s8 %v566
    %v568 = vlaneseq
    %v569 = vshrl.u32 %v568, 7
    %v570 = vsub.s32 %v567, %v569
    %v571 = vrot.slane %v563, %v570
    %v573 = vunpack.c.l.s4 1934713408
    %v574 = vunpack.c.0.s8 %v573
    %v575 = vlaneseq
    %v576 = vshrl.u32 %v575, 7
    %v577 = vsub.s32 %v574, %v576
    %v578 = vrot.slane %v564, %v577
    %v579 = vcombine.high %v555, 0.0
    %v580 = vcombine.high %v562, 0.0
    %v581 = vcombine.high %v571, 0.0
    %v582 = vcombine.high %v578, 0.0
    %v599 = vrot.slane %v303, 1
    %v600 = vrot.slane %v304, 1
    %v601 = vrot.slane %v305, 1
    %v602 = vrot.slane %v306, 1
    %v603 = vrot.slane %v307, 1
    %v604 = vrot.slane %v308, 1
    %v605 = vrot.slane %v309, 1
    %v606 = vrot.slane %v310, 1
    %v607 = vrot.slane %v507, 1
    %v608 = vrot.slane %v508, 1
    %v609 = vrot.slane %v509, 1
    %v610 = vrot.slane %v510, 1
    %v611 = vrot.slane %v511, 1
    %v612 = vrot.slane %v512, 1
    %v613 = vrot.slane %v513, 1
    %v614 = vrot.slane %v514, 1
    %v631 = vrot.slane %v303, 2
    %v632 = vrot.slane %v304, 2
    %v633 = vrot.slane %v305, 2
    %v634 = vrot.slane %v306, 2
    %v635 = vrot.slane %v307, 2
    %v636 = vrot.slane %v308, 2
    %v637 = vrot.slane %v309, 2
    %v638 = vrot.slane %v310, 2
    %v639 = vrot.slane %v507, 2
    %v640 = vrot.slane %v508, 2
    %v641 = vrot.slane %v509, 2
    %v642 = vrot.slane %v510, 2
    %v643 = vrot.slane %v511, 2
    %v644 = vrot.slane %v512, 2
    %v645 = vrot.slane %v513, 2
    %v646 = vrot.slane %v514, 2
    %v663 = vrot.slane %v303, 3
    %v664 = vrot.slane %v304, 3
    %v665 = vrot.slane %v305, 3
    %v666 = vrot.slane %v306, 3
    %v667 = vrot.slane %v307, 3
    %v668 = vrot.slane %v308, 3
    %v669 = vrot.slane %v309, 3
    %v670 = vrot.slane %v310, 3
    %v671 = vrot.slane %v507, 3
    %v672 = vrot.slane %v508, 3
    %v673 = vrot.slane %v509, 3
    %v674 = vrot.slane %v510, 3
    %v675 = vrot.slane %v511, 3
    %v676 = vrot.slane %v512, 3
    %v677 = vrot.slane %v513, 3
    %v678 = vrot.slane %v514, 3
    %v695 = vrot.slane %v303, 4
    %v696 = vrot.slane %v304, 4
    %v697 = vrot.slane %v305, 4
    %v698 = vrot.slane %v306, 4
    %v699 = vrot.slane %v307, 4
    %v700 = vrot.slane %v308, 4
    %v701 = vrot.slane %v309, 4
    %v702 = vrot.slane %v310, 4
    %v703 = vrot.slane %v507, 4
    %v704 = vrot.slane %v508, 4
    %v705 = vrot.slane %v509, 4
    %v706 = vrot.slane %v510, 4
    %v707 = vrot.slane %v511, 4
    %v708 = vrot.slane %v512, 4
    %v709 = vrot.slane %v513, 4
    %v710 = vrot.slane %v514, 4
    %v727 = vrot.slane %v303, 5
    %v728 = vrot.slane %v304, 5
    %v729 = vrot.slane %v305, 5
    %v730 = vrot.slane %v306, 5
    %v731 = vrot.slane %v307, 5
    %v732 = vrot.slane %v308, 5
    %v733 = vrot.slane %v309, 5
    %v734 = vrot.slane %v310, 5
    %v735 = vrot.slane %v507, 5
    %v736 = vrot.slane %v508, 5
    %v737 = vrot.slane %v509, 5
    %v738 = vrot.slane %v510, 5
    %v739 = vrot.slane %v511, 5
    %v740 = vrot.slane %v512, 5
    %v741 = vrot.slane %v513, 5
    %v742 = vrot.slane %v514, 5
    %v759 = vrot.slane %v303, 6
    %v760 = vrot.slane %v304, 6
    %v761 = vrot.slane %v305, 6
    %v762 = vrot.slane %v306, 6
    %v763 = vrot.slane %v307, 6
    %v764 = vrot.slane %v308, 6
    %v765 = vrot.slane %v309, 6
    %v766 = vrot.slane %v310, 6
    %v767 = vrot.slane %v507, 6
    %v768 = vrot.slane %v508, 6
    %v769 = vrot.slane %v509, 6
    %v770 = vrot.slane %v510, 6
    %v771 = vrot.slane %v511, 6
    %v772 = vrot.slane %v512, 6
    %v773 = vrot.slane %v513, 6
    %v774 = vrot.slane %v514, 6
    %v791 = vrot.slane %v303, 7
    %v792 = vrot.slane %v304, 7
    %v793 = vrot.slane %v305, 7
    %v794 = vrot.slane %v306, 7
    %v795 = vrot.slane %v307, 7
    %v796 = vrot.slane %v308, 7
    %v797 = vrot.slane %v309, 7
    %v798 = vrot.slane %v310, 7
    %v799 = vrot.slane %v507, 7
    %v800 = vrot.slane %v508, 7
    %v801 = vrot.slane %v509, 7
    %v802 = vrot.slane %v510, 7
    %v803 = vrot.slane %v511, 7
    %v804 = vrot.slane %v512, 7
    %v805 = vrot.slane %v513, 7
    %v806 = vrot.slane %v514, 7
    %v839 = vrot.slane %v351, 1
    %v840 = vrot.slane %v375, 1
    %v841 = vrot.slane %v358, 1
    %v842 = vrot.slane %v376, 1
    %v843 = vrot.slane %v367, 1
    %v844 = vrot.slane %v377, 1
    %v845 = vrot.slane %v374, 1
    %v846 = vrot.slane %v378, 1
    %v847 = vrot.slane %v555, 1
    %v848 = vrot.slane %v579, 1
    %v849 = vrot.slane %v562, 1
    %v850 = vrot.slane %v580, 1
    %v851 = vrot.slane %v571, 1
    %v852 = vrot.slane %v581, 1
    %v853 = vrot.slane %v578, 1
    %v854 = vrot.slane %v582, 1
    %v871 = vrot.slane %v351, 2
    %v872 = vrot.slane %v375, 2
    %v873 = vrot.slane %v358, 2
    %v874 = vrot.slane %v376, 2
    %v875 = vrot.slane %v367, 2
    %v876 = vrot.slane %v377, 2
    %v877 = vrot.slane %v374, 2
    %v878 = vrot.slane %v378, 2
    %v879 = vrot.slane %v555, 2
    %v880 = vrot.slane %v579, 2
    %v881 = vrot.slane %v562, 2
    %v882 = vrot.slane %v580, 2
    %v883 = vrot.slane %v571, 2
    %v884 = vrot.slane %v581, 2
    %v885 = vrot.slane %v578, 2
    %v886 = vrot.slane %v582, 2
    %v903 = vrot.slane %v351, 3
    %v904 = vrot.slane %v375, 3
    %v905 = vrot.slane %v358, 3
    %v906 = vrot.slane %v376, 3
    %v907 = vrot.slane %v367, 3
    %v908 = vrot.slane %v377, 3
    %v909 = vrot.slane %v374, 3
    %v910 = vrot.slane %v378, 3
    %v911 = vrot.slane %v555, 3
    %v912 = vrot.slane %v579, 3
    %v913 = vrot.slane %v562, 3
    %v914 = vrot.slane %v580, 3
    %v915 = vrot.slane %v571, 3
    %v916 = vrot.slane %v581, 3
    %v917 = vrot.slane %v578, 3
    %v918 = vrot.slane %v582, 3
    %v935 = vpack.c.bf16 %v303, %v303
    %v936 = vpack.c.bf16 %v304, %v304
    %v937 = vpack.c.bf16 %v305, %v305
    %v938 = vpack.c.bf16 %v306, %v306
    %v939 = vpack.c.bf16 %v307, %v307
    %v940 = vpack.c.bf16 %v308, %v308
    %v941 = vpack.c.bf16 %v309, %v309
    %v942 = vpack.c.bf16 %v310, %v310
    %v943 = vpack.c.bf16 %v507, %v507
    %v944 = vpack.c.bf16 %v508, %v508
    %v945 = vpack.c.bf16 %v509, %v509
    %v946 = vpack.c.bf16 %v510, %v510
    %v947 = vpack.c.bf16 %v511, %v511
    %v948 = vpack.c.bf16 %v512, %v512
    %v949 = vpack.c.bf16 %v513, %v513
    %v950 = vpack.c.bf16 %v514, %v514
    %v951 = vpack.c.bf16 %v599, %v599
    %v952 = vpack.c.bf16 %v600, %v600
    %v953 = vpack.c.bf16 %v601, %v601
    %v954 = vpack.c.bf16 %v602, %v602
    %v955 = vpack.c.bf16 %v603, %v603
    %v956 = vpack.c.bf16 %v604, %v604
    %v957 = vpack.c.bf16 %v605, %v605
    %v958 = vpack.c.bf16 %v606, %v606
    %v959 = vpack.c.bf16 %v607, %v607
    %v960 = vpack.c.bf16 %v608, %v608
    %v961 = vpack.c.bf16 %v609, %v609
    %v962 = vpack.c.bf16 %v610, %v610
    %v963 = vpack.c.bf16 %v611, %v611
    %v964 = vpack.c.bf16 %v612, %v612
    %v965 = vpack.c.bf16 %v613, %v613
    %v966 = vpack.c.bf16 %v614, %v614
    %v967 = vpack.c.bf16 %v631, %v631
    %v968 = vpack.c.bf16 %v632, %v632
    %v969 = vpack.c.bf16 %v633, %v633
    %v970 = vpack.c.bf16 %v634, %v634
    %v971 = vpack.c.bf16 %v635, %v635
    %v972 = vpack.c.bf16 %v636, %v636
    %v973 = vpack.c.bf16 %v637, %v637
    %v974 = vpack.c.bf16 %v638, %v638
    %v975 = vpack.c.bf16 %v639, %v639
    %v976 = vpack.c.bf16 %v640, %v640
    %v977 = vpack.c.bf16 %v641, %v641
    %v978 = vpack.c.bf16 %v642, %v642
    %v979 = vpack.c.bf16 %v643, %v643
    %v980 = vpack.c.bf16 %v644, %v644
    %v981 = vpack.c.bf16 %v645, %v645
    %v982 = vpack.c.bf16 %v646, %v646
    %v983 = vpack.c.bf16 %v663, %v663
    %v984 = vpack.c.bf16 %v664, %v664
    %v985 = vpack.c.bf16 %v665, %v665
    %v986 = vpack.c.bf16 %v666, %v666
    %v987 = vpack.c.bf16 %v667, %v667
    %v988 = vpack.c.bf16 %v668, %v668
    %v989 = vpack.c.bf16 %v669, %v669
    %v990 = vpack.c.bf16 %v670, %v670
    %v991 = vpack.c.bf16 %v671, %v671
    %v992 = vpack.c.bf16 %v672, %v672
    %v993 = vpack.c.bf16 %v673, %v673
    %v994 = vpack.c.bf16 %v674, %v674
    %v995 = vpack.c.bf16 %v675, %v675
    %v996 = vpack.c.bf16 %v676, %v676
    %v997 = vpack.c.bf16 %v677, %v677
    %v998 = vpack.c.bf16 %v678, %v678
    %v999 = vpack.c.bf16 %v695, %v695
    %v1000 = vpack.c.bf16 %v696, %v696
    %v1001 = vpack.c.bf16 %v697, %v697
    %v1002 = vpack.c.bf16 %v698, %v698
    %v1003 = vpack.c.bf16 %v699, %v699
    %v1004 = vpack.c.bf16 %v700, %v700
    %v1005 = vpack.c.bf16 %v701, %v701
    %v1006 = vpack.c.bf16 %v702, %v702
    %v1007 = vpack.c.bf16 %v703, %v703
    %v1008 = vpack.c.bf16 %v704, %v704
    %v1009 = vpack.c.bf16 %v705, %v705
    %v1010 = vpack.c.bf16 %v706, %v706
    %v1011 = vpack.c.bf16 %v707, %v707
    %v1012 = vpack.c.bf16 %v708, %v708
    %v1013 = vpack.c.bf16 %v709, %v709
    %v1014 = vpack.c.bf16 %v710, %v710
    %v1015 = vpack.c.bf16 %v727, %v727
    %v1016 = vpack.c.bf16 %v728, %v728
    %v1017 = vpack.c.bf16 %v729, %v729
    %v1018 = vpack.c.bf16 %v730, %v730
    %v1019 = vpack.c.bf16 %v731, %v731
    %v1020 = vpack.c.bf16 %v732, %v732
    %v1021 = vpack.c.bf16 %v733, %v733
    %v1022 = vpack.c.bf16 %v734, %v734
    %v1023 = vpack.c.bf16 %v735, %v735
    %v1024 = vpack.c.bf16 %v736, %v736
    %v1025 = vpack.c.bf16 %v737, %v737
    %v1026 = vpack.c.bf16 %v738, %v738
    %v1027 = vpack.c.bf16 %v739, %v739
    %v1028 = vpack.c.bf16 %v740, %v740
    %v1029 = vpack.c.bf16 %v741, %v741
    %v1030 = vpack.c.bf16 %v742, %v742
    %v1031 = vpack.c.bf16 %v759, %v759
    %v1032 = vpack.c.bf16 %v760, %v760
    %v1033 = vpack.c.bf16 %v761, %v761
    %v1034 = vpack.c.bf16 %v762, %v762
    %v1035 = vpack.c.bf16 %v763, %v763
    %v1036 = vpack.c.bf16 %v764, %v764
    %v1037 = vpack.c.bf16 %v765, %v765
    %v1038 = vpack.c.bf16 %v766, %v766
    %v1039 = vpack.c.bf16 %v767, %v767
    %v1040 = vpack.c.bf16 %v768, %v768
    %v1041 = vpack.c.bf16 %v769, %v769
    %v1042 = vpack.c.bf16 %v770, %v770
    %v1043 = vpack.c.bf16 %v771, %v771
    %v1044 = vpack.c.bf16 %v772, %v772
    %v1045 = vpack.c.bf16 %v773, %v773
    %v1046 = vpack.c.bf16 %v774, %v774
    %v1047 = vpack.c.bf16 %v791, %v791
    %v1048 = vpack.c.bf16 %v792, %v792
    %v1049 = vpack.c.bf16 %v793, %v793
    %v1050 = vpack.c.bf16 %v794, %v794
    %v1051 = vpack.c.bf16 %v795, %v795
    %v1052 = vpack.c.bf16 %v796, %v796
    %v1053 = vpack.c.bf16 %v797, %v797
    %v1054 = vpack.c.bf16 %v798, %v798
    %v1055 = vpack.c.bf16 %v799, %v799
    %v1056 = vpack.c.bf16 %v800, %v800
    %v1057 = vpack.c.bf16 %v801, %v801
    %v1058 = vpack.c.bf16 %v802, %v802
    %v1059 = vpack.c.bf16 %v803, %v803
    %v1060 = vpack.c.bf16 %v804, %v804
    %v1061 = vpack.c.bf16 %v805, %v805
    %v1062 = vpack.c.bf16 %v806, %v806
    %v1063 = vpack.c.bf16 %v351, %v351
    %v1064 = vpack.c.bf16 %v375, %v375
    %v1065 = vpack.c.bf16 %v358, %v358
    %v1066 = vpack.c.bf16 %v376, %v376
    %v1067 = vpack.c.bf16 %v367, %v367
    %v1068 = vpack.c.bf16 %v377, %v377
    %v1069 = vpack.c.bf16 %v374, %v374
    %v1070 = vpack.c.bf16 %v378, %v378
    %v1071 = vpack.c.bf16 %v555, %v555
    %v1072 = vpack.c.bf16 %v579, %v579
    %v1073 = vpack.c.bf16 %v562, %v562
    %v1074 = vpack.c.bf16 %v580, %v580
    %v1075 = vpack.c.bf16 %v571, %v571
    %v1076 = vpack.c.bf16 %v581, %v581
    %v1077 = vpack.c.bf16 %v578, %v578
    %v1078 = vpack.c.bf16 %v582, %v582
    %v1079 = vpack.c.bf16 %v839, %v839
    %v1080 = vpack.c.bf16 %v840, %v840
    %v1081 = vpack.c.bf16 %v841, %v841
    %v1082 = vpack.c.bf16 %v842, %v842
    %v1083 = vpack.c.bf16 %v843, %v843
    %v1084 = vpack.c.bf16 %v844, %v844
    %v1085 = vpack.c.bf16 %v845, %v845
    %v1086 = vpack.c.bf16 %v846, %v846
    %v1087 = vpack.c.bf16 %v847, %v847
    %v1088 = vpack.c.bf16 %v848, %v848
    %v1089 = vpack.c.bf16 %v849, %v849
    %v1090 = vpack.c.bf16 %v850, %v850
    %v1091 = vpack.c.bf16 %v851, %v851
    %v1092 = vpack.c.bf16 %v852, %v852
    %v1093 = vpack.c.bf16 %v853, %v853
    %v1094 = vpack.c.bf16 %v854, %v854
    %v1095 = vpack.c.bf16 %v871, %v871
    %v1096 = vpack.c.bf16 %v872, %v872
    %v1097 = vpack.c.bf16 %v873, %v873
    %v1098 = vpack.c.bf16 %v874, %v874
    %v1099 = vpack.c.bf16 %v875, %v875
    %v1100 = vpack.c.bf16 %v876, %v876
    %v1101 = vpack.c.bf16 %v877, %v877
    %v1102 = vpack.c.bf16 %v878, %v878
    %v1103 = vpack.c.bf16 %v879, %v879
    %v1104 = vpack.c.bf16 %v880, %v880
    %v1105 = vpack.c.bf16 %v881, %v881
    %v1106 = vpack.c.bf16 %v882, %v882
    %v1107 = vpack.c.bf16 %v883, %v883
    %v1108 = vpack.c.bf16 %v884, %v884
    %v1109 = vpack.c.bf16 %v885, %v885
    %v1110 = vpack.c.bf16 %v886, %v886
    %v1111 = vpack.c.bf16 %v903, %v903
    %v1112 = vpack.c.bf16 %v904, %v904
    %v1113 = vpack.c.bf16 %v905, %v905
    %v1114 = vpack.c.bf16 %v906, %v906
    %v1115 = vpack.c.bf16 %v907, %v907
    %v1116 = vpack.c.bf16 %v908, %v908
    %v1117 = vpack.c.bf16 %v909, %v909
    %v1118 = vpack.c.bf16 %v910, %v910
    %v1119 = vpack.c.bf16 %v911, %v911
    %v1120 = vpack.c.bf16 %v912, %v912
    %v1121 = vpack.c.bf16 %v913, %v913
    %v1122 = vpack.c.bf16 %v914, %v914
    %v1123 = vpack.c.bf16 %v915, %v915
    %v1124 = vpack.c.bf16 %v916, %v916
    %v1125 = vpack.c.bf16 %v917, %v917
    %v1126 = vpack.c.bf16 %v918, %v918
    %v1135 = vunpack.c.l.b16 %v935
    %v1136 = vunpack.c.l.b16 %v936
    %v1137 = vunpack.c.l.b16 %v937
    %v1138 = vunpack.c.l.b16 %v938
    %v1139 = vunpack.c.l.b16 %v939
    %v1140 = vunpack.c.l.b16 %v940
    %v1141 = vunpack.c.l.b16 %v941
    %v1142 = vunpack.c.l.b16 %v942
    %v1143 = vrot.slane %v1136, 7
    %vm1144 = vcmask 1041409
    %v1145 = vsel %vm1144, %v1143, %v1135
    %v1146 = vrot.slane %v1137, 6
    %vm1147 = vcmask 1042434
    %v1148 = vsel %vm1147, %v1146, %v1145
    %v1149 = vrot.slane %v1138, 5
    %vm1150 = vcmask 1043459
    %v1151 = vsel %vm1150, %v1149, %v1148
    %v1152 = vrot.slane %v1139, 4
    %vm1153 = vcmask 1044484
    %v1154 = vsel %vm1153, %v1152, %v1151
    %v1155 = vrot.slane %v1140, 3
    %vm1156 = vcmask 1045509
    %v1157 = vsel %vm1156, %v1155, %v1154
    %v1158 = vrot.slane %v1141, 2
    %vm1159 = vcmask 1046534
    %v1160 = vsel %vm1159, %v1158, %v1157
    %v1161 = vrot.slane %v1142, 1
    %vm1162 = vcmask 1047559
    %v1163 = vsel %vm1162, %v1161, %v1160
    %v1164 = vpack.c.b16 %v1163, %v1163
    %v1173 = vunpack.c.l.b16 %v999
    %v1174 = vunpack.c.l.b16 %v1000
    %v1175 = vunpack.c.l.b16 %v1001
    %v1176 = vunpack.c.l.b16 %v1002
    %v1177 = vunpack.c.l.b16 %v1003
    %v1178 = vunpack.c.l.b16 %v1004
    %v1179 = vunpack.c.l.b16 %v1005
    %v1180 = vunpack.c.l.b16 %v1006
    %v1181 = vrot.slane %v1174, 7
    %v1182 = vsel %vm1144, %v1181, %v1173
    %v1183 = vrot.slane %v1175, 6
    %v1184 = vsel %vm1147, %v1183, %v1182
    %v1185 = vrot.slane %v1176, 5
    %v1186 = vsel %vm1150, %v1185, %v1184
    %v1187 = vrot.slane %v1177, 4
    %v1188 = vsel %vm1153, %v1187, %v1186
    %v1189 = vrot.slane %v1178, 3
    %v1190 = vsel %vm1156, %v1189, %v1188
    %v1191 = vrot.slane %v1179, 2
    %v1192 = vsel %vm1159, %v1191, %v1190
    %v1193 = vrot.slane %v1180, 1
    %v1194 = vsel %vm1162, %v1193, %v1192
    %v1195 = vpack.c.b16 %v1194, %v1194
    %vm1196 = vcmask 64512
    %v1198 = vsel %vm1196, %v1164, 0
    %v1201 = vsel %vm1196, %v1195, 0
    %1203 = vmatprep.subr.bf16.mxu0 0
    %1204 = vmatpush1.bf16.xpose.msra.mxu0 %v1201
    %1205 = vmatprep.subr.bf16.mxu0 0
    %1206 = vmatpush1.bf16.xpose.msra.mxu0 0
    %1207 = vmatprep.subr.bf16.mxu0 0
    %1208 = vmatpush1.bf16.xpose.msra.mxu0 0
    %1209 = vmatprep.subr.bf16.mxu0 0
    %1210 = vmatpush1.bf16.xpose.msra.mxu0 0
    %1211 = vmatprep.subr.bf16.mxu0 0
    %1212 = vmatpush1.bf16.xpose.msra.mxu0 0
    %1213 = vmatprep.subr.bf16.mxu0 0
    %1214 = vmatpush1.bf16.xpose.msra.mxu0 0
    %1215 = vmatprep.subr.bf16.mxu0 0
    %1216 = vmatpush1.bf16.xpose.msra.mxu0 0
    %1217 = vmatprep.subr.bf16.mxu0 0
    %1218 = vmatpush1.bf16.xpose.msra.mxu0 0
    %1219 = vmatprep.subr.bf16.mxu0 0
    %1220 = vmatpush1.bf16.xpose.msra.mxu0 0
    %1221 = vmatprep.subr.bf16.mxu0 0
    %1222 = vmatpush1.bf16.xpose.msra.mxu0 0
    %1223 = vmatprep.subr.bf16.mxu0 0
    %1224 = vmatpush1.bf16.xpose.msra.mxu0 0
    %1225 = vmatprep.subr.bf16.mxu0 0
    %1226 = vmatpush1.bf16.xpose.msra.mxu0 0
    %1227 = vmatprep.subr.bf16.mxu0 0
    %1228 = vmatpush1.bf16.xpose.msra.mxu0 0
    %1229 = vmatprep.subr.bf16.mxu0 0
    %1230 = vmatpush1.bf16.xpose.msra.mxu0 0
    %1231 = vmatprep.subr.bf16.mxu0 0
    %1232 = vmatpush1.bf16.xpose.msra.mxu0 0
    %1233 = vmatprep.subr.bf16.mxu0 0
    %1234 = vmatpush1.bf16.xpose.msra.mxu0 0
    %1235 = vmatprep.mubr.bf16.mxu0 0
    %1236 = vmatmul.mubr.bf16.gmra.mrb[0].mxu0 %v1198
    %v1237 = vpop.f32.mrb[0].mxu0
    %v1238 = vadd.f32 0.0, %v1237
    %v1239 = vpop.f32.mrb[0].mxu0
    %v1240 = vpop.f32.mrb[0].mxu0
    %v1241 = vpop.f32.mrb[0].mxu0
    %1242 = vdwg.mxu0
    %v1251 = vunpack.c.l.b16 %v943
    %v1252 = vunpack.c.l.b16 %v944
    %v1253 = vunpack.c.l.b16 %v945
    %v1254 = vunpack.c.l.b16 %v946
    %v1255 = vunpack.c.l.b16 %v947
    %v1256 = vunpack.c.l.b16 %v948
    %v1257 = vunpack.c.l.b16 %v949
    %v1258 = vunpack.c.l.b16 %v950
    %v1259 = vrot.slane %v1252, 7
    %v1260 = vsel %vm1144, %v1259, %v1251
    %v1261 = vrot.slane %v1253, 6
    %v1262 = vsel %vm1147, %v1261, %v1260
    %v1263 = vrot.slane %v1254, 5
    %v1264 = vsel %vm1150, %v1263, %v1262
    %v1265 = vrot.slane %v1255, 4
    %v1266 = vsel %vm1153, %v1265, %v1264
    %v1267 = vrot.slane %v1256, 3
    %v1268 = vsel %vm1156, %v1267, %v1266
    %v1269 = vrot.slane %v1257, 2
    %v1270 = vsel %vm1159, %v1269, %v1268
    %v1271 = vrot.slane %v1258, 1
    %v1272 = vsel %vm1162, %v1271, %v1270
    %v1273 = vpack.c.b16 %v1272, %v1272
    %v1282 = vunpack.c.l.b16 %v1007
    %v1283 = vunpack.c.l.b16 %v1008
    %v1284 = vunpack.c.l.b16 %v1009
    %v1285 = vunpack.c.l.b16 %v1010
    %v1286 = vunpack.c.l.b16 %v1011
    %v1287 = vunpack.c.l.b16 %v1012
    %v1288 = vunpack.c.l.b16 %v1013
    %v1289 = vunpack.c.l.b16 %v1014
    %v1290 = vrot.slane %v1283, 7
    %v1291 = vsel %vm1144, %v1290, %v1282
    %v1292 = vrot.slane %v1284, 6
    %v1293 = vsel %vm1147, %v1292, %v1291
    %v1294 = vrot.slane %v1285, 5
    %v1295 = vsel %vm1150, %v1294, %v1293
    %v1296 = vrot.slane %v1286, 4
    %v1297 = vsel %vm1153, %v1296, %v1295
    %v1298 = vrot.slane %v1287, 3
    %v1299 = vsel %vm1156, %v1298, %v1297
    %v1300 = vrot.slane %v1288, 2
    %v1301 = vsel %vm1159, %v1300, %v1299
    %v1302 = vrot.slane %v1289, 1
    %v1303 = vsel %vm1162, %v1302, %v1301
    %v1304 = vpack.c.b16 %v1303, %v1303
    %v1306 = vsel %vm1196, %v1273, 0
    %v1309 = vsel %vm1196, %v1304, 0
    %1311 = vmatprep.subr.bf16.mxu0 0
    %1312 = vmatpush1.bf16.xpose.msra.mxu0 %v1309
    %1313 = vmatprep.subr.bf16.mxu0 0
    %1314 = vmatpush1.bf16.xpose.msra.mxu0 0
    %1315 = vmatprep.subr.bf16.mxu0 0
    %1316 = vmatpush1.bf16.xpose.msra.mxu0 0
    %1317 = vmatprep.subr.bf16.mxu0 0
    %1318 = vmatpush1.bf16.xpose.msra.mxu0 0
    %1319 = vmatprep.subr.bf16.mxu0 0
    %1320 = vmatpush1.bf16.xpose.msra.mxu0 0
    %1321 = vmatprep.subr.bf16.mxu0 0
    %1322 = vmatpush1.bf16.xpose.msra.mxu0 0
    %1323 = vmatprep.subr.bf16.mxu0 0
    %1324 = vmatpush1.bf16.xpose.msra.mxu0 0
    %1325 = vmatprep.subr.bf16.mxu0 0
    %1326 = vmatpush1.bf16.xpose.msra.mxu0 0
    %1327 = vmatprep.subr.bf16.mxu0 0
    %1328 = vmatpush1.bf16.xpose.msra.mxu0 0
    %1329 = vmatprep.subr.bf16.mxu0 0
    %1330 = vmatpush1.bf16.xpose.msra.mxu0 0
    %1331 = vmatprep.subr.bf16.mxu0 0
    %1332 = vmatpush1.bf16.xpose.msra.mxu0 0
    %1333 = vmatprep.subr.bf16.mxu0 0
    %1334 = vmatpush1.bf16.xpose.msra.mxu0 0
    %1335 = vmatprep.subr.bf16.mxu0 0
    %1336 = vmatpush1.bf16.xpose.msra.mxu0 0
    %1337 = vmatprep.subr.bf16.mxu0 0
    %1338 = vmatpush1.bf16.xpose.msra.mxu0 0
    %1339 = vmatprep.subr.bf16.mxu0 0
    %1340 = vmatpush1.bf16.xpose.msra.mxu0 0
    %1341 = vmatprep.subr.bf16.mxu0 0
    %1342 = vmatpush1.bf16.xpose.msra.mxu0 0
    %1343 = vmatprep.mubr.bf16.mxu0 0
    %1344 = vmatmul.mubr.bf16.gmra.mrb[0].mxu0 %v1306
    %v1345 = vpop.f32.mrb[0].mxu0
    %v1346 = vadd.f32 0.0, %v1345
    %v1347 = vpop.f32.mrb[0].mxu0
    %v1348 = vpop.f32.mrb[0].mxu0
    %v1349 = vpop.f32.mrb[0].mxu0
    %1350 = vdwg.mxu0
    %v1359 = vunpack.c.l.b16 %v951
    %v1360 = vunpack.c.l.b16 %v952
    %v1361 = vunpack.c.l.b16 %v953
    %v1362 = vunpack.c.l.b16 %v954
    %v1363 = vunpack.c.l.b16 %v955
    %v1364 = vunpack.c.l.b16 %v956
    %v1365 = vunpack.c.l.b16 %v957
    %v1366 = vunpack.c.l.b16 %v958
    %v1367 = vrot.slane %v1360, 7
    %v1368 = vsel %vm1144, %v1367, %v1359
    %v1369 = vrot.slane %v1361, 6
    %v1370 = vsel %vm1147, %v1369, %v1368
    %v1371 = vrot.slane %v1362, 5
    %v1372 = vsel %vm1150, %v1371, %v1370
    %v1373 = vrot.slane %v1363, 4
    %v1374 = vsel %vm1153, %v1373, %v1372
    %v1375 = vrot.slane %v1364, 3
    %v1376 = vsel %vm1156, %v1375, %v1374
    %v1377 = vrot.slane %v1365, 2
    %v1378 = vsel %vm1159, %v1377, %v1376
    %v1379 = vrot.slane %v1366, 1
    %v1380 = vsel %vm1162, %v1379, %v1378
    %v1381 = vpack.c.b16 %v1380, %v1380
    %v1390 = vunpack.c.l.b16 %v1015
    %v1391 = vunpack.c.l.b16 %v1016
    %v1392 = vunpack.c.l.b16 %v1017
    %v1393 = vunpack.c.l.b16 %v1018
    %v1394 = vunpack.c.l.b16 %v1019
    %v1395 = vunpack.c.l.b16 %v1020
    %v1396 = vunpack.c.l.b16 %v1021
    %v1397 = vunpack.c.l.b16 %v1022
    %v1398 = vrot.slane %v1391, 7
    %v1399 = vsel %vm1144, %v1398, %v1390
    %v1400 = vrot.slane %v1392, 6
    %v1401 = vsel %vm1147, %v1400, %v1399
    %v1402 = vrot.slane %v1393, 5
    %v1403 = vsel %vm1150, %v1402, %v1401
    %v1404 = vrot.slane %v1394, 4
    %v1405 = vsel %vm1153, %v1404, %v1403
    %v1406 = vrot.slane %v1395, 3
    %v1407 = vsel %vm1156, %v1406, %v1405
    %v1408 = vrot.slane %v1396, 2
    %v1409 = vsel %vm1159, %v1408, %v1407
    %v1410 = vrot.slane %v1397, 1
    %v1411 = vsel %vm1162, %v1410, %v1409
    %v1412 = vpack.c.b16 %v1411, %v1411
    %v1414 = vsel %vm1196, %v1381, 0
    %v1417 = vsel %vm1196, %v1412, 0
    %1419 = vmatprep.subr.bf16.mxu0 0
    %1420 = vmatpush1.bf16.xpose.msra.mxu0 %v1417
    %1421 = vmatprep.subr.bf16.mxu0 0
    %1422 = vmatpush1.bf16.xpose.msra.mxu0 0
    %1423 = vmatprep.subr.bf16.mxu0 0
    %1424 = vmatpush1.bf16.xpose.msra.mxu0 0
    %1425 = vmatprep.subr.bf16.mxu0 0
    %1426 = vmatpush1.bf16.xpose.msra.mxu0 0
    %1427 = vmatprep.subr.bf16.mxu0 0
    %1428 = vmatpush1.bf16.xpose.msra.mxu0 0
    %1429 = vmatprep.subr.bf16.mxu0 0
    %1430 = vmatpush1.bf16.xpose.msra.mxu0 0
    %1431 = vmatprep.subr.bf16.mxu0 0
    %1432 = vmatpush1.bf16.xpose.msra.mxu0 0
    %1433 = vmatprep.subr.bf16.mxu0 0
    %1434 = vmatpush1.bf16.xpose.msra.mxu0 0
    %1435 = vmatprep.subr.bf16.mxu0 0
    %1436 = vmatpush1.bf16.xpose.msra.mxu0 0
    %1437 = vmatprep.subr.bf16.mxu0 0
    %1438 = vmatpush1.bf16.xpose.msra.mxu0 0
    %1439 = vmatprep.subr.bf16.mxu0 0
    %1440 = vmatpush1.bf16.xpose.msra.mxu0 0
    %1441 = vmatprep.subr.bf16.mxu0 0
    %1442 = vmatpush1.bf16.xpose.msra.mxu0 0
    %1443 = vmatprep.subr.bf16.mxu0 0
    %1444 = vmatpush1.bf16.xpose.msra.mxu0 0
    %1445 = vmatprep.subr.bf16.mxu0 0
    %1446 = vmatpush1.bf16.xpose.msra.mxu0 0
    %1447 = vmatprep.subr.bf16.mxu0 0
    %1448 = vmatpush1.bf16.xpose.msra.mxu0 0
    %1449 = vmatprep.subr.bf16.mxu0 0
    %1450 = vmatpush1.bf16.xpose.msra.mxu0 0
    %1451 = vmatprep.mubr.bf16.mxu0 0
    %1452 = vmatmul.mubr.bf16.gmra.mrb[0].mxu0 %v1414
    %v1453 = vpop.f32.mrb[0].mxu0
    %v1454 = vadd.f32 0.0, %v1453
    %v1455 = vpop.f32.mrb[0].mxu0
    %v1456 = vpop.f32.mrb[0].mxu0
    %v1457 = vpop.f32.mrb[0].mxu0
    %1458 = vdwg.mxu0
    %v1467 = vunpack.c.l.b16 %v959
    %v1468 = vunpack.c.l.b16 %v960
    %v1469 = vunpack.c.l.b16 %v961
    %v1470 = vunpack.c.l.b16 %v962
    %v1471 = vunpack.c.l.b16 %v963
    %v1472 = vunpack.c.l.b16 %v964
    %v1473 = vunpack.c.l.b16 %v965
    %v1474 = vunpack.c.l.b16 %v966
    %v1475 = vrot.slane %v1468, 7
    %v1476 = vsel %vm1144, %v1475, %v1467
    %v1477 = vrot.slane %v1469, 6
    %v1478 = vsel %vm1147, %v1477, %v1476
    %v1479 = vrot.slane %v1470, 5
    %v1480 = vsel %vm1150, %v1479, %v1478
    %v1481 = vrot.slane %v1471, 4
    %v1482 = vsel %vm1153, %v1481, %v1480
    %v1483 = vrot.slane %v1472, 3
    %v1484 = vsel %vm1156, %v1483, %v1482
    %v1485 = vrot.slane %v1473, 2
    %v1486 = vsel %vm1159, %v1485, %v1484
    %v1487 = vrot.slane %v1474, 1
    %v1488 = vsel %vm1162, %v1487, %v1486
    %v1489 = vpack.c.b16 %v1488, %v1488
    %v1498 = vunpack.c.l.b16 %v1023
    %v1499 = vunpack.c.l.b16 %v1024
    %v1500 = vunpack.c.l.b16 %v1025
    %v1501 = vunpack.c.l.b16 %v1026
    %v1502 = vunpack.c.l.b16 %v1027
    %v1503 = vunpack.c.l.b16 %v1028
    %v1504 = vunpack.c.l.b16 %v1029
    %v1505 = vunpack.c.l.b16 %v1030
    %v1506 = vrot.slane %v1499, 7
    %v1507 = vsel %vm1144, %v1506, %v1498
    %v1508 = vrot.slane %v1500, 6
    %v1509 = vsel %vm1147, %v1508, %v1507
    %v1510 = vrot.slane %v1501, 5
    %v1511 = vsel %vm1150, %v1510, %v1509
    %v1512 = vrot.slane %v1502, 4
    %v1513 = vsel %vm1153, %v1512, %v1511
    %v1514 = vrot.slane %v1503, 3
    %v1515 = vsel %vm1156, %v1514, %v1513
    %v1516 = vrot.slane %v1504, 2
    %v1517 = vsel %vm1159, %v1516, %v1515
    %v1518 = vrot.slane %v1505, 1
    %v1519 = vsel %vm1162, %v1518, %v1517
    %v1520 = vpack.c.b16 %v1519, %v1519
    %v1522 = vsel %vm1196, %v1489, 0
    %v1525 = vsel %vm1196, %v1520, 0
    %1527 = vmatprep.subr.bf16.mxu0 0
    %1528 = vmatpush1.bf16.xpose.msra.mxu0 %v1525
    %1529 = vmatprep.subr.bf16.mxu0 0
    %1530 = vmatpush1.bf16.xpose.msra.mxu0 0
    %1531 = vmatprep.subr.bf16.mxu0 0
    %1532 = vmatpush1.bf16.xpose.msra.mxu0 0
    %1533 = vmatprep.subr.bf16.mxu0 0
    %1534 = vmatpush1.bf16.xpose.msra.mxu0 0
    %1535 = vmatprep.subr.bf16.mxu0 0
    %1536 = vmatpush1.bf16.xpose.msra.mxu0 0
    %1537 = vmatprep.subr.bf16.mxu0 0
    %1538 = vmatpush1.bf16.xpose.msra.mxu0 0
    %1539 = vmatprep.subr.bf16.mxu0 0
    %1540 = vmatpush1.bf16.xpose.msra.mxu0 0
    %1541 = vmatprep.subr.bf16.mxu0 0
    %1542 = vmatpush1.bf16.xpose.msra.mxu0 0
    %1543 = vmatprep.subr.bf16.mxu0 0
    %1544 = vmatpush1.bf16.xpose.msra.mxu0 0
    %1545 = vmatprep.subr.bf16.mxu0 0
    %1546 = vmatpush1.bf16.xpose.msra.mxu0 0
    %1547 = vmatprep.subr.bf16.mxu0 0
    %1548 = vmatpush1.bf16.xpose.msra.mxu0 0
    %1549 = vmatprep.subr.bf16.mxu0 0
    %1550 = vmatpush1.bf16.xpose.msra.mxu0 0
    %1551 = vmatprep.subr.bf16.mxu0 0
    %1552 = vmatpush1.bf16.xpose.msra.mxu0 0
    %1553 = vmatprep.subr.bf16.mxu0 0
    %1554 = vmatpush1.bf16.xpose.msra.mxu0 0
    %1555 = vmatprep.subr.bf16.mxu0 0
    %1556 = vmatpush1.bf16.xpose.msra.mxu0 0
    %1557 = vmatprep.subr.bf16.mxu0 0
    %1558 = vmatpush1.bf16.xpose.msra.mxu0 0
    %1559 = vmatprep.mubr.bf16.mxu0 0
    %1560 = vmatmul.mubr.bf16.gmra.mrb[0].mxu0 %v1522
    %v1561 = vpop.f32.mrb[0].mxu0
    %v1562 = vadd.f32 0.0, %v1561
    %v1563 = vpop.f32.mrb[0].mxu0
    %v1564 = vpop.f32.mrb[0].mxu0
    %v1565 = vpop.f32.mrb[0].mxu0
    %1566 = vdwg.mxu0
    %v1575 = vunpack.c.l.b16 %v967
    %v1576 = vunpack.c.l.b16 %v968
    %v1577 = vunpack.c.l.b16 %v969
    %v1578 = vunpack.c.l.b16 %v970
    %v1579 = vunpack.c.l.b16 %v971
    %v1580 = vunpack.c.l.b16 %v972
    %v1581 = vunpack.c.l.b16 %v973
    %v1582 = vunpack.c.l.b16 %v974
    %v1583 = vrot.slane %v1576, 7
    %v1584 = vsel %vm1144, %v1583, %v1575
    %v1585 = vrot.slane %v1577, 6
    %v1586 = vsel %vm1147, %v1585, %v1584
    %v1587 = vrot.slane %v1578, 5
    %v1588 = vsel %vm1150, %v1587, %v1586
    %v1589 = vrot.slane %v1579, 4
    %v1590 = vsel %vm1153, %v1589, %v1588
    %v1591 = vrot.slane %v1580, 3
    %v1592 = vsel %vm1156, %v1591, %v1590
    %v1593 = vrot.slane %v1581, 2
    %v1594 = vsel %vm1159, %v1593, %v1592
    %v1595 = vrot.slane %v1582, 1
    %v1596 = vsel %vm1162, %v1595, %v1594
    %v1597 = vpack.c.b16 %v1596, %v1596
    %v1606 = vunpack.c.l.b16 %v1031
    %v1607 = vunpack.c.l.b16 %v1032
    %v1608 = vunpack.c.l.b16 %v1033
    %v1609 = vunpack.c.l.b16 %v1034
    %v1610 = vunpack.c.l.b16 %v1035
    %v1611 = vunpack.c.l.b16 %v1036
    %v1612 = vunpack.c.l.b16 %v1037
    %v1613 = vunpack.c.l.b16 %v1038
    %v1614 = vrot.slane %v1607, 7
    %v1615 = vsel %vm1144, %v1614, %v1606
    %v1616 = vrot.slane %v1608, 6
    %v1617 = vsel %vm1147, %v1616, %v1615
    %v1618 = vrot.slane %v1609, 5
    %v1619 = vsel %vm1150, %v1618, %v1617
    %v1620 = vrot.slane %v1610, 4
    %v1621 = vsel %vm1153, %v1620, %v1619
    %v1622 = vrot.slane %v1611, 3
    %v1623 = vsel %vm1156, %v1622, %v1621
    %v1624 = vrot.slane %v1612, 2
    %v1625 = vsel %vm1159, %v1624, %v1623
    %v1626 = vrot.slane %v1613, 1
    %v1627 = vsel %vm1162, %v1626, %v1625
    %v1628 = vpack.c.b16 %v1627, %v1627
    %v1630 = vsel %vm1196, %v1597, 0
    %v1633 = vsel %vm1196, %v1628, 0
    %1635 = vmatprep.subr.bf16.mxu0 0
    %1636 = vmatpush1.bf16.xpose.msra.mxu0 %v1633
    %1637 = vmatprep.subr.bf16.mxu0 0
    %1638 = vmatpush1.bf16.xpose.msra.mxu0 0
    %1639 = vmatprep.subr.bf16.mxu0 0
    %1640 = vmatpush1.bf16.xpose.msra.mxu0 0
    %1641 = vmatprep.subr.bf16.mxu0 0
    %1642 = vmatpush1.bf16.xpose.msra.mxu0 0
    %1643 = vmatprep.subr.bf16.mxu0 0
    %1644 = vmatpush1.bf16.xpose.msra.mxu0 0
    %1645 = vmatprep.subr.bf16.mxu0 0
    %1646 = vmatpush1.bf16.xpose.msra.mxu0 0
    %1647 = vmatprep.subr.bf16.mxu0 0
    %1648 = vmatpush1.bf16.xpose.msra.mxu0 0
    %1649 = vmatprep.subr.bf16.mxu0 0
    %1650 = vmatpush1.bf16.xpose.msra.mxu0 0
    %1651 = vmatprep.subr.bf16.mxu0 0
    %1652 = vmatpush1.bf16.xpose.msra.mxu0 0
    %1653 = vmatprep.subr.bf16.mxu0 0
    %1654 = vmatpush1.bf16.xpose.msra.mxu0 0
    %1655 = vmatprep.subr.bf16.mxu0 0
    %1656 = vmatpush1.bf16.xpose.msra.mxu0 0
    %1657 = vmatprep.subr.bf16.mxu0 0
    %1658 = vmatpush1.bf16.xpose.msra.mxu0 0
    %1659 = vmatprep.subr.bf16.mxu0 0
    %1660 = vmatpush1.bf16.xpose.msra.mxu0 0
    %1661 = vmatprep.subr.bf16.mxu0 0
    %1662 = vmatpush1.bf16.xpose.msra.mxu0 0
    %1663 = vmatprep.subr.bf16.mxu0 0
    %1664 = vmatpush1.bf16.xpose.msra.mxu0 0
    %1665 = vmatprep.subr.bf16.mxu0 0
    %1666 = vmatpush1.bf16.xpose.msra.mxu0 0
    %1667 = vmatprep.mubr.bf16.mxu0 0
    %1668 = vmatmul.mubr.bf16.gmra.mrb[0].mxu0 %v1630
    %v1669 = vpop.f32.mrb[0].mxu0
    %v1670 = vadd.f32 0.0, %v1669
    %v1671 = vpop.f32.mrb[0].mxu0
    %v1672 = vpop.f32.mrb[0].mxu0
    %v1673 = vpop.f32.mrb[0].mxu0
    %1674 = vdwg.mxu0
    %v1683 = vunpack.c.l.b16 %v975
    %v1684 = vunpack.c.l.b16 %v976
    %v1685 = vunpack.c.l.b16 %v977
    %v1686 = vunpack.c.l.b16 %v978
    %v1687 = vunpack.c.l.b16 %v979
    %v1688 = vunpack.c.l.b16 %v980
    %v1689 = vunpack.c.l.b16 %v981
    %v1690 = vunpack.c.l.b16 %v982
    %v1691 = vrot.slane %v1684, 7
    %v1692 = vsel %vm1144, %v1691, %v1683
    %v1693 = vrot.slane %v1685, 6
    %v1694 = vsel %vm1147, %v1693, %v1692
    %v1695 = vrot.slane %v1686, 5
    %v1696 = vsel %vm1150, %v1695, %v1694
    %v1697 = vrot.slane %v1687, 4
    %v1698 = vsel %vm1153, %v1697, %v1696
    %v1699 = vrot.slane %v1688, 3
    %v1700 = vsel %vm1156, %v1699, %v1698
    %v1701 = vrot.slane %v1689, 2
    %v1702 = vsel %vm1159, %v1701, %v1700
    %v1703 = vrot.slane %v1690, 1
    %v1704 = vsel %vm1162, %v1703, %v1702
    %v1705 = vpack.c.b16 %v1704, %v1704
    %v1714 = vunpack.c.l.b16 %v1039
    %v1715 = vunpack.c.l.b16 %v1040
    %v1716 = vunpack.c.l.b16 %v1041
    %v1717 = vunpack.c.l.b16 %v1042
    %v1718 = vunpack.c.l.b16 %v1043
    %v1719 = vunpack.c.l.b16 %v1044
    %v1720 = vunpack.c.l.b16 %v1045
    %v1721 = vunpack.c.l.b16 %v1046
    %v1722 = vrot.slane %v1715, 7
    %v1723 = vsel %vm1144, %v1722, %v1714
    %v1724 = vrot.slane %v1716, 6
    %v1725 = vsel %vm1147, %v1724, %v1723
    %v1726 = vrot.slane %v1717, 5
    %v1727 = vsel %vm1150, %v1726, %v1725
    %v1728 = vrot.slane %v1718, 4
    %v1729 = vsel %vm1153, %v1728, %v1727
    %v1730 = vrot.slane %v1719, 3
    %v1731 = vsel %vm1156, %v1730, %v1729
    %v1732 = vrot.slane %v1720, 2
    %v1733 = vsel %vm1159, %v1732, %v1731
    %v1734 = vrot.slane %v1721, 1
    %v1735 = vsel %vm1162, %v1734, %v1733
    %v1736 = vpack.c.b16 %v1735, %v1735
    %v1738 = vsel %vm1196, %v1705, 0
    %v1741 = vsel %vm1196, %v1736, 0
    %1743 = vmatprep.subr.bf16.mxu0 0
    %1744 = vmatpush1.bf16.xpose.msra.mxu0 %v1741
    %1745 = vmatprep.subr.bf16.mxu0 0
    %1746 = vmatpush1.bf16.xpose.msra.mxu0 0
    %1747 = vmatprep.subr.bf16.mxu0 0
    %1748 = vmatpush1.bf16.xpose.msra.mxu0 0
    %1749 = vmatprep.subr.bf16.mxu0 0
    %1750 = vmatpush1.bf16.xpose.msra.mxu0 0
    %1751 = vmatprep.subr.bf16.mxu0 0
    %1752 = vmatpush1.bf16.xpose.msra.mxu0 0
    %1753 = vmatprep.subr.bf16.mxu0 0
    %1754 = vmatpush1.bf16.xpose.msra.mxu0 0
    %1755 = vmatprep.subr.bf16.mxu0 0
    %1756 = vmatpush1.bf16.xpose.msra.mxu0 0
    %1757 = vmatprep.subr.bf16.mxu0 0
    %1758 = vmatpush1.bf16.xpose.msra.mxu0 0
    %1759 = vmatprep.subr.bf16.mxu0 0
    %1760 = vmatpush1.bf16.xpose.msra.mxu0 0
    %1761 = vmatprep.subr.bf16.mxu0 0
    %1762 = vmatpush1.bf16.xpose.msra.mxu0 0
    %1763 = vmatprep.subr.bf16.mxu0 0
    %1764 = vmatpush1.bf16.xpose.msra.mxu0 0
    %1765 = vmatprep.subr.bf16.mxu0 0
    %1766 = vmatpush1.bf16.xpose.msra.mxu0 0
    %1767 = vmatprep.subr.bf16.mxu0 0
    %1768 = vmatpush1.bf16.xpose.msra.mxu0 0
    %1769 = vmatprep.subr.bf16.mxu0 0
    %1770 = vmatpush1.bf16.xpose.msra.mxu0 0
    %1771 = vmatprep.subr.bf16.mxu0 0
    %1772 = vmatpush1.bf16.xpose.msra.mxu0 0
    %1773 = vmatprep.subr.bf16.mxu0 0
    %1774 = vmatpush1.bf16.xpose.msra.mxu0 0
    %1775 = vmatprep.mubr.bf16.mxu0 0
    %1776 = vmatmul.mubr.bf16.gmra.mrb[0].mxu0 %v1738
    %v1777 = vpop.f32.mrb[0].mxu0
    %v1778 = vadd.f32 0.0, %v1777
    %v1779 = vpop.f32.mrb[0].mxu0
    %v1780 = vpop.f32.mrb[0].mxu0
    %v1781 = vpop.f32.mrb[0].mxu0
    %1782 = vdwg.mxu0
    %v1791 = vunpack.c.l.b16 %v983
    %v1792 = vunpack.c.l.b16 %v984
    %v1793 = vunpack.c.l.b16 %v985
    %v1794 = vunpack.c.l.b16 %v986
    %v1795 = vunpack.c.l.b16 %v987
    %v1796 = vunpack.c.l.b16 %v988
    %v1797 = vunpack.c.l.b16 %v989
    %v1798 = vunpack.c.l.b16 %v990
    %v1799 = vrot.slane %v1792, 7
    %v1800 = vsel %vm1144, %v1799, %v1791
    %v1801 = vrot.slane %v1793, 6
    %v1802 = vsel %vm1147, %v1801, %v1800
    %v1803 = vrot.slane %v1794, 5
    %v1804 = vsel %vm1150, %v1803, %v1802
    %v1805 = vrot.slane %v1795, 4
    %v1806 = vsel %vm1153, %v1805, %v1804
    %v1807 = vrot.slane %v1796, 3
    %v1808 = vsel %vm1156, %v1807, %v1806
    %v1809 = vrot.slane %v1797, 2
    %v1810 = vsel %vm1159, %v1809, %v1808
    %v1811 = vrot.slane %v1798, 1
    %v1812 = vsel %vm1162, %v1811, %v1810
    %v1813 = vpack.c.b16 %v1812, %v1812
    %v1822 = vunpack.c.l.b16 %v1047
    %v1823 = vunpack.c.l.b16 %v1048
    %v1824 = vunpack.c.l.b16 %v1049
    %v1825 = vunpack.c.l.b16 %v1050
    %v1826 = vunpack.c.l.b16 %v1051
    %v1827 = vunpack.c.l.b16 %v1052
    %v1828 = vunpack.c.l.b16 %v1053
    %v1829 = vunpack.c.l.b16 %v1054
    %v1830 = vrot.slane %v1823, 7
    %v1831 = vsel %vm1144, %v1830, %v1822
    %v1832 = vrot.slane %v1824, 6
    %v1833 = vsel %vm1147, %v1832, %v1831
    %v1834 = vrot.slane %v1825, 5
    %v1835 = vsel %vm1150, %v1834, %v1833
    %v1836 = vrot.slane %v1826, 4
    %v1837 = vsel %vm1153, %v1836, %v1835
    %v1838 = vrot.slane %v1827, 3
    %v1839 = vsel %vm1156, %v1838, %v1837
    %v1840 = vrot.slane %v1828, 2
    %v1841 = vsel %vm1159, %v1840, %v1839
    %v1842 = vrot.slane %v1829, 1
    %v1843 = vsel %vm1162, %v1842, %v1841
    %v1844 = vpack.c.b16 %v1843, %v1843
    %v1846 = vsel %vm1196, %v1813, 0
    %v1849 = vsel %vm1196, %v1844, 0
    %1851 = vmatprep.subr.bf16.mxu0 0
    %1852 = vmatpush1.bf16.xpose.msra.mxu0 %v1849
    %1853 = vmatprep.subr.bf16.mxu0 0
    %1854 = vmatpush1.bf16.xpose.msra.mxu0 0
    %1855 = vmatprep.subr.bf16.mxu0 0
    %1856 = vmatpush1.bf16.xpose.msra.mxu0 0
    %1857 = vmatprep.subr.bf16.mxu0 0
    %1858 = vmatpush1.bf16.xpose.msra.mxu0 0
    %1859 = vmatprep.subr.bf16.mxu0 0
    %1860 = vmatpush1.bf16.xpose.msra.mxu0 0
    %1861 = vmatprep.subr.bf16.mxu0 0
    %1862 = vmatpush1.bf16.xpose.msra.mxu0 0
    %1863 = vmatprep.subr.bf16.mxu0 0
    %1864 = vmatpush1.bf16.xpose.msra.mxu0 0
    %1865 = vmatprep.subr.bf16.mxu0 0
    %1866 = vmatpush1.bf16.xpose.msra.mxu0 0
    %1867 = vmatprep.subr.bf16.mxu0 0
    %1868 = vmatpush1.bf16.xpose.msra.mxu0 0
    %1869 = vmatprep.subr.bf16.mxu0 0
    %1870 = vmatpush1.bf16.xpose.msra.mxu0 0
    %1871 = vmatprep.subr.bf16.mxu0 0
    %1872 = vmatpush1.bf16.xpose.msra.mxu0 0
    %1873 = vmatprep.subr.bf16.mxu0 0
    %1874 = vmatpush1.bf16.xpose.msra.mxu0 0
    %1875 = vmatprep.subr.bf16.mxu0 0
    %1876 = vmatpush1.bf16.xpose.msra.mxu0 0
    %1877 = vmatprep.subr.bf16.mxu0 0
    %1878 = vmatpush1.bf16.xpose.msra.mxu0 0
    %1879 = vmatprep.subr.bf16.mxu0 0
    %1880 = vmatpush1.bf16.xpose.msra.mxu0 0
    %1881 = vmatprep.subr.bf16.mxu0 0
    %1882 = vmatpush1.bf16.xpose.msra.mxu0 0
    %1883 = vmatprep.mubr.bf16.mxu0 0
    %1884 = vmatmul.mubr.bf16.gmra.mrb[0].mxu0 %v1846
    %v1885 = vpop.f32.mrb[0].mxu0
    %v1886 = vadd.f32 0.0, %v1885
    %v1887 = vpop.f32.mrb[0].mxu0
    %v1888 = vpop.f32.mrb[0].mxu0
    %v1889 = vpop.f32.mrb[0].mxu0
    %1890 = vdwg.mxu0
    %v1899 = vunpack.c.l.b16 %v991
    %v1900 = vunpack.c.l.b16 %v992
    %v1901 = vunpack.c.l.b16 %v993
    %v1902 = vunpack.c.l.b16 %v994
    %v1903 = vunpack.c.l.b16 %v995
    %v1904 = vunpack.c.l.b16 %v996
    %v1905 = vunpack.c.l.b16 %v997
    %v1906 = vunpack.c.l.b16 %v998
    %v1907 = vrot.slane %v1900, 7
    %v1908 = vsel %vm1144, %v1907, %v1899
    %v1909 = vrot.slane %v1901, 6
    %v1910 = vsel %vm1147, %v1909, %v1908
    %v1911 = vrot.slane %v1902, 5
    %v1912 = vsel %vm1150, %v1911, %v1910
    %v1913 = vrot.slane %v1903, 4
    %v1914 = vsel %vm1153, %v1913, %v1912
    %v1915 = vrot.slane %v1904, 3
    %v1916 = vsel %vm1156, %v1915, %v1914
    %v1917 = vrot.slane %v1905, 2
    %v1918 = vsel %vm1159, %v1917, %v1916
    %v1919 = vrot.slane %v1906, 1
    %v1920 = vsel %vm1162, %v1919, %v1918
    %v1921 = vpack.c.b16 %v1920, %v1920
    %v1930 = vunpack.c.l.b16 %v1055
    %v1931 = vunpack.c.l.b16 %v1056
    %v1932 = vunpack.c.l.b16 %v1057
    %v1933 = vunpack.c.l.b16 %v1058
    %v1934 = vunpack.c.l.b16 %v1059
    %v1935 = vunpack.c.l.b16 %v1060
    %v1936 = vunpack.c.l.b16 %v1061
    %v1937 = vunpack.c.l.b16 %v1062
    %v1938 = vrot.slane %v1931, 7
    %v1939 = vsel %vm1144, %v1938, %v1930
    %v1940 = vrot.slane %v1932, 6
    %v1941 = vsel %vm1147, %v1940, %v1939
    %v1942 = vrot.slane %v1933, 5
    %v1943 = vsel %vm1150, %v1942, %v1941
    %v1944 = vrot.slane %v1934, 4
    %v1945 = vsel %vm1153, %v1944, %v1943
    %v1946 = vrot.slane %v1935, 3
    %v1947 = vsel %vm1156, %v1946, %v1945
    %v1948 = vrot.slane %v1936, 2
    %v1949 = vsel %vm1159, %v1948, %v1947
    %v1950 = vrot.slane %v1937, 1
    %v1951 = vsel %vm1162, %v1950, %v1949
    %v1952 = vpack.c.b16 %v1951, %v1951
    %v1954 = vsel %vm1196, %v1921, 0
    %v1957 = vsel %vm1196, %v1952, 0
    %1959 = vmatprep.subr.bf16.mxu0 0
    %1960 = vmatpush1.bf16.xpose.msra.mxu0 %v1957
    %1961 = vmatprep.subr.bf16.mxu0 0
    %1962 = vmatpush1.bf16.xpose.msra.mxu0 0
    %1963 = vmatprep.subr.bf16.mxu0 0
    %1964 = vmatpush1.bf16.xpose.msra.mxu0 0
    %1965 = vmatprep.subr.bf16.mxu0 0
    %1966 = vmatpush1.bf16.xpose.msra.mxu0 0
    %1967 = vmatprep.subr.bf16.mxu0 0
    %1968 = vmatpush1.bf16.xpose.msra.mxu0 0
    %1969 = vmatprep.subr.bf16.mxu0 0
    %1970 = vmatpush1.bf16.xpose.msra.mxu0 0
    %1971 = vmatprep.subr.bf16.mxu0 0
    %1972 = vmatpush1.bf16.xpose.msra.mxu0 0
    %1973 = vmatprep.subr.bf16.mxu0 0
    %1974 = vmatpush1.bf16.xpose.msra.mxu0 0
    %1975 = vmatprep.subr.bf16.mxu0 0
    %1976 = vmatpush1.bf16.xpose.msra.mxu0 0
    %1977 = vmatprep.subr.bf16.mxu0 0
    %1978 = vmatpush1.bf16.xpose.msra.mxu0 0
    %1979 = vmatprep.subr.bf16.mxu0 0
    %1980 = vmatpush1.bf16.xpose.msra.mxu0 0
    %1981 = vmatprep.subr.bf16.mxu0 0
    %1982 = vmatpush1.bf16.xpose.msra.mxu0 0
    %1983 = vmatprep.subr.bf16.mxu0 0
    %1984 = vmatpush1.bf16.xpose.msra.mxu0 0
    %1985 = vmatprep.subr.bf16.mxu0 0
    %1986 = vmatpush1.bf16.xpose.msra.mxu0 0
    %1987 = vmatprep.subr.bf16.mxu0 0
    %1988 = vmatpush1.bf16.xpose.msra.mxu0 0
    %1989 = vmatprep.subr.bf16.mxu0 0
    %1990 = vmatpush1.bf16.xpose.msra.mxu0 0
    %1991 = vmatprep.mubr.bf16.mxu0 0
    %1992 = vmatmul.mubr.bf16.gmra.mrb[0].mxu0 %v1954
    %v1993 = vpop.f32.mrb[0].mxu0
    %v1994 = vadd.f32 0.0, %v1993
    %v1995 = vpop.f32.mrb[0].mxu0
    %v1996 = vpop.f32.mrb[0].mxu0
    %v1997 = vpop.f32.mrb[0].mxu0
    %1998 = vdwg.mxu0
    %v1999 = vsel %vm1196, %v1238, -inf
    %2000 = vmax.xlane.f32.xlu0 %v1999
    %v2001 = vpop.xlane.xlu0 %2000
    %v2002 = vsel %vm1196, %v1346, -inf
    %2003 = vmax.xlane.f32.xlu0 %v2002
    %v2004 = vpop.xlane.xlu0 %2003
    %v2005 = vsel %vm1196, %v1454, -inf
    %2006 = vmax.xlane.f32.xlu0 %v2005
    %v2007 = vpop.xlane.xlu0 %2006
    %v2008 = vsel %vm1196, %v1562, -inf
    %2009 = vmax.xlane.f32.xlu0 %v2008
    %v2010 = vpop.xlane.xlu0 %2009
    %v2011 = vsel %vm1196, %v1670, -inf
    %2012 = vmax.xlane.f32.xlu0 %v2011
    %v2013 = vpop.xlane.xlu0 %2012
    %v2014 = vsel %vm1196, %v1778, -inf
    %2015 = vmax.xlane.f32.xlu0 %v2014
    %v2016 = vpop.xlane.xlu0 %2015
    %v2017 = vsel %vm1196, %v1886, -inf
    %2018 = vmax.xlane.f32.xlu0 %v2017
    %v2019 = vpop.xlane.xlu0 %2018
    %v2020 = vsel %vm1196, %v1994, -inf
    %2021 = vmax.xlane.f32.xlu0 %v2020
    %v2022 = vpop.xlane.xlu0 %2021
    %v2023 = vsub.f32 %v1238, %v2001
    %v2024 = vsub.f32 %v1346, %v2004
    %v2025 = vsub.f32 %v1454, %v2007
    %v2026 = vsub.f32 %v1562, %v2010
    %v2027 = vsub.f32 %v1670, %v2013
    %v2028 = vsub.f32 %v1778, %v2016
    %v2029 = vsub.f32 %v1886, %v2019
    %v2030 = vsub.f32 %v1994, %v2022
    %v2031 = vmul.f32 %v2023, 1.442695
    %v2032 = vpow.pop %v2031
    %v2033 = vmul.f32 %v2024, 1.442695
    %v2034 = vpow.pop %v2033
    %v2035 = vmul.f32 %v2025, 1.442695
    %v2036 = vpow.pop %v2035
    %v2037 = vmul.f32 %v2026, 1.442695
    %v2038 = vpow.pop %v2037
    %v2039 = vmul.f32 %v2027, 1.442695
    %v2040 = vpow.pop %v2039
    %v2041 = vmul.f32 %v2028, 1.442695
    %v2042 = vpow.pop %v2041
    %v2043 = vmul.f32 %v2029, 1.442695
    %v2044 = vpow.pop %v2043
    %v2045 = vmul.f32 %v2030, 1.442695
    %v2046 = vpow.pop %v2045
    %v2047 = vsel %vm1196, %v2032, 0.0
    %2048 = vadd.xlane.f32.xlu0 %v2047
    %v2049 = vpop.xlane.xlu0 %2048
    %v2050 = vsel %vm1196, %v2034, 0.0
    %2051 = vadd.xlane.f32.xlu0 %v2050
    %v2052 = vpop.xlane.xlu0 %2051
    %v2053 = vsel %vm1196, %v2036, 0.0
    %2054 = vadd.xlane.f32.xlu0 %v2053
    %v2055 = vpop.xlane.xlu0 %2054
    %v2056 = vsel %vm1196, %v2038, 0.0
    %2057 = vadd.xlane.f32.xlu0 %v2056
    %v2058 = vpop.xlane.xlu0 %2057
    %v2059 = vsel %vm1196, %v2040, 0.0
    %2060 = vadd.xlane.f32.xlu0 %v2059
    %v2061 = vpop.xlane.xlu0 %2060
    %v2062 = vsel %vm1196, %v2042, 0.0
    %2063 = vadd.xlane.f32.xlu0 %v2062
    %v2064 = vpop.xlane.xlu0 %2063
    %v2065 = vsel %vm1196, %v2044, 0.0
    %2066 = vadd.xlane.f32.xlu0 %v2065
    %v2067 = vpop.xlane.xlu0 %2066
    %v2068 = vsel %vm1196, %v2046, 0.0
    %2069 = vadd.xlane.f32.xlu0 %v2068
    %v2070 = vpop.xlane.xlu0 %2069
    %v2071 = vpack.c.bf16 %v2032, %v2032
    %v2072 = vpack.c.bf16 %v2034, %v2034
    %v2073 = vpack.c.bf16 %v2036, %v2036
    %v2074 = vpack.c.bf16 %v2038, %v2038
    %v2075 = vpack.c.bf16 %v2040, %v2040
    %v2076 = vpack.c.bf16 %v2042, %v2042
    %v2077 = vpack.c.bf16 %v2044, %v2044
    %v2078 = vpack.c.bf16 %v2046, %v2046
    %v2087 = vunpack.c.l.b16 %v1063
    %v2088 = vunpack.c.l.b16 %v1064
    %v2089 = vunpack.c.l.b16 %v1065
    %v2090 = vunpack.c.l.b16 %v1066
    %v2091 = vunpack.c.l.b16 %v1067
    %v2092 = vunpack.c.l.b16 %v1068
    %v2093 = vunpack.c.l.b16 %v1069
    %v2094 = vunpack.c.l.b16 %v1070
    %v2095 = vrot.slane %v2088, 7
    %v2096 = vsel %vm1144, %v2095, %v2087
    %v2097 = vrot.slane %v2089, 6
    %v2098 = vsel %vm1147, %v2097, %v2096
    %v2099 = vrot.slane %v2090, 5
    %v2100 = vsel %vm1150, %v2099, %v2098
    %v2101 = vrot.slane %v2091, 4
    %v2102 = vsel %vm1153, %v2101, %v2100
    %v2103 = vrot.slane %v2092, 3
    %v2104 = vsel %vm1156, %v2103, %v2102
    %v2105 = vrot.slane %v2093, 2
    %v2106 = vsel %vm1159, %v2105, %v2104
    %v2107 = vrot.slane %v2094, 1
    %v2108 = vsel %vm1162, %v2107, %v2106
    %v2109 = vpack.c.b16 %v2108, %v2108
    %v2111 = vsel %vm1196, %v2071, 0
    %vm2113 = vcmask 1043456
    %v2115 = vsel %vm2113, %v2109, 0
    %2117 = vmatprep.subr.bf16.mxu0 0
    %2118 = vmatpush1.bf16.msra.mxu0 %v2115
    %2119 = vmatprep.subr.bf16.mxu0 0
    %2120 = vmatpush1.bf16.msra.mxu0 0
    %2121 = vmatprep.subr.bf16.mxu0 0
    %2122 = vmatpush1.bf16.msra.mxu0 0
    %2123 = vmatprep.subr.bf16.mxu0 0
    %2124 = vmatpush1.bf16.msra.mxu0 0
    %2125 = vmatprep.subr.bf16.mxu0 0
    %2126 = vmatpush1.bf16.msra.mxu0 0
    %2127 = vmatprep.subr.bf16.mxu0 0
    %2128 = vmatpush1.bf16.msra.mxu0 0
    %2129 = vmatprep.subr.bf16.mxu0 0
    %2130 = vmatpush1.bf16.msra.mxu0 0
    %2131 = vmatprep.subr.bf16.mxu0 0
    %2132 = vmatpush1.bf16.msra.mxu0 0
    %2133 = vmatprep.subr.bf16.mxu0 0
    %2134 = vmatpush1.bf16.msra.mxu0 0
    %2135 = vmatprep.subr.bf16.mxu0 0
    %2136 = vmatpush1.bf16.msra.mxu0 0
    %2137 = vmatprep.subr.bf16.mxu0 0
    %2138 = vmatpush1.bf16.msra.mxu0 0
    %2139 = vmatprep.subr.bf16.mxu0 0
    %2140 = vmatpush1.bf16.msra.mxu0 0
    %2141 = vmatprep.subr.bf16.mxu0 0
    %2142 = vmatpush1.bf16.msra.mxu0 0
    %2143 = vmatprep.subr.bf16.mxu0 0
    %2144 = vmatpush1.bf16.msra.mxu0 0
    %2145 = vmatprep.subr.bf16.mxu0 0
    %2146 = vmatpush1.bf16.msra.mxu0 0
    %2147 = vmatprep.subr.bf16.mxu0 0
    %2148 = vmatpush1.bf16.msra.mxu0 0
    %2149 = vmatprep.mubr.bf16.mxu0 0
    %2150 = vmatmul.mubr.bf16.gmra.mrb[0].mxu0 %v2111
    %v2151 = vpop.f32.mrb[0].mxu0
    %v2152 = vadd.f32 0.0, %v2151
    %v2153 = vpop.f32.mrb[0].mxu0
    %v2154 = vpop.f32.mrb[0].mxu0
    %v2155 = vpop.f32.mrb[0].mxu0
    %2156 = vdwg.mxu0
    %v2165 = vunpack.c.l.b16 %v1071
    %v2166 = vunpack.c.l.b16 %v1072
    %v2167 = vunpack.c.l.b16 %v1073
    %v2168 = vunpack.c.l.b16 %v1074
    %v2169 = vunpack.c.l.b16 %v1075
    %v2170 = vunpack.c.l.b16 %v1076
    %v2171 = vunpack.c.l.b16 %v1077
    %v2172 = vunpack.c.l.b16 %v1078
    %v2173 = vrot.slane %v2166, 7
    %v2174 = vsel %vm1144, %v2173, %v2165
    %v2175 = vrot.slane %v2167, 6
    %v2176 = vsel %vm1147, %v2175, %v2174
    %v2177 = vrot.slane %v2168, 5
    %v2178 = vsel %vm1150, %v2177, %v2176
    %v2179 = vrot.slane %v2169, 4
    %v2180 = vsel %vm1153, %v2179, %v2178
    %v2181 = vrot.slane %v2170, 3
    %v2182 = vsel %vm1156, %v2181, %v2180
    %v2183 = vrot.slane %v2171, 2
    %v2184 = vsel %vm1159, %v2183, %v2182
    %v2185 = vrot.slane %v2172, 1
    %v2186 = vsel %vm1162, %v2185, %v2184
    %v2187 = vpack.c.b16 %v2186, %v2186
    %v2189 = vsel %vm1196, %v2072, 0
    %v2192 = vsel %vm2113, %v2187, 0
    %2194 = vmatprep.subr.bf16.mxu0 0
    %2195 = vmatpush1.bf16.msra.mxu0 %v2192
    %2196 = vmatprep.subr.bf16.mxu0 0
    %2197 = vmatpush1.bf16.msra.mxu0 0
    %2198 = vmatprep.subr.bf16.mxu0 0
    %2199 = vmatpush1.bf16.msra.mxu0 0
    %2200 = vmatprep.subr.bf16.mxu0 0
    %2201 = vmatpush1.bf16.msra.mxu0 0
    %2202 = vmatprep.subr.bf16.mxu0 0
    %2203 = vmatpush1.bf16.msra.mxu0 0
    %2204 = vmatprep.subr.bf16.mxu0 0
    %2205 = vmatpush1.bf16.msra.mxu0 0
    %2206 = vmatprep.subr.bf16.mxu0 0
    %2207 = vmatpush1.bf16.msra.mxu0 0
    %2208 = vmatprep.subr.bf16.mxu0 0
    %2209 = vmatpush1.bf16.msra.mxu0 0
    %2210 = vmatprep.subr.bf16.mxu0 0
    %2211 = vmatpush1.bf16.msra.mxu0 0
    %2212 = vmatprep.subr.bf16.mxu0 0
    %2213 = vmatpush1.bf16.msra.mxu0 0
    %2214 = vmatprep.subr.bf16.mxu0 0
    %2215 = vmatpush1.bf16.msra.mxu0 0
    %2216 = vmatprep.subr.bf16.mxu0 0
    %2217 = vmatpush1.bf16.msra.mxu0 0
    %2218 = vmatprep.subr.bf16.mxu0 0
    %2219 = vmatpush1.bf16.msra.mxu0 0
    %2220 = vmatprep.subr.bf16.mxu0 0
    %2221 = vmatpush1.bf16.msra.mxu0 0
    %2222 = vmatprep.subr.bf16.mxu0 0
    %2223 = vmatpush1.bf16.msra.mxu0 0
    %2224 = vmatprep.subr.bf16.mxu0 0
    %2225 = vmatpush1.bf16.msra.mxu0 0
    %2226 = vmatprep.mubr.bf16.mxu0 0
    %2227 = vmatmul.mubr.bf16.gmra.mrb[0].mxu0 %v2189
    %v2228 = vpop.f32.mrb[0].mxu0
    %v2229 = vadd.f32 0.0, %v2228
    %v2230 = vpop.f32.mrb[0].mxu0
    %v2231 = vpop.f32.mrb[0].mxu0
    %v2232 = vpop.f32.mrb[0].mxu0
    %2233 = vdwg.mxu0
    %v2242 = vunpack.c.l.b16 %v1079
    %v2243 = vunpack.c.l.b16 %v1080
    %v2244 = vunpack.c.l.b16 %v1081
    %v2245 = vunpack.c.l.b16 %v1082
    %v2246 = vunpack.c.l.b16 %v1083
    %v2247 = vunpack.c.l.b16 %v1084
    %v2248 = vunpack.c.l.b16 %v1085
    %v2249 = vunpack.c.l.b16 %v1086
    %v2250 = vrot.slane %v2243, 7
    %v2251 = vsel %vm1144, %v2250, %v2242
    %v2252 = vrot.slane %v2244, 6
    %v2253 = vsel %vm1147, %v2252, %v2251
    %v2254 = vrot.slane %v2245, 5
    %v2255 = vsel %vm1150, %v2254, %v2253
    %v2256 = vrot.slane %v2246, 4
    %v2257 = vsel %vm1153, %v2256, %v2255
    %v2258 = vrot.slane %v2247, 3
    %v2259 = vsel %vm1156, %v2258, %v2257
    %v2260 = vrot.slane %v2248, 2
    %v2261 = vsel %vm1159, %v2260, %v2259
    %v2262 = vrot.slane %v2249, 1
    %v2263 = vsel %vm1162, %v2262, %v2261
    %v2264 = vpack.c.b16 %v2263, %v2263
    %v2266 = vsel %vm1196, %v2073, 0
    %v2269 = vsel %vm2113, %v2264, 0
    %2271 = vmatprep.subr.bf16.mxu0 0
    %2272 = vmatpush1.bf16.msra.mxu0 %v2269
    %2273 = vmatprep.subr.bf16.mxu0 0
    %2274 = vmatpush1.bf16.msra.mxu0 0
    %2275 = vmatprep.subr.bf16.mxu0 0
    %2276 = vmatpush1.bf16.msra.mxu0 0
    %2277 = vmatprep.subr.bf16.mxu0 0
    %2278 = vmatpush1.bf16.msra.mxu0 0
    %2279 = vmatprep.subr.bf16.mxu0 0
    %2280 = vmatpush1.bf16.msra.mxu0 0
    %2281 = vmatprep.subr.bf16.mxu0 0
    %2282 = vmatpush1.bf16.msra.mxu0 0
    %2283 = vmatprep.subr.bf16.mxu0 0
    %2284 = vmatpush1.bf16.msra.mxu0 0
    %2285 = vmatprep.subr.bf16.mxu0 0
    %2286 = vmatpush1.bf16.msra.mxu0 0
    %2287 = vmatprep.subr.bf16.mxu0 0
    %2288 = vmatpush1.bf16.msra.mxu0 0
    %2289 = vmatprep.subr.bf16.mxu0 0
    %2290 = vmatpush1.bf16.msra.mxu0 0
    %2291 = vmatprep.subr.bf16.mxu0 0
    %2292 = vmatpush1.bf16.msra.mxu0 0
    %2293 = vmatprep.subr.bf16.mxu0 0
    %2294 = vmatpush1.bf16.msra.mxu0 0
    %2295 = vmatprep.subr.bf16.mxu0 0
    %2296 = vmatpush1.bf16.msra.mxu0 0
    %2297 = vmatprep.subr.bf16.mxu0 0
    %2298 = vmatpush1.bf16.msra.mxu0 0
    %2299 = vmatprep.subr.bf16.mxu0 0
    %2300 = vmatpush1.bf16.msra.mxu0 0
    %2301 = vmatprep.subr.bf16.mxu0 0
    %2302 = vmatpush1.bf16.msra.mxu0 0
    %2303 = vmatprep.mubr.bf16.mxu0 0
    %2304 = vmatmul.mubr.bf16.gmra.mrb[0].mxu0 %v2266
    %v2305 = vpop.f32.mrb[0].mxu0
    %v2306 = vadd.f32 0.0, %v2305
    %v2307 = vpop.f32.mrb[0].mxu0
    %v2308 = vpop.f32.mrb[0].mxu0
    %v2309 = vpop.f32.mrb[0].mxu0
    %2310 = vdwg.mxu0
    %v2319 = vunpack.c.l.b16 %v1087
    %v2320 = vunpack.c.l.b16 %v1088
    %v2321 = vunpack.c.l.b16 %v1089
    %v2322 = vunpack.c.l.b16 %v1090
    %v2323 = vunpack.c.l.b16 %v1091
    %v2324 = vunpack.c.l.b16 %v1092
    %v2325 = vunpack.c.l.b16 %v1093
    %v2326 = vunpack.c.l.b16 %v1094
    %v2327 = vrot.slane %v2320, 7
    %v2328 = vsel %vm1144, %v2327, %v2319
    %v2329 = vrot.slane %v2321, 6
    %v2330 = vsel %vm1147, %v2329, %v2328
    %v2331 = vrot.slane %v2322, 5
    %v2332 = vsel %vm1150, %v2331, %v2330
    %v2333 = vrot.slane %v2323, 4
    %v2334 = vsel %vm1153, %v2333, %v2332
    %v2335 = vrot.slane %v2324, 3
    %v2336 = vsel %vm1156, %v2335, %v2334
    %v2337 = vrot.slane %v2325, 2
    %v2338 = vsel %vm1159, %v2337, %v2336
    %v2339 = vrot.slane %v2326, 1
    %v2340 = vsel %vm1162, %v2339, %v2338
    %v2341 = vpack.c.b16 %v2340, %v2340
    %v2343 = vsel %vm1196, %v2074, 0
    %v2346 = vsel %vm2113, %v2341, 0
    %2348 = vmatprep.subr.bf16.mxu0 0
    %2349 = vmatpush1.bf16.msra.mxu0 %v2346
    %2350 = vmatprep.subr.bf16.mxu0 0
    %2351 = vmatpush1.bf16.msra.mxu0 0
    %2352 = vmatprep.subr.bf16.mxu0 0
    %2353 = vmatpush1.bf16.msra.mxu0 0
    %2354 = vmatprep.subr.bf16.mxu0 0
    %2355 = vmatpush1.bf16.msra.mxu0 0
    %2356 = vmatprep.subr.bf16.mxu0 0
    %2357 = vmatpush1.bf16.msra.mxu0 0
    %2358 = vmatprep.subr.bf16.mxu0 0
    %2359 = vmatpush1.bf16.msra.mxu0 0
    %2360 = vmatprep.subr.bf16.mxu0 0
    %2361 = vmatpush1.bf16.msra.mxu0 0
    %2362 = vmatprep.subr.bf16.mxu0 0
    %2363 = vmatpush1.bf16.msra.mxu0 0
    %2364 = vmatprep.subr.bf16.mxu0 0
    %2365 = vmatpush1.bf16.msra.mxu0 0
    %2366 = vmatprep.subr.bf16.mxu0 0
    %2367 = vmatpush1.bf16.msra.mxu0 0
    %2368 = vmatprep.subr.bf16.mxu0 0
    %2369 = vmatpush1.bf16.msra.mxu0 0
    %2370 = vmatprep.subr.bf16.mxu0 0
    %2371 = vmatpush1.bf16.msra.mxu0 0
    %2372 = vmatprep.subr.bf16.mxu0 0
    %2373 = vmatpush1.bf16.msra.mxu0 0
    %2374 = vmatprep.subr.bf16.mxu0 0
    %2375 = vmatpush1.bf16.msra.mxu0 0
    %2376 = vmatprep.subr.bf16.mxu0 0
    %2377 = vmatpush1.bf16.msra.mxu0 0
    %2378 = vmatprep.subr.bf16.mxu0 0
    %2379 = vmatpush1.bf16.msra.mxu0 0
    %2380 = vmatprep.mubr.bf16.mxu0 0
    %2381 = vmatmul.mubr.bf16.gmra.mrb[0].mxu0 %v2343
    %v2382 = vpop.f32.mrb[0].mxu0
    %v2383 = vadd.f32 0.0, %v2382
    %v2384 = vpop.f32.mrb[0].mxu0
    %v2385 = vpop.f32.mrb[0].mxu0
    %v2386 = vpop.f32.mrb[0].mxu0
    %2387 = vdwg.mxu0
    %v2396 = vunpack.c.l.b16 %v1095
    %v2397 = vunpack.c.l.b16 %v1096
    %v2398 = vunpack.c.l.b16 %v1097
    %v2399 = vunpack.c.l.b16 %v1098
    %v2400 = vunpack.c.l.b16 %v1099
    %v2401 = vunpack.c.l.b16 %v1100
    %v2402 = vunpack.c.l.b16 %v1101
    %v2403 = vunpack.c.l.b16 %v1102
    %v2404 = vrot.slane %v2397, 7
    %v2405 = vsel %vm1144, %v2404, %v2396
    %v2406 = vrot.slane %v2398, 6
    %v2407 = vsel %vm1147, %v2406, %v2405
    %v2408 = vrot.slane %v2399, 5
    %v2409 = vsel %vm1150, %v2408, %v2407
    %v2410 = vrot.slane %v2400, 4
    %v2411 = vsel %vm1153, %v2410, %v2409
    %v2412 = vrot.slane %v2401, 3
    %v2413 = vsel %vm1156, %v2412, %v2411
    %v2414 = vrot.slane %v2402, 2
    %v2415 = vsel %vm1159, %v2414, %v2413
    %v2416 = vrot.slane %v2403, 1
    %v2417 = vsel %vm1162, %v2416, %v2415
    %v2418 = vpack.c.b16 %v2417, %v2417
    %v2420 = vsel %vm1196, %v2075, 0
    %v2423 = vsel %vm2113, %v2418, 0
    %2425 = vmatprep.subr.bf16.mxu0 0
    %2426 = vmatpush1.bf16.msra.mxu0 %v2423
    %2427 = vmatprep.subr.bf16.mxu0 0
    %2428 = vmatpush1.bf16.msra.mxu0 0
    %2429 = vmatprep.subr.bf16.mxu0 0
    %2430 = vmatpush1.bf16.msra.mxu0 0
    %2431 = vmatprep.subr.bf16.mxu0 0
    %2432 = vmatpush1.bf16.msra.mxu0 0
    %2433 = vmatprep.subr.bf16.mxu0 0
    %2434 = vmatpush1.bf16.msra.mxu0 0
    %2435 = vmatprep.subr.bf16.mxu0 0
    %2436 = vmatpush1.bf16.msra.mxu0 0
    %2437 = vmatprep.subr.bf16.mxu0 0
    %2438 = vmatpush1.bf16.msra.mxu0 0
    %2439 = vmatprep.subr.bf16.mxu0 0
    %2440 = vmatpush1.bf16.msra.mxu0 0
    %2441 = vmatprep.subr.bf16.mxu0 0
    %2442 = vmatpush1.bf16.msra.mxu0 0
    %2443 = vmatprep.subr.bf16.mxu0 0
    %2444 = vmatpush1.bf16.msra.mxu0 0
    %2445 = vmatprep.subr.bf16.mxu0 0
    %2446 = vmatpush1.bf16.msra.mxu0 0
    %2447 = vmatprep.subr.bf16.mxu0 0
    %2448 = vmatpush1.bf16.msra.mxu0 0
    %2449 = vmatprep.subr.bf16.mxu0 0
    %2450 = vmatpush1.bf16.msra.mxu0 0
    %2451 = vmatprep.subr.bf16.mxu0 0
    %2452 = vmatpush1.bf16.msra.mxu0 0
    %2453 = vmatprep.subr.bf16.mxu0 0
    %2454 = vmatpush1.bf16.msra.mxu0 0
    %2455 = vmatprep.subr.bf16.mxu0 0
    %2456 = vmatpush1.bf16.msra.mxu0 0
    %2457 = vmatprep.mubr.bf16.mxu0 0
    %2458 = vmatmul.mubr.bf16.gmra.mrb[0].mxu0 %v2420
    %v2459 = vpop.f32.mrb[0].mxu0
    %v2460 = vadd.f32 0.0, %v2459
    %v2461 = vpop.f32.mrb[0].mxu0
    %v2462 = vpop.f32.mrb[0].mxu0
    %v2463 = vpop.f32.mrb[0].mxu0
    %2464 = vdwg.mxu0
    %v2473 = vunpack.c.l.b16 %v1103
    %v2474 = vunpack.c.l.b16 %v1104
    %v2475 = vunpack.c.l.b16 %v1105
    %v2476 = vunpack.c.l.b16 %v1106
    %v2477 = vunpack.c.l.b16 %v1107
    %v2478 = vunpack.c.l.b16 %v1108
    %v2479 = vunpack.c.l.b16 %v1109
    %v2480 = vunpack.c.l.b16 %v1110
    %v2481 = vrot.slane %v2474, 7
    %v2482 = vsel %vm1144, %v2481, %v2473
    %v2483 = vrot.slane %v2475, 6
    %v2484 = vsel %vm1147, %v2483, %v2482
    %v2485 = vrot.slane %v2476, 5
    %v2486 = vsel %vm1150, %v2485, %v2484
    %v2487 = vrot.slane %v2477, 4
    %v2488 = vsel %vm1153, %v2487, %v2486
    %v2489 = vrot.slane %v2478, 3
    %v2490 = vsel %vm1156, %v2489, %v2488
    %v2491 = vrot.slane %v2479, 2
    %v2492 = vsel %vm1159, %v2491, %v2490
    %v2493 = vrot.slane %v2480, 1
    %v2494 = vsel %vm1162, %v2493, %v2492
    %v2495 = vpack.c.b16 %v2494, %v2494
    %v2497 = vsel %vm1196, %v2076, 0
    %v2500 = vsel %vm2113, %v2495, 0
    %2502 = vmatprep.subr.bf16.mxu0 0
    %2503 = vmatpush1.bf16.msra.mxu0 %v2500
    %2504 = vmatprep.subr.bf16.mxu0 0
    %2505 = vmatpush1.bf16.msra.mxu0 0
    %2506 = vmatprep.subr.bf16.mxu0 0
    %2507 = vmatpush1.bf16.msra.mxu0 0
    %2508 = vmatprep.subr.bf16.mxu0 0
    %2509 = vmatpush1.bf16.msra.mxu0 0
    %2510 = vmatprep.subr.bf16.mxu0 0
    %2511 = vmatpush1.bf16.msra.mxu0 0
    %2512 = vmatprep.subr.bf16.mxu0 0
    %2513 = vmatpush1.bf16.msra.mxu0 0
    %2514 = vmatprep.subr.bf16.mxu0 0
    %2515 = vmatpush1.bf16.msra.mxu0 0
    %2516 = vmatprep.subr.bf16.mxu0 0
    %2517 = vmatpush1.bf16.msra.mxu0 0
    %2518 = vmatprep.subr.bf16.mxu0 0
    %2519 = vmatpush1.bf16.msra.mxu0 0
    %2520 = vmatprep.subr.bf16.mxu0 0
    %2521 = vmatpush1.bf16.msra.mxu0 0
    %2522 = vmatprep.subr.bf16.mxu0 0
    %2523 = vmatpush1.bf16.msra.mxu0 0
    %2524 = vmatprep.subr.bf16.mxu0 0
    %2525 = vmatpush1.bf16.msra.mxu0 0
    %2526 = vmatprep.subr.bf16.mxu0 0
    %2527 = vmatpush1.bf16.msra.mxu0 0
    %2528 = vmatprep.subr.bf16.mxu0 0
    %2529 = vmatpush1.bf16.msra.mxu0 0
    %2530 = vmatprep.subr.bf16.mxu0 0
    %2531 = vmatpush1.bf16.msra.mxu0 0
    %2532 = vmatprep.subr.bf16.mxu0 0
    %2533 = vmatpush1.bf16.msra.mxu0 0
    %2534 = vmatprep.mubr.bf16.mxu0 0
    %2535 = vmatmul.mubr.bf16.gmra.mrb[0].mxu0 %v2497
    %v2536 = vpop.f32.mrb[0].mxu0
    %v2537 = vadd.f32 0.0, %v2536
    %v2538 = vpop.f32.mrb[0].mxu0
    %v2539 = vpop.f32.mrb[0].mxu0
    %v2540 = vpop.f32.mrb[0].mxu0
    %2541 = vdwg.mxu0
    %v2550 = vunpack.c.l.b16 %v1111
    %v2551 = vunpack.c.l.b16 %v1112
    %v2552 = vunpack.c.l.b16 %v1113
    %v2553 = vunpack.c.l.b16 %v1114
    %v2554 = vunpack.c.l.b16 %v1115
    %v2555 = vunpack.c.l.b16 %v1116
    %v2556 = vunpack.c.l.b16 %v1117
    %v2557 = vunpack.c.l.b16 %v1118
    %v2558 = vrot.slane %v2551, 7
    %v2559 = vsel %vm1144, %v2558, %v2550
    %v2560 = vrot.slane %v2552, 6
    %v2561 = vsel %vm1147, %v2560, %v2559
    %v2562 = vrot.slane %v2553, 5
    %v2563 = vsel %vm1150, %v2562, %v2561
    %v2564 = vrot.slane %v2554, 4
    %v2565 = vsel %vm1153, %v2564, %v2563
    %v2566 = vrot.slane %v2555, 3
    %v2567 = vsel %vm1156, %v2566, %v2565
    %v2568 = vrot.slane %v2556, 2
    %v2569 = vsel %vm1159, %v2568, %v2567
    %v2570 = vrot.slane %v2557, 1
    %v2571 = vsel %vm1162, %v2570, %v2569
    %v2572 = vpack.c.b16 %v2571, %v2571
    %v2574 = vsel %vm1196, %v2077, 0
    %v2577 = vsel %vm2113, %v2572, 0
    %2579 = vmatprep.subr.bf16.mxu0 0
    %2580 = vmatpush1.bf16.msra.mxu0 %v2577
    %2581 = vmatprep.subr.bf16.mxu0 0
    %2582 = vmatpush1.bf16.msra.mxu0 0
    %2583 = vmatprep.subr.bf16.mxu0 0
    %2584 = vmatpush1.bf16.msra.mxu0 0
    %2585 = vmatprep.subr.bf16.mxu0 0
    %2586 = vmatpush1.bf16.msra.mxu0 0
    %2587 = vmatprep.subr.bf16.mxu0 0
    %2588 = vmatpush1.bf16.msra.mxu0 0
    %2589 = vmatprep.subr.bf16.mxu0 0
    %2590 = vmatpush1.bf16.msra.mxu0 0
    %2591 = vmatprep.subr.bf16.mxu0 0
    %2592 = vmatpush1.bf16.msra.mxu0 0
    %2593 = vmatprep.subr.bf16.mxu0 0
    %2594 = vmatpush1.bf16.msra.mxu0 0
    %2595 = vmatprep.subr.bf16.mxu0 0
    %2596 = vmatpush1.bf16.msra.mxu0 0
    %2597 = vmatprep.subr.bf16.mxu0 0
    %2598 = vmatpush1.bf16.msra.mxu0 0
    %2599 = vmatprep.subr.bf16.mxu0 0
    %2600 = vmatpush1.bf16.msra.mxu0 0
    %2601 = vmatprep.subr.bf16.mxu0 0
    %2602 = vmatpush1.bf16.msra.mxu0 0
    %2603 = vmatprep.subr.bf16.mxu0 0
    %2604 = vmatpush1.bf16.msra.mxu0 0
    %2605 = vmatprep.subr.bf16.mxu0 0
    %2606 = vmatpush1.bf16.msra.mxu0 0
    %2607 = vmatprep.subr.bf16.mxu0 0
    %2608 = vmatpush1.bf16.msra.mxu0 0
    %2609 = vmatprep.subr.bf16.mxu0 0
    %2610 = vmatpush1.bf16.msra.mxu0 0
    %2611 = vmatprep.mubr.bf16.mxu0 0
    %2612 = vmatmul.mubr.bf16.gmra.mrb[0].mxu0 %v2574
    %v2613 = vpop.f32.mrb[0].mxu0
    %v2614 = vadd.f32 0.0, %v2613
    %v2615 = vpop.f32.mrb[0].mxu0
    %v2616 = vpop.f32.mrb[0].mxu0
    %v2617 = vpop.f32.mrb[0].mxu0
    %2618 = vdwg.mxu0
    %v2627 = vunpack.c.l.b16 %v1119
    %v2628 = vunpack.c.l.b16 %v1120
    %v2629 = vunpack.c.l.b16 %v1121
    %v2630 = vunpack.c.l.b16 %v1122
    %v2631 = vunpack.c.l.b16 %v1123
    %v2632 = vunpack.c.l.b16 %v1124
    %v2633 = vunpack.c.l.b16 %v1125
    %v2634 = vunpack.c.l.b16 %v1126
    %v2635 = vrot.slane %v2628, 7
    %v2636 = vsel %vm1144, %v2635, %v2627
    %v2637 = vrot.slane %v2629, 6
    %v2638 = vsel %vm1147, %v2637, %v2636
    %v2639 = vrot.slane %v2630, 5
    %v2640 = vsel %vm1150, %v2639, %v2638
    %v2641 = vrot.slane %v2631, 4
    %v2642 = vsel %vm1153, %v2641, %v2640
    %v2643 = vrot.slane %v2632, 3
    %v2644 = vsel %vm1156, %v2643, %v2642
    %v2645 = vrot.slane %v2633, 2
    %v2646 = vsel %vm1159, %v2645, %v2644
    %v2647 = vrot.slane %v2634, 1
    %v2648 = vsel %vm1162, %v2647, %v2646
    %v2649 = vpack.c.b16 %v2648, %v2648
    %v2651 = vsel %vm1196, %v2078, 0
    %v2654 = vsel %vm2113, %v2649, 0
    %2656 = vmatprep.subr.bf16.mxu0 0
    %2657 = vmatpush1.bf16.msra.mxu0 %v2654
    %2658 = vmatprep.subr.bf16.mxu0 0
    %2659 = vmatpush1.bf16.msra.mxu0 0
    %2660 = vmatprep.subr.bf16.mxu0 0
    %2661 = vmatpush1.bf16.msra.mxu0 0
    %2662 = vmatprep.subr.bf16.mxu0 0
    %2663 = vmatpush1.bf16.msra.mxu0 0
    %2664 = vmatprep.subr.bf16.mxu0 0
    %2665 = vmatpush1.bf16.msra.mxu0 0
    %2666 = vmatprep.subr.bf16.mxu0 0
    %2667 = vmatpush1.bf16.msra.mxu0 0
    %2668 = vmatprep.subr.bf16.mxu0 0
    %2669 = vmatpush1.bf16.msra.mxu0 0
    %2670 = vmatprep.subr.bf16.mxu0 0
    %2671 = vmatpush1.bf16.msra.mxu0 0
    %2672 = vmatprep.subr.bf16.mxu0 0
    %2673 = vmatpush1.bf16.msra.mxu0 0
    %2674 = vmatprep.subr.bf16.mxu0 0
    %2675 = vmatpush1.bf16.msra.mxu0 0
    %2676 = vmatprep.subr.bf16.mxu0 0
    %2677 = vmatpush1.bf16.msra.mxu0 0
    %2678 = vmatprep.subr.bf16.mxu0 0
    %2679 = vmatpush1.bf16.msra.mxu0 0
    %2680 = vmatprep.subr.bf16.mxu0 0
    %2681 = vmatpush1.bf16.msra.mxu0 0
    %2682 = vmatprep.subr.bf16.mxu0 0
    %2683 = vmatpush1.bf16.msra.mxu0 0
    %2684 = vmatprep.subr.bf16.mxu0 0
    %2685 = vmatpush1.bf16.msra.mxu0 0
    %2686 = vmatprep.subr.bf16.mxu0 0
    %2687 = vmatpush1.bf16.msra.mxu0 0
    %2688 = vmatprep.mubr.bf16.mxu0 0
    %2689 = vmatmul.mubr.bf16.gmra.mrb[0].mxu0 %v2651
    %v2690 = vpop.f32.mrb[0].mxu0
    %v2691 = vadd.f32 0.0, %v2690
    %v2692 = vpop.f32.mrb[0].mxu0
    %v2693 = vpop.f32.mrb[0].mxu0
    %v2694 = vpop.f32.mrb[0].mxu0
    %2695 = vdwg.mxu0
    %v2696 = vrcp.pop %v2049
    %v2697 = vrcp.pop %v2052
    %v2698 = vrcp.pop %v2055
    %v2699 = vrcp.pop %v2058
    %v2700 = vrcp.pop %v2061
    %v2701 = vrcp.pop %v2064
    %v2702 = vrcp.pop %v2067
    %v2703 = vrcp.pop %v2070
    %v2704 = vmul.f32 %v2152, %v2696
    %v2705 = vmul.f32 %v2229, %v2697
    %v2706 = vmul.f32 %v2306, %v2698
    %v2707 = vmul.f32 %v2383, %v2699
    %v2708 = vmul.f32 %v2460, %v2700
    %v2709 = vmul.f32 %v2537, %v2701
    %v2710 = vmul.f32 %v2614, %v2702
    %v2711 = vmul.f32 %v2691, %v2703
    %v2714 = vcombine.high %v2704, %v2704
    %v2716 = vunpack.c.l.s4 1966171168
    %v2717 = vunpack.c.0.s8 %v2716
    %v2718 = vlaneseq
    %v2719 = vshrl.u32 %v2718, 7
    %v2720 = vsub.s32 %v2717, %v2719
    %v2721 = vrot.slane %v2704, %v2720
    %v2723 = vunpack.c.l.s4 1966171168
    %v2724 = vunpack.c.0.s8 %v2723
    %v2725 = vlaneseq
    %v2726 = vshrl.u32 %v2725, 7
    %v2727 = vsub.s32 %v2724, %v2726
    %v2728 = vrot.slane %v2714, %v2727
    %v2729 = vcombine.high %v2721, %v2721
    %v2730 = vcombine.high %v2728, %v2728
    %v2732 = vunpack.c.l.s4 1966171168
    %v2733 = vunpack.c.0.s8 %v2732
    %v2734 = vlaneseq
    %v2735 = vshrl.u32 %v2734, 7
    %v2736 = vsub.s32 %v2733, %v2735
    %v2737 = vrot.slane %v2721, %v2736
    %v2739 = vunpack.c.l.s4 1966171168
    %v2740 = vunpack.c.0.s8 %v2739
    %v2741 = vlaneseq
    %v2742 = vshrl.u32 %v2741, 7
    %v2743 = vsub.s32 %v2740, %v2742
    %v2744 = vrot.slane %v2728, %v2743
    %v2746 = vunpack.c.l.s4 1966171168
    %v2747 = vunpack.c.0.s8 %v2746
    %v2748 = vlaneseq
    %v2749 = vshrl.u32 %v2748, 7
    %v2750 = vsub.s32 %v2747, %v2749
    %v2751 = vrot.slane %v2729, %v2750
    %v2753 = vunpack.c.l.s4 1966171168
    %v2754 = vunpack.c.0.s8 %v2753
    %v2755 = vlaneseq
    %v2756 = vshrl.u32 %v2755, 7
    %v2757 = vsub.s32 %v2754, %v2756
    %v2758 = vrot.slane %v2730, %v2757
    %v2759 = vcombine.high %v2737, %v2737
    %v2760 = vcombine.high %v2744, %v2744
    %v2761 = vcombine.high %v2751, %v2751
    %v2762 = vcombine.high %v2758, %v2758
    %v2763 = vcombine.high %v2705, %v2705
    %v2765 = vunpack.c.l.s4 1966171168
    %v2766 = vunpack.c.0.s8 %v2765
    %v2767 = vlaneseq
    %v2768 = vshrl.u32 %v2767, 7
    %v2769 = vsub.s32 %v2766, %v2768
    %v2770 = vrot.slane %v2705, %v2769
    %v2772 = vunpack.c.l.s4 1966171168
    %v2773 = vunpack.c.0.s8 %v2772
    %v2774 = vlaneseq
    %v2775 = vshrl.u32 %v2774, 7
    %v2776 = vsub.s32 %v2773, %v2775
    %v2777 = vrot.slane %v2763, %v2776
    %v2778 = vcombine.high %v2770, %v2770
    %v2779 = vcombine.high %v2777, %v2777
    %v2781 = vunpack.c.l.s4 1966171168
    %v2782 = vunpack.c.0.s8 %v2781
    %v2783 = vlaneseq
    %v2784 = vshrl.u32 %v2783, 7
    %v2785 = vsub.s32 %v2782, %v2784
    %v2786 = vrot.slane %v2770, %v2785
    %v2788 = vunpack.c.l.s4 1966171168
    %v2789 = vunpack.c.0.s8 %v2788
    %v2790 = vlaneseq
    %v2791 = vshrl.u32 %v2790, 7
    %v2792 = vsub.s32 %v2789, %v2791
    %v2793 = vrot.slane %v2777, %v2792
    %v2795 = vunpack.c.l.s4 1966171168
    %v2796 = vunpack.c.0.s8 %v2795
    %v2797 = vlaneseq
    %v2798 = vshrl.u32 %v2797, 7
    %v2799 = vsub.s32 %v2796, %v2798
    %v2800 = vrot.slane %v2778, %v2799
    %v2802 = vunpack.c.l.s4 1966171168
    %v2803 = vunpack.c.0.s8 %v2802
    %v2804 = vlaneseq
    %v2805 = vshrl.u32 %v2804, 7
    %v2806 = vsub.s32 %v2803, %v2805
    %v2807 = vrot.slane %v2779, %v2806
    %v2808 = vcombine.high %v2786, %v2786
    %v2809 = vcombine.high %v2793, %v2793
    %v2810 = vcombine.high %v2800, %v2800
    %v2811 = vcombine.high %v2807, %v2807
    %v2830 = vcombine.high %v2706, %v2706
    %v2832 = vunpack.c.l.s4 1966171168
    %v2833 = vunpack.c.0.s8 %v2832
    %v2834 = vlaneseq
    %v2835 = vshrl.u32 %v2834, 7
    %v2836 = vsub.s32 %v2833, %v2835
    %v2837 = vrot.slane %v2706, %v2836
    %v2839 = vunpack.c.l.s4 1966171168
    %v2840 = vunpack.c.0.s8 %v2839
    %v2841 = vlaneseq
    %v2842 = vshrl.u32 %v2841, 7
    %v2843 = vsub.s32 %v2840, %v2842
    %v2844 = vrot.slane %v2830, %v2843
    %v2845 = vcombine.high %v2837, %v2837
    %v2846 = vcombine.high %v2844, %v2844
    %v2848 = vunpack.c.l.s4 1966171168
    %v2849 = vunpack.c.0.s8 %v2848
    %v2850 = vlaneseq
    %v2851 = vshrl.u32 %v2850, 7
    %v2852 = vsub.s32 %v2849, %v2851
    %v2853 = vrot.slane %v2837, %v2852
    %v2855 = vunpack.c.l.s4 1966171168
    %v2856 = vunpack.c.0.s8 %v2855
    %v2857 = vlaneseq
    %v2858 = vshrl.u32 %v2857, 7
    %v2859 = vsub.s32 %v2856, %v2858
    %v2860 = vrot.slane %v2844, %v2859
    %v2862 = vunpack.c.l.s4 1966171168
    %v2863 = vunpack.c.0.s8 %v2862
    %v2864 = vlaneseq
    %v2865 = vshrl.u32 %v2864, 7
    %v2866 = vsub.s32 %v2863, %v2865
    %v2867 = vrot.slane %v2845, %v2866
    %v2869 = vunpack.c.l.s4 1966171168
    %v2870 = vunpack.c.0.s8 %v2869
    %v2871 = vlaneseq
    %v2872 = vshrl.u32 %v2871, 7
    %v2873 = vsub.s32 %v2870, %v2872
    %v2874 = vrot.slane %v2846, %v2873
    %v2875 = vcombine.high %v2853, %v2853
    %v2876 = vcombine.high %v2860, %v2860
    %v2877 = vcombine.high %v2867, %v2867
    %v2878 = vcombine.high %v2874, %v2874
    %v2879 = vcombine.high %v2707, %v2707
    %v2881 = vunpack.c.l.s4 1966171168
    %v2882 = vunpack.c.0.s8 %v2881
    %v2883 = vlaneseq
    %v2884 = vshrl.u32 %v2883, 7
    %v2885 = vsub.s32 %v2882, %v2884
    %v2886 = vrot.slane %v2707, %v2885
    %v2888 = vunpack.c.l.s4 1966171168
    %v2889 = vunpack.c.0.s8 %v2888
    %v2890 = vlaneseq
    %v2891 = vshrl.u32 %v2890, 7
    %v2892 = vsub.s32 %v2889, %v2891
    %v2893 = vrot.slane %v2879, %v2892
    %v2894 = vcombine.high %v2886, %v2886
    %v2895 = vcombine.high %v2893, %v2893
    %v2897 = vunpack.c.l.s4 1966171168
    %v2898 = vunpack.c.0.s8 %v2897
    %v2899 = vlaneseq
    %v2900 = vshrl.u32 %v2899, 7
    %v2901 = vsub.s32 %v2898, %v2900
    %v2902 = vrot.slane %v2886, %v2901
    %v2904 = vunpack.c.l.s4 1966171168
    %v2905 = vunpack.c.0.s8 %v2904
    %v2906 = vlaneseq
    %v2907 = vshrl.u32 %v2906, 7
    %v2908 = vsub.s32 %v2905, %v2907
    %v2909 = vrot.slane %v2893, %v2908
    %v2911 = vunpack.c.l.s4 1966171168
    %v2912 = vunpack.c.0.s8 %v2911
    %v2913 = vlaneseq
    %v2914 = vshrl.u32 %v2913, 7
    %v2915 = vsub.s32 %v2912, %v2914
    %v2916 = vrot.slane %v2894, %v2915
    %v2918 = vunpack.c.l.s4 1966171168
    %v2919 = vunpack.c.0.s8 %v2918
    %v2920 = vlaneseq
    %v2921 = vshrl.u32 %v2920, 7
    %v2922 = vsub.s32 %v2919, %v2921
    %v2923 = vrot.slane %v2895, %v2922
    %v2924 = vcombine.high %v2902, %v2902
    %v2925 = vcombine.high %v2909, %v2909
    %v2926 = vcombine.high %v2916, %v2916
    %v2927 = vcombine.high %v2923, %v2923
    %v2930 = vcombine.high %v2708, %v2708
    %v2932 = vunpack.c.l.s4 1966171168
    %v2933 = vunpack.c.0.s8 %v2932
    %v2934 = vlaneseq
    %v2935 = vshrl.u32 %v2934, 7
    %v2936 = vsub.s32 %v2933, %v2935
    %v2937 = vrot.slane %v2708, %v2936
    %v2939 = vunpack.c.l.s4 1966171168
    %v2940 = vunpack.c.0.s8 %v2939
    %v2941 = vlaneseq
    %v2942 = vshrl.u32 %v2941, 7
    %v2943 = vsub.s32 %v2940, %v2942
    %v2944 = vrot.slane %v2930, %v2943
    %v2945 = vcombine.high %v2937, %v2937
    %v2946 = vcombine.high %v2944, %v2944
    %v2948 = vunpack.c.l.s4 1966171168
    %v2949 = vunpack.c.0.s8 %v2948
    %v2950 = vlaneseq
    %v2951 = vshrl.u32 %v2950, 7
    %v2952 = vsub.s32 %v2949, %v2951
    %v2953 = vrot.slane %v2937, %v2952
    %v2955 = vunpack.c.l.s4 1966171168
    %v2956 = vunpack.c.0.s8 %v2955
    %v2957 = vlaneseq
    %v2958 = vshrl.u32 %v2957, 7
    %v2959 = vsub.s32 %v2956, %v2958
    %v2960 = vrot.slane %v2944, %v2959
    %v2962 = vunpack.c.l.s4 1966171168
    %v2963 = vunpack.c.0.s8 %v2962
    %v2964 = vlaneseq
    %v2965 = vshrl.u32 %v2964, 7
    %v2966 = vsub.s32 %v2963, %v2965
    %v2967 = vrot.slane %v2945, %v2966
    %v2969 = vunpack.c.l.s4 1966171168
    %v2970 = vunpack.c.0.s8 %v2969
    %v2971 = vlaneseq
    %v2972 = vshrl.u32 %v2971, 7
    %v2973 = vsub.s32 %v2970, %v2972
    %v2974 = vrot.slane %v2946, %v2973
    %v2975 = vcombine.high %v2953, %v2953
    %v2976 = vcombine.high %v2960, %v2960
    %v2977 = vcombine.high %v2967, %v2967
    %v2978 = vcombine.high %v2974, %v2974
    %v2979 = vcombine.high %v2709, %v2709
    %v2981 = vunpack.c.l.s4 1966171168
    %v2982 = vunpack.c.0.s8 %v2981
    %v2983 = vlaneseq
    %v2984 = vshrl.u32 %v2983, 7
    %v2985 = vsub.s32 %v2982, %v2984
    %v2986 = vrot.slane %v2709, %v2985
    %v2988 = vunpack.c.l.s4 1966171168
    %v2989 = vunpack.c.0.s8 %v2988
    %v2990 = vlaneseq
    %v2991 = vshrl.u32 %v2990, 7
    %v2992 = vsub.s32 %v2989, %v2991
    %v2993 = vrot.slane %v2979, %v2992
    %v2994 = vcombine.high %v2986, %v2986
    %v2995 = vcombine.high %v2993, %v2993
    %v2997 = vunpack.c.l.s4 1966171168
    %v2998 = vunpack.c.0.s8 %v2997
    %v2999 = vlaneseq
    %v3000 = vshrl.u32 %v2999, 7
    %v3001 = vsub.s32 %v2998, %v3000
    %v3002 = vrot.slane %v2986, %v3001
    %v3004 = vunpack.c.l.s4 1966171168
    %v3005 = vunpack.c.0.s8 %v3004
    %v3006 = vlaneseq
    %v3007 = vshrl.u32 %v3006, 7
    %v3008 = vsub.s32 %v3005, %v3007
    %v3009 = vrot.slane %v2993, %v3008
    %v3011 = vunpack.c.l.s4 1966171168
    %v3012 = vunpack.c.0.s8 %v3011
    %v3013 = vlaneseq
    %v3014 = vshrl.u32 %v3013, 7
    %v3015 = vsub.s32 %v3012, %v3014
    %v3016 = vrot.slane %v2994, %v3015
    %v3018 = vunpack.c.l.s4 1966171168
    %v3019 = vunpack.c.0.s8 %v3018
    %v3020 = vlaneseq
    %v3021 = vshrl.u32 %v3020, 7
    %v3022 = vsub.s32 %v3019, %v3021
    %v3023 = vrot.slane %v2995, %v3022
    %v3024 = vcombine.high %v3002, %v3002
    %v3025 = vcombine.high %v3009, %v3009
    %v3026 = vcombine.high %v3016, %v3016
    %v3027 = vcombine.high %v3023, %v3023
    %v3030 = vcombine.high %v2710, %v2710
    %v3032 = vunpack.c.l.s4 1966171168
    %v3033 = vunpack.c.0.s8 %v3032
    %v3034 = vlaneseq
    %v3035 = vshrl.u32 %v3034, 7
    %v3036 = vsub.s32 %v3033, %v3035
    %v3037 = vrot.slane %v2710, %v3036
    %v3039 = vunpack.c.l.s4 1966171168
    %v3040 = vunpack.c.0.s8 %v3039
    %v3041 = vlaneseq
    %v3042 = vshrl.u32 %v3041, 7
    %v3043 = vsub.s32 %v3040, %v3042
    %v3044 = vrot.slane %v3030, %v3043
    %v3045 = vcombine.high %v3037, %v3037
    %v3046 = vcombine.high %v3044, %v3044
    %v3048 = vunpack.c.l.s4 1966171168
    %v3049 = vunpack.c.0.s8 %v3048
    %v3050 = vlaneseq
    %v3051 = vshrl.u32 %v3050, 7
    %v3052 = vsub.s32 %v3049, %v3051
    %v3053 = vrot.slane %v3037, %v3052
    %v3055 = vunpack.c.l.s4 1966171168
    %v3056 = vunpack.c.0.s8 %v3055
    %v3057 = vlaneseq
    %v3058 = vshrl.u32 %v3057, 7
    %v3059 = vsub.s32 %v3056, %v3058
    %v3060 = vrot.slane %v3044, %v3059
    %v3062 = vunpack.c.l.s4 1966171168
    %v3063 = vunpack.c.0.s8 %v3062
    %v3064 = vlaneseq
    %v3065 = vshrl.u32 %v3064, 7
    %v3066 = vsub.s32 %v3063, %v3065
    %v3067 = vrot.slane %v3045, %v3066
    %v3069 = vunpack.c.l.s4 1966171168
    %v3070 = vunpack.c.0.s8 %v3069
    %v3071 = vlaneseq
    %v3072 = vshrl.u32 %v3071, 7
    %v3073 = vsub.s32 %v3070, %v3072
    %v3074 = vrot.slane %v3046, %v3073
    %v3075 = vcombine.high %v3053, %v3053
    %v3076 = vcombine.high %v3060, %v3060
    %v3077 = vcombine.high %v3067, %v3067
    %v3078 = vcombine.high %v3074, %v3074
    %v3079 = vcombine.high %v2711, %v2711
    %v3081 = vunpack.c.l.s4 1966171168
    %v3082 = vunpack.c.0.s8 %v3081
    %v3083 = vlaneseq
    %v3084 = vshrl.u32 %v3083, 7
    %v3085 = vsub.s32 %v3082, %v3084
    %v3086 = vrot.slane %v2711, %v3085
    %v3088 = vunpack.c.l.s4 1966171168
    %v3089 = vunpack.c.0.s8 %v3088
    %v3090 = vlaneseq
    %v3091 = vshrl.u32 %v3090, 7
    %v3092 = vsub.s32 %v3089, %v3091
    %v3093 = vrot.slane %v3079, %v3092
    %v3094 = vcombine.high %v3086, %v3086
    %v3095 = vcombine.high %v3093, %v3093
    %v3097 = vunpack.c.l.s4 1966171168
    %v3098 = vunpack.c.0.s8 %v3097
    %v3099 = vlaneseq
    %v3100 = vshrl.u32 %v3099, 7
    %v3101 = vsub.s32 %v3098, %v3100
    %v3102 = vrot.slane %v3086, %v3101
    %v3104 = vunpack.c.l.s4 1966171168
    %v3105 = vunpack.c.0.s8 %v3104
    %v3106 = vlaneseq
    %v3107 = vshrl.u32 %v3106, 7
    %v3108 = vsub.s32 %v3105, %v3107
    %v3109 = vrot.slane %v3093, %v3108
    %v3111 = vunpack.c.l.s4 1966171168
    %v3112 = vunpack.c.0.s8 %v3111
    %v3113 = vlaneseq
    %v3114 = vshrl.u32 %v3113, 7
    %v3115 = vsub.s32 %v3112, %v3114
    %v3116 = vrot.slane %v3094, %v3115
    %v3118 = vunpack.c.l.s4 1966171168
    %v3119 = vunpack.c.0.s8 %v3118
    %v3120 = vlaneseq
    %v3121 = vshrl.u32 %v3120, 7
    %v3122 = vsub.s32 %v3119, %v3121
    %v3123 = vrot.slane %v3095, %v3122
    %v3124 = vcombine.high %v3102, %v3102
    %v3125 = vcombine.high %v3109, %v3109
    %v3126 = vcombine.high %v3116, %v3116
    %v3127 = vcombine.high %v3123, %v3123
    %v3128 = vlaneseq
    %v3129 = vshrl.u32 %v3128, 7
    %v3130 = vsub.s32 0, %v3129
    %v3131 = vrot.slane %v2853, %v3130
    %v3132 = vlaneseq
    %v3133 = vshrl.u32 %v3132, 7
    %v3134 = vsub.s32 0, %v3133
    %v3135 = vrot.slane %v2867, %v3134
    %v3136 = vlaneseq
    %v3137 = vshrl.u32 %v3136, 7
    %v3138 = vsub.s32 0, %v3137
    %v3139 = vrot.slane %v2875, %v3138
    %v3140 = vlaneseq
    %v3141 = vshrl.u32 %v3140, 7
    %v3142 = vsub.s32 0, %v3141
    %v3143 = vrot.slane %v2877, %v3142
    %v3144 = vlaneseq
    %v3145 = vshrl.u32 %v3144, 7
    %v3146 = vsub.s32 0, %v3145
    %v3147 = vrot.slane %v2860, %v3146
    %v3148 = vlaneseq
    %v3149 = vshrl.u32 %v3148, 7
    %v3150 = vsub.s32 0, %v3149
    %v3151 = vrot.slane %v2874, %v3150
    %v3152 = vlaneseq
    %v3153 = vshrl.u32 %v3152, 7
    %v3154 = vsub.s32 0, %v3153
    %v3155 = vrot.slane %v2876, %v3154
    %v3156 = vlaneseq
    %v3157 = vshrl.u32 %v3156, 7
    %v3158 = vsub.s32 0, %v3157
    %v3159 = vrot.slane %v2878, %v3158
    %v3160 = vlaneseq
    %v3161 = vshrl.u32 %v3160, 7
    %v3162 = vsub.s32 0, %v3161
    %v3163 = vrot.slane %v2902, %v3162
    %v3164 = vlaneseq
    %v3165 = vshrl.u32 %v3164, 7
    %v3166 = vsub.s32 0, %v3165
    %v3167 = vrot.slane %v2916, %v3166
    %v3168 = vlaneseq
    %v3169 = vshrl.u32 %v3168, 7
    %v3170 = vsub.s32 0, %v3169
    %v3171 = vrot.slane %v2924, %v3170
    %v3172 = vlaneseq
    %v3173 = vshrl.u32 %v3172, 7
    %v3174 = vsub.s32 0, %v3173
    %v3175 = vrot.slane %v2926, %v3174
    %v3176 = vlaneseq
    %v3177 = vshrl.u32 %v3176, 7
    %v3178 = vsub.s32 0, %v3177
    %v3179 = vrot.slane %v2909, %v3178
    %v3180 = vlaneseq
    %v3181 = vshrl.u32 %v3180, 7
    %v3182 = vsub.s32 0, %v3181
    %v3183 = vrot.slane %v2923, %v3182
    %v3184 = vlaneseq
    %v3185 = vshrl.u32 %v3184, 7
    %v3186 = vsub.s32 0, %v3185
    %v3187 = vrot.slane %v2925, %v3186
    %v3188 = vlaneseq
    %v3189 = vshrl.u32 %v3188, 7
    %v3190 = vsub.s32 0, %v3189
    %v3191 = vrot.slane %v2927, %v3190
    %v3208 = vlaneseq
    %v3209 = vshrl.u32 %v3208, 7
    %v3210 = vsub.s32 0, %v3209
    %v3211 = vrot.slane %v2953, %v3210
    %v3212 = vlaneseq
    %v3213 = vshrl.u32 %v3212, 7
    %v3214 = vsub.s32 0, %v3213
    %v3215 = vrot.slane %v2967, %v3214
    %v3216 = vlaneseq
    %v3217 = vshrl.u32 %v3216, 7
    %v3218 = vsub.s32 0, %v3217
    %v3219 = vrot.slane %v2975, %v3218
    %v3220 = vlaneseq
    %v3221 = vshrl.u32 %v3220, 7
    %v3222 = vsub.s32 0, %v3221
    %v3223 = vrot.slane %v2977, %v3222
    %v3224 = vlaneseq
    %v3225 = vshrl.u32 %v3224, 7
    %v3226 = vsub.s32 0, %v3225
    %v3227 = vrot.slane %v2960, %v3226
    %v3228 = vlaneseq
    %v3229 = vshrl.u32 %v3228, 7
    %v3230 = vsub.s32 0, %v3229
    %v3231 = vrot.slane %v2974, %v3230
    %v3232 = vlaneseq
    %v3233 = vshrl.u32 %v3232, 7
    %v3234 = vsub.s32 0, %v3233
    %v3235 = vrot.slane %v2976, %v3234
    %v3236 = vlaneseq
    %v3237 = vshrl.u32 %v3236, 7
    %v3238 = vsub.s32 0, %v3237
    %v3239 = vrot.slane %v2978, %v3238
    %v3240 = vlaneseq
    %v3241 = vshrl.u32 %v3240, 7
    %v3242 = vsub.s32 0, %v3241
    %v3243 = vrot.slane %v3002, %v3242
    %v3244 = vlaneseq
    %v3245 = vshrl.u32 %v3244, 7
    %v3246 = vsub.s32 0, %v3245
    %v3247 = vrot.slane %v3016, %v3246
    %v3248 = vlaneseq
    %v3249 = vshrl.u32 %v3248, 7
    %v3250 = vsub.s32 0, %v3249
    %v3251 = vrot.slane %v3024, %v3250
    %v3252 = vlaneseq
    %v3253 = vshrl.u32 %v3252, 7
    %v3254 = vsub.s32 0, %v3253
    %v3255 = vrot.slane %v3026, %v3254
    %v3256 = vlaneseq
    %v3257 = vshrl.u32 %v3256, 7
    %v3258 = vsub.s32 0, %v3257
    %v3259 = vrot.slane %v3009, %v3258
    %v3260 = vlaneseq
    %v3261 = vshrl.u32 %v3260, 7
    %v3262 = vsub.s32 0, %v3261
    %v3263 = vrot.slane %v3023, %v3262
    %v3264 = vlaneseq
    %v3265 = vshrl.u32 %v3264, 7
    %v3266 = vsub.s32 0, %v3265
    %v3267 = vrot.slane %v3025, %v3266
    %v3268 = vlaneseq
    %v3269 = vshrl.u32 %v3268, 7
    %v3270 = vsub.s32 0, %v3269
    %v3271 = vrot.slane %v3027, %v3270
    %v3288 = vlaneseq
    %v3289 = vshrl.u32 %v3288, 7
    %v3290 = vsub.s32 0, %v3289
    %v3291 = vrot.slane %v3053, %v3290
    %v3292 = vlaneseq
    %v3293 = vshrl.u32 %v3292, 7
    %v3294 = vsub.s32 0, %v3293
    %v3295 = vrot.slane %v3067, %v3294
    %v3296 = vlaneseq
    %v3297 = vshrl.u32 %v3296, 7
    %v3298 = vsub.s32 0, %v3297
    %v3299 = vrot.slane %v3075, %v3298
    %v3300 = vlaneseq
    %v3301 = vshrl.u32 %v3300, 7
    %v3302 = vsub.s32 0, %v3301
    %v3303 = vrot.slane %v3077, %v3302
    %v3304 = vlaneseq
    %v3305 = vshrl.u32 %v3304, 7
    %v3306 = vsub.s32 0, %v3305
    %v3307 = vrot.slane %v3060, %v3306
    %v3308 = vlaneseq
    %v3309 = vshrl.u32 %v3308, 7
    %v3310 = vsub.s32 0, %v3309
    %v3311 = vrot.slane %v3074, %v3310
    %v3312 = vlaneseq
    %v3313 = vshrl.u32 %v3312, 7
    %v3314 = vsub.s32 0, %v3313
    %v3315 = vrot.slane %v3076, %v3314
    %v3316 = vlaneseq
    %v3317 = vshrl.u32 %v3316, 7
    %v3318 = vsub.s32 0, %v3317
    %v3319 = vrot.slane %v3078, %v3318
    %v3320 = vlaneseq
    %v3321 = vshrl.u32 %v3320, 7
    %v3322 = vsub.s32 0, %v3321
    %v3323 = vrot.slane %v3102, %v3322
    %v3324 = vlaneseq
    %v3325 = vshrl.u32 %v3324, 7
    %v3326 = vsub.s32 0, %v3325
    %v3327 = vrot.slane %v3116, %v3326
    %v3328 = vlaneseq
    %v3329 = vshrl.u32 %v3328, 7
    %v3330 = vsub.s32 0, %v3329
    %v3331 = vrot.slane %v3124, %v3330
    %v3332 = vlaneseq
    %v3333 = vshrl.u32 %v3332, 7
    %v3334 = vsub.s32 0, %v3333
    %v3335 = vrot.slane %v3126, %v3334
    %v3336 = vlaneseq
    %v3337 = vshrl.u32 %v3336, 7
    %v3338 = vsub.s32 0, %v3337
    %v3339 = vrot.slane %v3109, %v3338
    %v3340 = vlaneseq
    %v3341 = vshrl.u32 %v3340, 7
    %v3342 = vsub.s32 0, %v3341
    %v3343 = vrot.slane %v3123, %v3342
    %v3344 = vlaneseq
    %v3345 = vshrl.u32 %v3344, 7
    %v3346 = vsub.s32 0, %v3345
    %v3347 = vrot.slane %v3125, %v3346
    %v3348 = vlaneseq
    %v3349 = vshrl.u32 %v3348, 7
    %v3350 = vsub.s32 0, %v3349
    %v3351 = vrot.slane %v3127, %v3350
    %vm3368 = vcmask 1040384
    %v3369 = vsel %vm3368, %v2737, %v3131
    %v3370 = vsel %vm3368, %v2751, %v3135
    %v3371 = vsel %vm3368, %v2759, %v3139
    %v3372 = vsel %vm3368, %v2761, %v3143
    %v3373 = vsel %vm3368, %v2744, %v3147
    %v3374 = vsel %vm3368, %v2758, %v3151
    %v3375 = vsel %vm3368, %v2760, %v3155
    %v3376 = vsel %vm3368, %v2762, %v3159
    %v3377 = vsel %vm3368, %v2786, %v3163
    %v3378 = vsel %vm3368, %v2800, %v3167
    %v3379 = vsel %vm3368, %v2808, %v3171
    %v3380 = vsel %vm3368, %v2810, %v3175
    %v3381 = vsel %vm3368, %v2793, %v3179
    %v3382 = vsel %vm3368, %v2807, %v3183
    %v3383 = vsel %vm3368, %v2809, %v3187
    %v3384 = vsel %vm3368, %v2811, %v3191
    %vm3385 = vcmask 1041408
    %v3386 = vsel %vm3385, %v3369, %v3211
    %v3387 = vsel %vm3385, %v3370, %v3215
    %v3388 = vsel %vm3385, %v3371, %v3219
    %v3389 = vsel %vm3385, %v3372, %v3223
    %v3390 = vsel %vm3385, %v3373, %v3227
    %v3391 = vsel %vm3385, %v3374, %v3231
    %v3392 = vsel %vm3385, %v3375, %v3235
    %v3393 = vsel %vm3385, %v3376, %v3239
    %v3394 = vsel %vm3385, %v3377, %v3243
    %v3395 = vsel %vm3385, %v3378, %v3247
    %v3396 = vsel %vm3385, %v3379, %v3251
    %v3397 = vsel %vm3385, %v3380, %v3255
    %v3398 = vsel %vm3385, %v3381, %v3259
    %v3399 = vsel %vm3385, %v3382, %v3263
    %v3400 = vsel %vm3385, %v3383, %v3267
    %v3401 = vsel %vm3385, %v3384, %v3271
    %vm3402 = vcmask 1042432
    %v3403 = vsel %vm3402, %v3386, %v3291
    %v3404 = vsel %vm3402, %v3387, %v3295
    %v3405 = vsel %vm3402, %v3388, %v3299
    %v3406 = vsel %vm3402, %v3389, %v3303
    %v3407 = vsel %vm3402, %v3390, %v3307
    %v3408 = vsel %vm3402, %v3391, %v3311
    %v3409 = vsel %vm3402, %v3392, %v3315
    %v3410 = vsel %vm3402, %v3393, %v3319
    %v3411 = vsel %vm3402, %v3394, %v3323
    %v3412 = vsel %vm3402, %v3395, %v3327
    %v3413 = vsel %vm3402, %v3396, %v3331
    %v3414 = vsel %vm3402, %v3397, %v3335
    %v3415 = vsel %vm3402, %v3398, %v3339
    %v3416 = vsel %vm3402, %v3399, %v3343
    %v3417 = vsel %vm3402, %v3400, %v3347
    %v3418 = vsel %vm3402, %v3401, %v3351
    %v3419 = vcombine.low %v3403, %v3405
    %v3421 = vunpack.c.l.s4 1983009808
    %v3422 = vunpack.c.0.s8 %v3421
    %v3423 = vlaneseq
    %v3424 = vshrl.u32 %v3423, 7
    %v3425 = vsub.s32 %v3422, %v3424
    %v3426 = vrot.slane %v3419, %v3425
    %v3427 = vcombine.low %v3404, %v3406
    %v3429 = vunpack.c.l.s4 1983009808
    %v3430 = vunpack.c.0.s8 %v3429
    %v3431 = vlaneseq
    %v3432 = vshrl.u32 %v3431, 7
    %v3433 = vsub.s32 %v3430, %v3432
    %v3434 = vrot.slane %v3427, %v3433
    %v3435 = vcombine.low %v3407, %v3409
    %v3437 = vunpack.c.l.s4 1983009808
    %v3438 = vunpack.c.0.s8 %v3437
    %v3439 = vlaneseq
    %v3440 = vshrl.u32 %v3439, 7
    %v3441 = vsub.s32 %v3438, %v3440
    %v3442 = vrot.slane %v3435, %v3441
    %v3443 = vcombine.low %v3408, %v3410
    %v3445 = vunpack.c.l.s4 1983009808
    %v3446 = vunpack.c.0.s8 %v3445
    %v3447 = vlaneseq
    %v3448 = vshrl.u32 %v3447, 7
    %v3449 = vsub.s32 %v3446, %v3448
    %v3450 = vrot.slane %v3443, %v3449
    %v3451 = vcombine.low %v3426, %v3434
    %v3452 = vcombine.high %v3426, %v3434
    %v3454 = vunpack.c.l.s4 1934713408
    %v3455 = vunpack.c.0.s8 %v3454
    %v3456 = vlaneseq
    %v3457 = vshrl.u32 %v3456, 7
    %v3458 = vsub.s32 %v3455, %v3457
    %v3459 = vrot.slane %v3451, %v3458
    %v3461 = vunpack.c.l.s4 1934713408
    %v3462 = vunpack.c.0.s8 %v3461
    %v3463 = vlaneseq
    %v3464 = vshrl.u32 %v3463, 7
    %v3465 = vsub.s32 %v3462, %v3464
    %v3466 = vrot.slane %v3452, %v3465
    %v3467 = vcombine.low %v3442, %v3450
    %v3468 = vcombine.high %v3442, %v3450
    %v3470 = vunpack.c.l.s4 1934713408
    %v3471 = vunpack.c.0.s8 %v3470
    %v3472 = vlaneseq
    %v3473 = vshrl.u32 %v3472, 7
    %v3474 = vsub.s32 %v3471, %v3473
    %v3475 = vrot.slane %v3467, %v3474
    %v3477 = vunpack.c.l.s4 1934713408
    %v3478 = vunpack.c.0.s8 %v3477
    %v3479 = vlaneseq
    %v3480 = vshrl.u32 %v3479, 7
    %v3481 = vsub.s32 %v3478, %v3480
    %v3482 = vrot.slane %v3468, %v3481
    %v3483 = vcombine.low %v3459, %v3475
    %v3484 = vcombine.high %v3459, %v3475
    %v3485 = vcombine.low %v3466, %v3482
    %v3486 = vcombine.high %v3466, %v3482
    %v3487 = vcombine.low %v3411, %v3413
    %v3489 = vunpack.c.l.s4 1983009808
    %v3490 = vunpack.c.0.s8 %v3489
    %v3491 = vlaneseq
    %v3492 = vshrl.u32 %v3491, 7
    %v3493 = vsub.s32 %v3490, %v3492
    %v3494 = vrot.slane %v3487, %v3493
    %v3495 = vcombine.low %v3412, %v3414
    %v3497 = vunpack.c.l.s4 1983009808
    %v3498 = vunpack.c.0.s8 %v3497
    %v3499 = vlaneseq
    %v3500 = vshrl.u32 %v3499, 7
    %v3501 = vsub.s32 %v3498, %v3500
    %v3502 = vrot.slane %v3495, %v3501
    %v3503 = vcombine.low %v3415, %v3417
    %v3505 = vunpack.c.l.s4 1983009808
    %v3506 = vunpack.c.0.s8 %v3505
    %v3507 = vlaneseq
    %v3508 = vshrl.u32 %v3507, 7
    %v3509 = vsub.s32 %v3506, %v3508
    %v3510 = vrot.slane %v3503, %v3509
    %v3511 = vcombine.low %v3416, %v3418
    %v3513 = vunpack.c.l.s4 1983009808
    %v3514 = vunpack.c.0.s8 %v3513
    %v3515 = vlaneseq
    %v3516 = vshrl.u32 %v3515, 7
    %v3517 = vsub.s32 %v3514, %v3516
    %v3518 = vrot.slane %v3511, %v3517
    %v3519 = vcombine.low %v3494, %v3502
    %v3520 = vcombine.high %v3494, %v3502
    %v3522 = vunpack.c.l.s4 1934713408
    %v3523 = vunpack.c.0.s8 %v3522
    %v3524 = vlaneseq
    %v3525 = vshrl.u32 %v3524, 7
    %v3526 = vsub.s32 %v3523, %v3525
    %v3527 = vrot.slane %v3519, %v3526
    %v3529 = vunpack.c.l.s4 1934713408
    %v3530 = vunpack.c.0.s8 %v3529
    %v3531 = vlaneseq
    %v3532 = vshrl.u32 %v3531, 7
    %v3533 = vsub.s32 %v3530, %v3532
    %v3534 = vrot.slane %v3520, %v3533
    %v3535 = vcombine.low %v3510, %v3518
    %v3536 = vcombine.high %v3510, %v3518
    %v3538 = vunpack.c.l.s4 1934713408
    %v3539 = vunpack.c.0.s8 %v3538
    %v3540 = vlaneseq
    %v3541 = vshrl.u32 %v3540, 7
    %v3542 = vsub.s32 %v3539, %v3541
    %v3543 = vrot.slane %v3535, %v3542
    %v3545 = vunpack.c.l.s4 1934713408
    %v3546 = vunpack.c.0.s8 %v3545
    %v3547 = vlaneseq
    %v3548 = vshrl.u32 %v3547, 7
    %v3549 = vsub.s32 %v3546, %v3548
    %v3550 = vrot.slane %v3536, %v3549
    %v3551 = vcombine.low %v3527, %v3543
    %v3552 = vcombine.high %v3527, %v3543
    %v3553 = vcombine.low %v3534, %v3550
    %v3554 = vcombine.high %v3534, %v3550
    %3557 = vrot.lane.b32.xlu0 %v3484, 8
    %v3558 = vpop.permute.xlu0 %3557
    %3559 = vrot.lane.b32.xlu0 %v3552, 8
    %v3560 = vpop.permute.xlu0 %3559
    %3565 = vrot.lane.b32.xlu0 %v3485, 16
    %v3566 = vpop.permute.xlu0 %3565
    %3567 = vrot.lane.b32.xlu0 %v3553, 16
    %v3568 = vpop.permute.xlu0 %3567
    %3573 = vrot.lane.b32.xlu0 %v3486, 24
    %v3574 = vpop.permute.xlu0 %3573
    %3575 = vrot.lane.b32.xlu0 %v3554, 24
    %v3576 = vpop.permute.xlu0 %3575
    %v3579 = vsel %vm1196, %v3483, %v3558
    %v3580 = vsel %vm1196, %v3551, %v3560
    %vm3581 = vcmask 130048
    %v3582 = vsel %vm3581, %v3579, %v3566
    %v3583 = vsel %vm3581, %v3580, %v3568
    %vm3584 = vcmask 195584
    %v3585 = vsel %vm3584, %v3582, %v3574
    %v3586 = vsel %vm3584, %v3583, %v3576
    %v3587 = vpack.c.bf16 %v3586, %v3585
    %v3588 = vld [vmem:[%s2] sm:$0xf]
    %v3589 = vld [vmem:[%s2 + $0x4] sm:$0xf]
    %v3590 = vld [vmem:[%s2 + $0x8] sm:$0xf]
    %v3591 = vld [vmem:[%s2 + $0xc] sm:$0xf]
    %v3592 = vld [vmem:[%s3] sm:$0x1]
    %v3594 = vlaneseq
    %v3595 = vshrl.u32 %v3594, 7
    %v3596 = vsub.s32 0, %v3595
    %v3597 = vrot.slane %v3592, %v3596
    %v3603 = vunpack.c.l.b16 %v3588
    %v3604 = vunpack.c.l.b16 %v3589
    %v3605 = vunpack.c.l.b16 %v3590
    %v3606 = vunpack.c.l.b16 %v3591
    %v3607 = vpack.c.b16 %v3604, %v3603
    %v3608 = vpack.c.b16 %v3606, %v3605
    %v3612 = vsel %vm62, %v3587, 0
    %3614 = vmatprep.subr.bf16.mxu0 0
    %3615 = vmatpush1.bf16.msra.mxu0 %v3607
    %3616 = vmatprep.subr.bf16.mxu0 0
    %3617 = vmatpush1.bf16.msra.mxu0 %v3608
    %3618 = vmatprep.subr.bf16.mxu0 0
    %3619 = vmatpush1.bf16.msra.mxu0 0
    %3620 = vmatprep.subr.bf16.mxu0 0
    %3621 = vmatpush1.bf16.msra.mxu0 0
    %3622 = vmatprep.subr.bf16.mxu0 0
    %3623 = vmatpush1.bf16.msra.mxu0 0
    %3624 = vmatprep.subr.bf16.mxu0 0
    %3625 = vmatpush1.bf16.msra.mxu0 0
    %3626 = vmatprep.subr.bf16.mxu0 0
    %3627 = vmatpush1.bf16.msra.mxu0 0
    %3628 = vmatprep.subr.bf16.mxu0 0
    %3629 = vmatpush1.bf16.msra.mxu0 0
    %3630 = vmatprep.subr.bf16.mxu0 0
    %3631 = vmatpush1.bf16.msra.mxu0 0
    %3632 = vmatprep.subr.bf16.mxu0 0
    %3633 = vmatpush1.bf16.msra.mxu0 0
    %3634 = vmatprep.subr.bf16.mxu0 0
    %3635 = vmatpush1.bf16.msra.mxu0 0
    %3636 = vmatprep.subr.bf16.mxu0 0
    %3637 = vmatpush1.bf16.msra.mxu0 0
    %3638 = vmatprep.subr.bf16.mxu0 0
    %3639 = vmatpush1.bf16.msra.mxu0 0
    %3640 = vmatprep.subr.bf16.mxu0 0
    %3641 = vmatpush1.bf16.msra.mxu0 0
    %3642 = vmatprep.subr.bf16.mxu0 0
    %3643 = vmatpush1.bf16.msra.mxu0 0
    %3644 = vmatprep.subr.bf16.mxu0 0
    %3645 = vmatpush1.bf16.msra.mxu0 0
    %3646 = vmatprep.mubr.bf16.mxu0 0
    %3647 = vmatmul.mubr.bf16.gmra.mrb[0].mxu0 %v3612
    %v3648 = vpop.f32.mrb[0].mxu0
    %v3649 = vadd.f32 %v3597, %v3648
    %v3650 = vpop.f32.mrb[0].mxu0
    %v3651 = vpop.f32.mrb[0].mxu0
    %v3652 = vadd.f32 %v3597, %v3651
    %v3653 = vpop.f32.mrb[0].mxu0
    %3654 = vdwg.mxu0
    %v3655 = vadd.f32 %v43, %v3649
    %v3656 = vadd.f32 %v44, %v3652
    %v3657 = vld [vmem:[%s4] sm:$0x1]
    %v3658 = vld [vmem:[%s5] sm:$0x1]
    %v3659 = vsel %vm62, %v3655, 0.0
    %3660 = vadd.xlane.f32.xlu0 %v3659
    %v3661 = vpop.xlane.xlu0 %3660
    %v3662 = vsel %vm62, %v3656, 0.0
    %3663 = vadd.xlane.f32.xlu0 %v3662
    %v3664 = vpop.xlane.xlu0 %3663
    %v3665 = vrcp.pop 32.0
    %v3666 = vmul.f32 %v3661, %v3665
    %v3667 = vmul.f32 %v3664, %v3665
    %v3668 = vsub.f32 %v3655, %v3666
    %v3669 = vsub.f32 %v3656, %v3667
    %v3670 = vmul.f32 %v3668, %v3668
    %v3671 = vmul.f32 %v3669, %v3669
    %v3672 = vsel %vm62, %v3670, 0.0
    %3673 = vadd.xlane.f32.xlu0 %v3672
    %v3674 = vpop.xlane.xlu0 %3673
    %v3675 = vsel %vm62, %v3671, 0.0
    %3676 = vadd.xlane.f32.xlu0 %v3675
    %v3677 = vpop.xlane.xlu0 %3676
    %v3678 = vmul.f32 %v3674, %v3665
    %v3679 = vmul.f32 %v3677, %v3665
    %v3680 = vadd.f32 %v3678, 1e-05
    %v3681 = vadd.f32 %v3679, 1e-05
    %v3682 = vrsqrt.pop %v3680
    %v3683 = vrsqrt.pop %v3681
    %v3684 = vmul.f32 %v3668, %v3682
    %v3685 = vmul.f32 %v3669, %v3683
    %v3687 = vlaneseq
    %v3688 = vshrl.u32 %v3687, 7
    %v3689 = vsub.s32 0, %v3688
    %v3690 = vrot.slane %v3657, %v3689
    %v3692 = vmul.f32 %v3684, %v3690
    %v3693 = vmul.f32 %v3685, %v3690
    %v3695 = vlaneseq
    %v3696 = vshrl.u32 %v3695, 7
    %v3697 = vsub.s32 0, %v3696
    %v3698 = vrot.slane %v3658, %v3697
    %v3700 = vadd.f32 %v3692, %v3698
    %v3701 = vadd.f32 %v3693, %v3698
    %v3702 = vpack.c.bf16 %v3701, %v3700
    %v3703 = vld [vmem:[%s6] sm:$0xf]
    %v3704 = vld [vmem:[%s6 + $0x4] sm:$0xf]
    %v3705 = vld [vmem:[%s6 + $0x8] sm:$0xf]
    %v3706 = vld [vmem:[%s6 + $0xc] sm:$0xf]
    %v3707 = vld [vmem:[%s7] sm:$0x1]
    %v3709 = vlaneseq
    %v3710 = vshrl.u32 %v3709, 7
    %v3711 = vsub.s32 0, %v3710
    %v3712 = vrot.slane %v3707, %v3711
    %v3718 = vunpack.c.l.b16 %v3703
    %v3719 = vunpack.c.l.b16 %v3704
    %v3720 = vunpack.c.l.b16 %v3705
    %v3721 = vunpack.c.l.b16 %v3706
    %v3722 = vpack.c.b16 %v3719, %v3718
    %v3723 = vpack.c.b16 %v3721, %v3720
    %v3727 = vsel %vm62, %v3702, 0
    %3729 = vmatprep.subr.bf16.mxu0 0
    %3730 = vmatpush1.bf16.msra.mxu0 %v3722
    %3731 = vmatprep.subr.bf16.mxu0 0
    %3732 = vmatpush1.bf16.msra.mxu0 %v3723
    %3733 = vmatprep.subr.bf16.mxu0 0
    %3734 = vmatpush1.bf16.msra.mxu0 0
    %3735 = vmatprep.subr.bf16.mxu0 0
    %3736 = vmatpush1.bf16.msra.mxu0 0
    %3737 = vmatprep.subr.bf16.mxu0 0
    %3738 = vmatpush1.bf16.msra.mxu0 0
    %3739 = vmatprep.subr.bf16.mxu0 0
    %3740 = vmatpush1.bf16.msra.mxu0 0
    %3741 = vmatprep.subr.bf16.mxu0 0
    %3742 = vmatpush1.bf16.msra.mxu0 0
    %3743 = vmatprep.subr.bf16.mxu0 0
    %3744 = vmatpush1.bf16.msra.mxu0 0
    %3745 = vmatprep.subr.bf16.mxu0 0
    %3746 = vmatpush1.bf16.msra.mxu0 0
    %3747 = vmatprep.subr.bf16.mxu0 0
    %3748 = vmatpush1.bf16.msra.mxu0 0
    %3749 = vmatprep.subr.bf16.mxu0 0
    %3750 = vmatpush1.bf16.msra.mxu0 0
    %3751 = vmatprep.subr.bf16.mxu0 0
    %3752 = vmatpush1.bf16.msra.mxu0 0
    %3753 = vmatprep.subr.bf16.mxu0 0
    %3754 = vmatpush1.bf16.msra.mxu0 0
    %3755 = vmatprep.subr.bf16.mxu0 0
    %3756 = vmatpush1.bf16.msra.mxu0 0
    %3757 = vmatprep.subr.bf16.mxu0 0
    %3758 = vmatpush1.bf16.msra.mxu0 0
    %3759 = vmatprep.subr.bf16.mxu0 0
    %3760 = vmatpush1.bf16.msra.mxu0 0
    %3761 = vmatprep.mubr.bf16.mxu0 0
    %3762 = vmatmul.mubr.bf16.gmra.mrb[0].mxu0 %v3727
    %v3763 = vpop.f32.mrb[0].mxu0
    %v3764 = vadd.f32 %v3712, %v3763
    %v3765 = vpop.f32.mrb[0].mxu0
    %v3766 = vpop.f32.mrb[0].mxu0
    %v3767 = vadd.f32 %v3712, %v3766
    %v3768 = vpop.f32.mrb[0].mxu0
    %3769 = vdwg.mxu0
    %v3770 = vmax.f32 %v3764, 0.0
    %v3771 = vmax.f32 %v3767, 0.0
    %v3772 = vpack.c.bf16 %v3771, %v3770
    %v3773 = vld [vmem:[%s8] sm:$0xf]
    %v3774 = vld [vmem:[%s8 + $0x4] sm:$0xf]
    %v3775 = vld [vmem:[%s8 + $0x8] sm:$0xf]
    %v3776 = vld [vmem:[%s8 + $0xc] sm:$0xf]
    %v3777 = vld [vmem:[%s8 + $0x10] sm:$0xf]
    %v3778 = vld [vmem:[%s8 + $0x14] sm:$0xf]
    %v3779 = vld [vmem:[%s8 + $0x18] sm:$0xf]
    %v3780 = vld [vmem:[%s8 + $0x1c] sm:$0xf]
    %v3781 = vld [vmem:[%s8 + $0x20] sm:$0xf]
    %v3782 = vld [vmem:[%s8 + $0x24] sm:$0xf]
    %v3783 = vld [vmem:[%s8 + $0x28] sm:$0xf]
    %v3784 = vld [vmem:[%s8 + $0x2c] sm:$0xf]
    %v3785 = vld [vmem:[%s8 + $0x30] sm:$0xf]
    %v3786 = vld [vmem:[%s8 + $0x34] sm:$0xf]
    %v3787 = vld [vmem:[%s8 + $0x38] sm:$0xf]
    %v3788 = vld [vmem:[%s8 + $0x3c] sm:$0xf]
    %v3789 = vld [vmem:[%s9] sm:$0x1]
    %v3791 = vlaneseq
    %v3792 = vshrl.u32 %v3791, 7
    %v3793 = vsub.s32 0, %v3792
    %v3794 = vrot.slane %v3789, %v3793
    %v3812 = vunpack.c.l.b16 %v3773
    %v3813 = vunpack.c.l.b16 %v3774
    %v3814 = vunpack.c.l.b16 %v3775
    %v3815 = vunpack.c.l.b16 %v3776
    %v3816 = vunpack.c.l.b16 %v3777
    %v3817 = vunpack.c.l.b16 %v3778
    %v3818 = vunpack.c.l.b16 %v3779
    %v3819 = vunpack.c.l.b16 %v3780
    %v3820 = vunpack.c.l.b16 %v3781
    %v3821 = vunpack.c.l.b16 %v3782
    %v3822 = vunpack.c.l.b16 %v3783
    %v3823 = vunpack.c.l.b16 %v3784
    %v3824 = vunpack.c.l.b16 %v3785
    %v3825 = vunpack.c.l.b16 %v3786
    %v3826 = vunpack.c.l.b16 %v3787
    %v3827 = vunpack.c.l.b16 %v3788
    %v3828 = vpack.c.b16 %v3813, %v3812
    %v3829 = vpack.c.b16 %v3815, %v3814
    %v3830 = vpack.c.b16 %v3817, %v3816
    %v3831 = vpack.c.b16 %v3819, %v3818
    %v3832 = vpack.c.b16 %v3821, %v3820
    %v3833 = vpack.c.b16 %v3823, %v3822
    %v3834 = vpack.c.b16 %v3825, %v3824
    %v3835 = vpack.c.b16 %v3827, %v3826
    %3844 = vmatprep.subr.bf16.mxu0 0
    %3845 = vmatpush1.bf16.msra.mxu0 %v3828
    %3846 = vmatprep.subr.bf16.mxu0 0
    %3847 = vmatpush1.bf16.msra.mxu0 %v3829
    %3848 = vmatprep.subr.bf16.mxu0 0
    %3849 = vmatpush1.bf16.msra.mxu0 %v3830
    %3850 = vmatprep.subr.bf16.mxu0 0
    %3851 = vmatpush1.bf16.msra.mxu0 %v3831
    %3852 = vmatprep.subr.bf16.mxu0 0
    %3853 = vmatpush1.bf16.msra.mxu0 %v3832
    %3854 = vmatprep.subr.bf16.mxu0 0
    %3855 = vmatpush1.bf16.msra.mxu0 %v3833
    %3856 = vmatprep.subr.bf16.mxu0 0
    %3857 = vmatpush1.bf16.msra.mxu0 %v3834
    %3858 = vmatprep.subr.bf16.mxu0 0
    %3859 = vmatpush1.bf16.msra.mxu0 %v3835
    %3860 = vmatprep.subr.bf16.mxu0 0
    %3861 = vmatpush1.bf16.msra.mxu0 0
    %3862 = vmatprep.subr.bf16.mxu0 0
    %3863 = vmatpush1.bf16.msra.mxu0 0
    %3864 = vmatprep.subr.bf16.mxu0 0
    %3865 = vmatpush1.bf16.msra.mxu0 0
    %3866 = vmatprep.subr.bf16.mxu0 0
    %3867 = vmatpush1.bf16.msra.mxu0 0
    %3868 = vmatprep.subr.bf16.mxu0 0
    %3869 = vmatpush1.bf16.msra.mxu0 0
    %3870 = vmatprep.subr.bf16.mxu0 0
    %3871 = vmatpush1.bf16.msra.mxu0 0
    %3872 = vmatprep.subr.bf16.mxu0 0
    %3873 = vmatpush1.bf16.msra.mxu0 0
    %3874 = vmatprep.subr.bf16.mxu0 0
    %3875 = vmatpush1.bf16.msra.mxu0 0
    %3876 = vmatprep.mubr.bf16.mxu0 0
    %3877 = vmatmul.mubr.bf16.gmra.mrb[0].mxu0 %v3772
    %v3878 = vpop.f32.mrb[0].mxu0
    %v3879 = vadd.f32 %v3794, %v3878
    %v3880 = vpop.f32.mrb[0].mxu0
    %v3881 = vpop.f32.mrb[0].mxu0
    %v3882 = vadd.f32 %v3794, %v3881
    %v3883 = vpop.f32.mrb[0].mxu0
    %3884 = vdwg.mxu0
    %v3885 = vadd.f32 %v3700, %v3879
    %v3886 = vadd.f32 %v3701, %v3882
    %v3887 = vld [vmem:[%s10] sm:$0x1]
    %v3888 = vld [vmem:[%s11] sm:$0x1]
    %v3889 = vsel %vm62, %v3885, 0.0
    %3890 = vadd.xlane.f32.xlu0 %v3889
    %v3891 = vpop.xlane.xlu0 %3890
    %v3892 = vsel %vm62, %v3886, 0.0
    %3893 = vadd.xlane.f32.xlu0 %v3892
    %v3894 = vpop.xlane.xlu0 %3893
    %v3895 = vmul.f32 %v3891, %v3665
    %v3896 = vmul.f32 %v3894, %v3665
    %v3897 = vsub.f32 %v3885, %v3895
    %v3898 = vsub.f32 %v3886, %v3896
    %v3899 = vmul.f32 %v3897, %v3897
    %v3900 = vmul.f32 %v3898, %v3898
    %v3901 = vsel %vm62, %v3899, 0.0
    %3902 = vadd.xlane.f32.xlu0 %v3901
    %v3903 = vpop.xlane.xlu0 %3902
    %v3904 = vsel %vm62, %v3900, 0.0
    %3905 = vadd.xlane.f32.xlu0 %v3904
    %v3906 = vpop.xlane.xlu0 %3905
    %v3907 = vmul.f32 %v3903, %v3665
    %v3908 = vmul.f32 %v3906, %v3665
    %v3909 = vadd.f32 %v3907, 1e-05
    %v3910 = vadd.f32 %v3908, 1e-05
    %v3911 = vrsqrt.pop %v3909
    %v3912 = vrsqrt.pop %v3910
    %v3913 = vmul.f32 %v3897, %v3911
    %v3914 = vmul.f32 %v3898, %v3912
    %v3916 = vlaneseq
    %v3917 = vshrl.u32 %v3916, 7
    %v3918 = vsub.s32 0, %v3917
    %v3919 = vrot.slane %v3887, %v3918
    %v3921 = vmul.f32 %v3913, %v3919
    %v3922 = vmul.f32 %v3914, %v3919
    %v3924 = vlaneseq
    %v3925 = vshrl.u32 %v3924, 7
    %v3926 = vsub.s32 0, %v3925
    %v3927 = vrot.slane %v3888, %v3926
    %v3929 = vadd.f32 %v3921, %v3927
    %v3930 = vadd.f32 %v3922, %v3927
    %3931 = vst.msk [vmem:[#allocation2] sm:$0xff] %vm62, %v3929
    %3932 = vst.msk [vmem:[#allocation2 + $0x8] sm:$0xff] %vm62, %v3930
    // Predicated region
    $region50: #{tpu_custom_call.1} parent=1 // pred_check
      _
    $region51: #{tpu_custom_call.1} parent=1 // pred_check_branch
      %3934 = sbr.rel (0) target = $region53
    $region52: #{tpu_custom_call.1} parent=1 // pred_region
      %s3936 = ssub.s32 256, 256
      %3937 = vsyncadd [#allocation3], %s3936
      %s3938 = sshll.u32 [#allocation2], 4
      %s3939 = int_to_ptr.vmem [resolvable:$true] %s3938
      %3944 = dma.vmem_to_hbm [thread:$0]  %s3939, 256, %s12, [#allocation3], 128, 128, 8
    $region53: #{tpu_custom_call.1} parent=1 // pred_fallthru
      _
    // Predicated region
    $region54: #{tpu_custom_call.1} parent=1 // pred_check
      _
    $region55: #{tpu_custom_call.1} parent=1 // pred_check_branch
      %3946 = sbr.rel (0) target = $region57
    $region56: #{tpu_custom_call.1} parent=1 // pred_region
      %3947 = dma.done [#allocation3], 256
    $region57: #{tpu_custom_call.1} parent=1 // pred_fallthru
      _
    %3948 = vsyncpa [#allocation3], 1

</llo_original>
